<compile_context>
chip_gen: v7x
topology: tpu7x:2x2x1
jax: 0.10.0
libtpu: 0.0.40
codegen_flags: <defaults>
</compile_context>

<pallas_src>
import numpy as np
import jax
import jax.numpy as jnp
from jax.experimental import pallas as pl
from jax.experimental.pallas import tpu as pltpu


# ---------------------------------------------------------------------------
# Random cutout parameters (size, offsety, offsetx), mirroring torch.rand /
# torch.randint semantics.  One batched draw + a single host sync.
# ---------------------------------------------------------------------------
def sample_cut_params(key, sideY, sideX, cut_size, cutn, cut_pow=1.0):
    max_size = min(sideX, sideY)
    min_size = min(sideX, sideY, cut_size)
    u = np.asarray(jax.random.uniform(key, (3, cutn)))   # one device->host sync
    params = []
    for n in range(cutn):
        size = int(u[0, n] ** cut_pow * (max_size - min_size) + min_size)
        offsetx = min(int(u[1, n] * (sideX - size + 1)), sideX - size)
        offsety = min(int(u[2, n] * (sideY - size + 1)), sideY - size)
        params.append((size, offsety, offsetx))
    return params


def _adaptive_pool_row_weights(size, offset, side, cut_size):
    """W[i, y] so that out[i] = sum_y W[i, y] * row[y] reproduces
    adaptive_avg_pool1d over the cropped window [offset, offset+size)."""
    W = np.zeros((cut_size, side), dtype=np.float32)
    for i in range(cut_size):
        start = (i * size) // cut_size
        end = -((-(i + 1) * size) // cut_size)  # ceil((i+1)*size/cut_size)
        W[i, offset + start: offset + end] = 1.0 / (end - start)
    return W


def build_separable_weights(params, sideY, sideX, cut_size):
    """Per-cutout separable pool weights: Wy (cutn, cs, H), Wx (cutn, cs, W)."""
    wy = np.stack([_adaptive_pool_row_weights(s, oy, sideY, cut_size)
                   for (s, oy, ox) in params])
    wx = np.stack([_adaptive_pool_row_weights(s, ox, sideX, cut_size)
                   for (s, oy, ox) in params])
    return wy, wx


# ---------------------------------------------------------------------------
# Generation-aware sizing helpers
# ---------------------------------------------------------------------------
def _vmem_capacity_bytes():
    try:
        return int(pltpu.get_tpu_info().vmem_capacity_bytes)
    except Exception:
        return 64 << 20   # conservative: v7x has 64 MiB per TensorCore


def _num_tensorcores():
    """Best-effort TensorCore-per-device count (v7x: 2, v5e/v6e: 1)."""
    try:
        d = jax.devices()[0]
        n = getattr(d, "num_cores", None)
        if n:
            return max(1, int(n))
        kind = (getattr(d, "device_kind", "") or "").lower()
        if ("v7" in kind) or ("v4" in kind) or ("v5p" in kind):
            return 2
    except Exception:
        pass
    return 1


def _pick_group_size(cutn, cut_size, num_cores=1):
    """Cutouts per grid step.

    Multi-TC (v7x): keep num_groups a multiple of the core count so the
    'parallel' axis shards evenly, with lane-dense (<=256-wide) output blocks.
    Single-TC (v5e/v6e): the grid is a serial loop, so fewest/widest steps win
    (per-step overhead ~0.35us; wider N also fills the 256-wide MXU on v6e).
    """
    divisors = [g for g in range(1, cutn + 1) if cutn % g == 0]
    if num_cores > 1:
        cands = [g for g in divisors
                 if (cutn // g) % num_cores == 0 and g * cut_size <= 256]
        if cands:
            return max(cands)
    cands = [g for g in divisors if g * cut_size <= 512]
    return max(cands) if cands else 1


# ---------------------------------------------------------------------------
# Pallas kernel: one *group* of cutouts per grid step.
#   stage 1: pool along W for the whole group  -> one lane-dense MXU matmul
#   stage 2: pool along H                       -> fused VPU mul + sublane
#            reduce over H, single lane-dense store
# ---------------------------------------------------------------------------
def make_cutouts(x, params, cut_size, *, compute_dtype=jnp.float32,
                 group_size=None):
    B, C, H, W = x.shape
    cutn = len(params)
    cs = cut_size
    BC = B * C
    if group_size is None:
        group_size = _pick_group_size(cutn, cs, _num_tensorcores())
    assert cutn % group_size == 0
    num_groups = cutn // group_size
    g_lanes = group_size * cs                      # output-block lane width

    # Separable weights, packed per group.
    wy_np, wx_np = build_separable_weights(params, H, W, cs)
    # WxT packed along lanes: (num_groups, W, group*cs); compute_dtype so the
    # stage-1 MXU matmul runs at the bf16 rate on the bf16 path.
    wxt = jnp.asarray(
        wx_np.transpose(0, 2, 1)                   # (cutn, W, cs)
             .reshape(num_groups, group_size, W, cs)
             .transpose(0, 2, 1, 3)                # (ng, W, group, cs)
             .reshape(num_groups, W, g_lanes),
        dtype=compute_dtype)
    # Wy lane-replicated for the VPU stage-2: wye[ng, i, h, gi*cs + j] =
    # Wy[ng*group+gi, i, h]  (independent of j). Always f32 (stage 2 stays f32).
    wye_np = (wy_np.reshape(num_groups, group_size, cs, H)   # (ng, g, i, h)
                   .transpose(0, 2, 3, 1))                   # (ng, i, h, g)
    wye_np = np.repeat(wye_np[..., None], cs, axis=4)        # (ng, i, h, g, j)
    wye = jnp.asarray(wye_np.reshape(num_groups, cs, H, g_lanes),
                      dtype=jnp.float32)

    x_flat = x.reshape(BC * H, W).astype(compute_dtype)

    # f32 path: force full-precision MXU passes so the 1e-4 reference check
    # holds; bf16 path keeps default precision (the point is the 2x MXU rate).
    precision = (jax.lax.Precision.HIGHEST if compute_dtype == jnp.float32
                 else jax.lax.Precision.DEFAULT)

    def kernel(x_ref, wxt_ref, wye_ref, o_ref):
        # x_ref:   (BC*H, W)          image, VMEM-resident across the grid
        # wxt_ref: (W, g_lanes)       this group's pool-along-W weights
        # wye_ref: (cs, H, g_lanes)   pool-along-H weights, lane-replicated, f32
        # o_ref:   (BC, cs, g_lanes)  f32 output block (lane-dense)
        # Stage 1: pool along W for all cutouts in the group (one MXU matmul,
        # N = g_lanes lanes).  Result stays f32 — no cast back to compute dtype.
        t1 = jnp.dot(x_ref[...], wxt_ref[...],
                     preferred_element_type=jnp.float32,
                     precision=precision)                  # (BC*H, g_lanes)
        t1 = t1.reshape(BC, 1, H, g_lanes)
        # Stage 2: pool along H.  The contraction is block-diagonal over the
        # group axis, so instead of many tiny MXU matmuls it is a single VPU
        # multiply + sublane reduce over H, written back with ONE lane-dense
        # store of the whole output block.
        o_ref[...] = jnp.sum(t1 * wye_ref[...][None], axis=2)  # (BC, cs, g_lanes)

    # Generation-aware VMEM budget (v7x: 64 MiB per TC; v5e/v6e: 128 MiB).
    isz = np.dtype(compute_dtype).itemsize
    cap = _vmem_capacity_bytes()
    img_bytes = BC * H * W * isz                   # resident image, 1 copy
    buf_bytes = (2 * W * g_lanes * isz             # WxT, double-buffered
                 + 2 * cs * H * g_lanes * 4        # Wy (f32), double-buffered
                 + 2 * BC * cs * g_lanes * 4)      # f32 out, double-buffered
    need = img_bytes + buf_bytes
    # TODO(synk): for very large images (BC*H*W*isz approaching the per-core
    # VMEM budget, e.g. v7x's 64 MiB) add an H-stripe grid axis instead of
    # keeping the whole image VMEM-resident.
    vmem_limit = int(min(max(2 * need + (4 << 20), 16 << 20), cap - (4 << 20)))

    out = pl.pallas_call(
        kernel,
        out_shape=jax.ShapeDtypeStruct((num_groups, BC, cs, g_lanes),
                                       jnp.float32),
        grid_spec=pltpu.PrefetchScalarGridSpec(
            num_scalar_prefetch=0,
            grid=(num_groups,),
            in_specs=[
                # image: whole-array VMEM resident, no per-step double buffer
                pl.BlockSpec(memory_space=pltpu.MemorySpace.VMEM),
                pl.BlockSpec((None, W, g_lanes), lambda g: (g, 0, 0)),
                pl.BlockSpec((None, cs, H, g_lanes), lambda g: (g, 0, 0, 0)),
            ],
            out_specs=pl.BlockSpec((None, BC, cs, g_lanes),
                                   lambda g: (g, 0, 0, 0)),
        ),
        compiler_params=pltpu.CompilerParams(
            dimension_semantics=("parallel",),
            vmem_limit_bytes=vmem_limit,
        ),
    )(x_flat, wxt, wye)

    # (num_groups, B*C, cs_i, group*cs_j) -> (cutn*B, C, cs, cs), torch.cat order
    out = out.reshape(num_groups, B, C, cs, group_size, cs)
    out = out.transpose(0, 4, 1, 2, 3, 5)          # (ng, group, B, C, cs, cs)
    return out.reshape(cutn * B, C, cs, cs)


# ---------------------------------------------------------------------------
# Pure-numpy reference (direct crop + adaptive avg pool) for verification
# ---------------------------------------------------------------------------
def reference(x_np, params, cut_size):
    B, C, H, W = x_np.shape
    outs = []
    for size, oy, ox in params:
        crop = x_np[:, :, oy:oy + size, ox:ox + size]
        pooled = np.zeros((B, C, cut_size, cut_size), dtype=np.float32)
        for i in range(cut_size):
            ys = (i * size) // cut_size
            ye = -((-(i + 1) * size) // cut_size)
            for j in range(cut_size):
                xs = (j * size) // cut_size
                xe = -((-(j + 1) * size) // cut_size)
                pooled[:, :, i, j] = crop[:, :, ys:ye, xs:xe].mean(axis=(2, 3))
        outs.append(pooled)
    return np.concatenate(outs, axis=0)


if __name__ == "__main__":
    B, C, H, W = 2, 3, 32, 32
    cut_size, cutn, cut_pow = 8, 32, 1.0

    key = jax.random.PRNGKey(0)
    kx, kp = jax.random.split(key)
    x = jax.random.normal(kx, (B, C, H, W), dtype=jnp.float32)
    params = sample_cut_params(kp, H, W, cut_size, cutn, cut_pow)
    ref = reference(np.asarray(x), params, cut_size)

    # Auto group size (single wide step on 1-TC chips, even num_groups on v7x).
    out = jax.block_until_ready(make_cutouts(x, params, cut_size))
    assert out.shape == (cutn * B, C, cut_size, cut_size), out.shape
    np.testing.assert_allclose(np.asarray(out), ref, rtol=1e-4, atol=1e-4)

    # Also exercise the multi-group (grid > 1) path: 2 groups x 128 lanes.
    out_mg = jax.block_until_ready(
        make_cutouts(x, params, cut_size, group_size=16))
    np.testing.assert_allclose(np.asarray(out_mg), ref, rtol=1e-4, atol=1e-4)

    print("KERNEL_OK")
</pallas_src>

<mosaic_0001>
module attributes {stable_mosaic.version = 11 : i64} {
  func.func @kernel(%arg0: i32, %arg1: memref<192x32xf32, #tpu.memory_space<vmem>>, %arg2: memref<1x32x256xf32, #tpu.memory_space<vmem>>, %arg3: memref<1x8x32x256xf32, #tpu.memory_space<vmem>>, %arg4: memref<1x6x8x256xf32, #tpu.memory_space<vmem>>) attributes {dimension_semantics = [#tpu.dimension_semantics<parallel>], iteration_bounds = array<i64: 1>, scalar_prefetch = 0 : i64, scratch_operands = 0 : i64, tpu.core_type = #tpu.core_type<tc>, window_params = [{pipeline_mode = #tpu.pipeline_mode<synchronous>, transform_indices = @transform_0, window_bounds = array<i64: 192, 32>}, {transform_indices = @transform_1, window_bounds = array<i64: 1, 32, 256>}, {transform_indices = @transform_2, window_bounds = array<i64: 1, 8, 32, 256>}, {transform_indices = @transform_3, window_bounds = array<i64: 1, 6, 8, 256>}]} {
    %c0 = arith.constant 0 : index
    %c0_0 = arith.constant 0 : index
    %0 = vector.load %arg1[%c0, %c0_0] : memref<192x32xf32, #tpu.memory_space<vmem>>, vector<192x32xf32>
    %c0_1 = arith.constant 0 : index
    %c0_2 = arith.constant 0 : index
    %c0_3 = arith.constant 0 : index
    %1 = vector.load %arg2[%c0_1, %c0_2, %c0_3] : memref<1x32x256xf32, #tpu.memory_space<vmem>>, vector<1x32x256xf32>
    %2 = vector.shape_cast %1 : vector<1x32x256xf32> to vector<32x256xf32>
    %cst = arith.constant dense<0.000000e+00> : vector<192x256xf32>
    %3 = tpu.matmul %0, %2, %cst {dimension_numbers = #tpu.dot_dimension_numbers<[1], [0], [0], [1], [0, 0, 1, 1], [], []>, precision = #tpu.contract_precision<fp32>} : vector<192x32xf32>, vector<32x256xf32>, vector<192x256xf32> -> vector<192x256xf32>
    %4 = vector.shape_cast %3 : vector<192x256xf32> to vector<6x1x32x256xf32>
    %c0_4 = arith.constant 0 : index
    %c0_5 = arith.constant 0 : index
    %c0_6 = arith.constant 0 : index
    %c0_7 = arith.constant 0 : index
    %5 = vector.load %arg3[%c0_4, %c0_5, %c0_6, %c0_7] : memref<1x8x32x256xf32, #tpu.memory_space<vmem>>, vector<1x8x32x256xf32>
    %6 = vector.shape_cast %5 : vector<1x8x32x256xf32> to vector<8x32x256xf32>
    %7 = vector.shape_cast %6 : vector<8x32x256xf32> to vector<1x8x32x256xf32>
    %8 = vector.broadcast %4 : vector<6x1x32x256xf32> to vector<6x8x32x256xf32>
    %9 = vector.broadcast %7 : vector<1x8x32x256xf32> to vector<6x8x32x256xf32>
    %10 = arith.mulf %8, %9 : vector<6x8x32x256xf32>
    %cst_8 = arith.constant dense<0.000000e+00> : vector<6x8x256xf32>
    %11 = vector.multi_reduction <add>, %10, %cst_8 [2] : vector<6x8x32x256xf32> to vector<6x8x256xf32>
    %c0_9 = arith.constant 0 : index
    %c0_10 = arith.constant 0 : index
    %c0_11 = arith.constant 0 : index
    %c0_12 = arith.constant 0 : index
    %12 = vector.load %arg4[%c0_9, %c0_10, %c0_11, %c0_12] : memref<1x6x8x256xf32, #tpu.memory_space<vmem>>, vector<1x6x8x256xf32>
    %13 = vector.shape_cast %12 : vector<1x6x8x256xf32> to vector<6x8x256xf32>
    %14 = vector.shape_cast %11 : vector<6x8x256xf32> to vector<1x6x8x256xf32>
    tpu.vector_store %arg4[%c0_9, %c0_10, %c0_11, %c0_12], %14 {strides = array<i32>} : memref<1x6x8x256xf32, #tpu.memory_space<vmem>>, vector<1x6x8x256xf32>,
    return
  }
  func.func @transform_0(%arg0: i32) -> (i32, i32) {
    %c0_i32 = arith.constant 0 : i32
    %c0_i32_0 = arith.constant 0 : i32
    %c0_i32_1 = arith.constant 0 : i32
    return %c0_i32, %c0_i32_0 : i32, i32
  }
  func.func @transform_1(%arg0: i32) -> (i32, i32, i32) {
    %c0_i32 = arith.constant 0 : i32
    %c0_i32_0 = arith.constant 0 : i32
    %c0_i32_1 = arith.constant 0 : i32
    return %arg0, %c0_i32, %c0_i32_0 : i32, i32, i32
  }
  func.func @transform_2(%arg0: i32) -> (i32, i32, i32, i32) {
    %c0_i32 = arith.constant 0 : i32
    %c0_i32_0 = arith.constant 0 : i32
    %c0_i32_1 = arith.constant 0 : i32
    %c0_i32_2 = arith.constant 0 : i32
    return %arg0, %c0_i32, %c0_i32_0, %c0_i32_1 : i32, i32, i32, i32
  }
  func.func @transform_3(%arg0: i32) -> (i32, i32, i32, i32) {
    %c0_i32 = arith.constant 0 : i32
    %c0_i32_0 = arith.constant 0 : i32
    %c0_i32_1 = arith.constant 0 : i32
    %c0_i32_2 = arith.constant 0 : i32
    return %arg0, %c0_i32, %c0_i32_0, %c0_i32_1 : i32, i32, i32, i32
  }
}

</mosaic_0001>

<llo_original>
// kernel: tpu_custom_call.1
$region0: #{tpu_custom_call.1}
  #allocation0 [shape = 'u32[]', space=smem, size = 0x4, offset = 0x4, fixed_abs, tag = 'smem constant byte address 0x4 - core index']
  #allocation1 [shape = 'u32[144,128]{1,0:T(1,128)}', space=vmem, size = 0x12000, scoped, tag = 'internal scratch']
  %s0 = inlined_call_operand.vmem [shape: f32[192,32], index: 0, kind: input, shape index: {}]
  %s1 = inlined_call_operand.vmem [shape: f32[1,32,256], index: 1, kind: input, shape index: {}]
  %s2 = inlined_call_operand.hbm [shape: f32[1,8,32,256], index: 2, kind: input, shape index: {}]
  %s3 = inlined_call_operand.hbm [shape: f32[1,6,8,256], index: 3, kind: output, shape index: {}]
  %s4 = sld [smem:[#allocation0]]
  $region26: #{tpu_custom_call.1} parent=0
    _
  %s6 = ssub.s32 1, %s4
  %s7 = scalar_select 0, %s6, %s4
  $region1: #{tpu_custom_call.1} parent=0
    #allocation2 [shape = 'u8[262144]{0}', space=vmem, size = 0x40000, scoped, tag = 'input window, operand 2, single buffered']
    #allocation3 [shape = 's32[1]{0}', space=sflag, size = 0x4, scoped, tag = 'scoped memory for tpu_custom_call.1']
    #allocation4 [shape = 's32[1]{0}', space=sflag, size = 0x4, scoped, tag = 'scoped memory for tpu_custom_call.1']
    #allocation5 [shape = 'u8[49152]{0}', space=vmem, size = 0xc000, scoped, tag = 'output window, operand 0, single buffered']
    %8 = vsyncpa [#allocation3], 0
    %9 = vsyncpa [#allocation4], 0
    // Predicated region
    $region2: #{tpu_custom_call.1} parent=1 // pred_check
      _
    $region3: #{tpu_custom_call.1} parent=1 // pred_check_branch
      %11 = sbr.rel (0) target = $region5
    $region4: #{tpu_custom_call.1} parent=1 // pred_region
      _
    $region5: #{tpu_custom_call.1} parent=1 // pred_fallthru
      _
    // Predicated region
    $region6: #{tpu_custom_call.1} parent=1 // pred_check
      _
    $region7: #{tpu_custom_call.1} parent=1 // pred_check_branch
      %13 = sbr.rel (0) target = $region9
    $region8: #{tpu_custom_call.1} parent=1 // pred_region
      _
    $region9: #{tpu_custom_call.1} parent=1 // pred_fallthru
      _
    // Predicated region
    $region10: #{tpu_custom_call.1} parent=1 // pred_check
      _
    $region11: #{tpu_custom_call.1} parent=1 // pred_check_branch
      %15 = sbr.rel (0) target = $region13
    $region12: #{tpu_custom_call.1} parent=1 // pred_region
      %s17 = ssub.s32 8192, 8192
      %18 = vsyncadd [#allocation3], %s17
      %s19 = sshll.u32 [#allocation2], 4
      %s20 = int_to_ptr.vmem [resolvable:$true] %s19
      %25 = dma.hbm_to_vmem [thread:$0]  %s2, 8192, %s20, [#allocation3], 256, 256, 16
    $region13: #{tpu_custom_call.1} parent=1 // pred_fallthru
      _
    // Predicated region
    $region14: #{tpu_custom_call.1} parent=1 // pred_check
      _
    $region15: #{tpu_custom_call.1} parent=1 // pred_check_branch
      %27 = sbr.rel (0) target = $region17
    $region16: #{tpu_custom_call.1} parent=1 // pred_region
      %28 = dma.done [#allocation3], 8192
    $region17: #{tpu_custom_call.1} parent=1 // pred_fallthru
      _
    %v29 = vld [vmem:[%s0] sm:$0xff]
    %v30 = vld [vmem:[%s0 + $0x8] sm:$0xff]
    %v31 = vld [vmem:[%s0 + $0x10] sm:$0xff]
    %v32 = vld [vmem:[%s0 + $0x18] sm:$0xff]
    %v33 = vld [vmem:[%s0 + $0x20] sm:$0xff]
    %v34 = vld [vmem:[%s0 + $0x28] sm:$0xff]
    %v35 = vld [vmem:[%s0 + $0x30] sm:$0xff]
    %v36 = vld [vmem:[%s0 + $0x38] sm:$0xff]
    %v37 = vld [vmem:[%s0 + $0x40] sm:$0xff]
    %v38 = vld [vmem:[%s0 + $0x48] sm:$0xff]
    %v39 = vld [vmem:[%s0 + $0x50] sm:$0xff]
    %v40 = vld [vmem:[%s0 + $0x58] sm:$0xff]
    %v41 = vld [vmem:[%s0 + $0x60] sm:$0xff]
    %v42 = vld [vmem:[%s0 + $0x68] sm:$0xff]
    %v43 = vld [vmem:[%s0 + $0x70] sm:$0xff]
    %v44 = vld [vmem:[%s0 + $0x78] sm:$0xff]
    %v45 = vld [vmem:[%s0 + $0x80] sm:$0xff]
    %v46 = vld [vmem:[%s0 + $0x88] sm:$0xff]
    %v47 = vld [vmem:[%s0 + $0x90] sm:$0xff]
    %v48 = vld [vmem:[%s0 + $0x98] sm:$0xff]
    %v49 = vld [vmem:[%s0 + $0xa0] sm:$0xff]
    %v50 = vld [vmem:[%s0 + $0xa8] sm:$0xff]
    %v51 = vld [vmem:[%s0 + $0xb0] sm:$0xff]
    %v52 = vld [vmem:[%s0 + $0xb8] sm:$0xff]
    %v53 = vld [vmem:[%s1] sm:$0xff]
    %v54 = vld [vmem:[%s1 + $0x8] sm:$0xff]
    %v55 = vld [vmem:[%s1 + $0x10] sm:$0xff]
    %v56 = vld [vmem:[%s1 + $0x18] sm:$0xff]
    %v57 = vld [vmem:[%s1 + $0x20] sm:$0xff]
    %v58 = vld [vmem:[%s1 + $0x28] sm:$0xff]
    %v59 = vld [vmem:[%s1 + $0x30] sm:$0xff]
    %v60 = vld [vmem:[%s1 + $0x38] sm:$0xff]
    %vm61 = vcmask 261120
    %v63 = vsel %vm61, %v29, 0
    %v66 = vsel %vm61, %v30, 0
    %v69 = vsel %vm61, %v31, 0
    %v72 = vsel %vm61, %v32, 0
    %v75 = vsel %vm61, %v33, 0
    %v78 = vsel %vm61, %v34, 0
    %v81 = vsel %vm61, %v35, 0
    %v84 = vsel %vm61, %v36, 0
    %v87 = vsel %vm61, %v37, 0
    %v90 = vsel %vm61, %v38, 0
    %v93 = vsel %vm61, %v39, 0
    %v96 = vsel %vm61, %v40, 0
    %v99 = vsel %vm61, %v41, 0
    %v102 = vsel %vm61, %v42, 0
    %v105 = vsel %vm61, %v43, 0
    %v108 = vsel %vm61, %v44, 0
    %v111 = vsel %vm61, %v45, 0
    %v114 = vsel %vm61, %v46, 0
    %v117 = vsel %vm61, %v47, 0
    %v120 = vsel %vm61, %v48, 0
    %v123 = vsel %vm61, %v49, 0
    %v126 = vsel %vm61, %v50, 0
    %v129 = vsel %vm61, %v51, 0
    %v132 = vsel %vm61, %v52, 0
    %v134 = vand.u32 %v54, 4294901760
    %135 = vmatprep.subr.mxu0 %v134
    %v136 = vand.u32 %v53, 4294901760
    %137 = vmatpush1.msra.mxu0 %v136
    %v138 = vand.u32 %v56, 4294901760
    %139 = vmatprep.subr.mxu0 %v138
    %v140 = vand.u32 %v55, 4294901760
    %141 = vmatpush1.msra.mxu0 %v140
    %v142 = vand.u32 %v58, 4294901760
    %143 = vmatprep.subr.mxu0 %v142
    %v144 = vand.u32 %v57, 4294901760
    %145 = vmatpush1.msra.mxu0 %v144
    %v146 = vand.u32 %v60, 4294901760
    %147 = vmatprep.subr.mxu0 %v146
    %v148 = vand.u32 %v59, 4294901760
    %149 = vmatpush1.msra.mxu0 %v148
    %150 = vmatprep.subr.mxu0 0.0
    %151 = vmatpush1.msra.mxu0 0.0
    %152 = vmatprep.subr.mxu0 0.0
    %153 = vmatpush1.msra.mxu0 0.0
    %154 = vmatprep.subr.mxu0 0.0
    %155 = vmatpush1.msra.mxu0 0.0
    %156 = vmatprep.subr.mxu0 0.0
    %157 = vmatpush1.msra.mxu0 0.0
    %158 = vmatprep.subr.mxu0 0.0
    %159 = vmatpush1.msra.mxu0 0.0
    %160 = vmatprep.subr.mxu0 0.0
    %161 = vmatpush1.msra.mxu0 0.0
    %162 = vmatprep.subr.mxu0 0.0
    %163 = vmatpush1.msra.mxu0 0.0
    %164 = vmatprep.subr.mxu0 0.0
    %165 = vmatpush1.msra.mxu0 0.0
    %166 = vmatprep.subr.mxu0 0.0
    %167 = vmatpush1.msra.mxu0 0.0
    %168 = vmatprep.subr.mxu0 0.0
    %169 = vmatpush1.msra.mxu0 0.0
    %170 = vmatprep.subr.mxu0 0.0
    %171 = vmatpush1.msra.mxu0 0.0
    %172 = vmatprep.subr.mxu0 0.0
    %173 = vmatpush1.msra.mxu0 0.0
    %174 = vmatprep.subr.mxu0 0.0
    %175 = vmatpush1.msra.mxu0 0.0
    %176 = vmatprep.subr.mxu0 0.0
    %177 = vmatpush1.msra.mxu0 0.0
    %178 = vmatprep.subr.mxu0 0.0
    %179 = vmatpush1.msra.mxu0 0.0
    %180 = vmatprep.subr.mxu0 0.0
    %181 = vmatpush1.msra.mxu0 0.0
    %182 = vmatprep.subr.mxu0 0.0
    %183 = vmatpush1.msra.mxu0 0.0
    %184 = vmatprep.subr.mxu0 0.0
    %185 = vmatpush1.msra.mxu0 0.0
    %186 = vmatprep.subr.mxu0 0.0
    %187 = vmatpush1.msra.mxu0 0.0
    %188 = vmatprep.subr.mxu0 0.0
    %189 = vmatpush1.msra.mxu0 0.0
    %190 = vmatprep.subr.mxu0 0.0
    %191 = vmatpush1.msra.mxu0 0.0
    %192 = vmatprep.subr.mxu0 0.0
    %193 = vmatpush1.msra.mxu0 0.0
    %194 = vmatprep.subr.mxu0 0.0
    %195 = vmatpush1.msra.mxu0 0.0
    %196 = vmatprep.subr.mxu0 0.0
    %197 = vmatpush1.msra.mxu0 0.0
    %198 = vmatprep.subr.mxu0 0.0
    %199 = vmatpush1.msra.mxu0 0.0
    %200 = vmatprep.subr.mxu0 0.0
    %201 = vmatpush1.msra.mxu0 0.0
    %202 = vmatprep.subr.mxu0 0.0
    %203 = vmatpush1.msra.mxu0 0.0
    %204 = vmatprep.subr.mxu0 0.0
    %205 = vmatpush1.msra.mxu0 0.0
    %206 = vmatprep.mubr.f32.mxu0 0.0
    %v207 = vand.u32 %v63, 4294901760
    %v208 = vsub.f32 %v63, %v207
    %v209 = vand.u32 %v208, 4294901760
    %v210 = vsub.f32 %v208, %v209
    %v211 = vand.u32 %v210, 4294901760
    %212 = vmatmul.mubr.f32.gmra.mrb[0].mxu0 %v211
    %v213 = vpop.f32.mrb[0].mxu0
    %v214 = vadd.f32 0.0, %v213
    %v215 = vpop.f32.mrb[0].mxu0
    %v216 = vadd.f32 0.0, %v215
    %217 = vmatprep.mubr.f32.mxu0 0.0
    %v218 = vand.u32 %v66, 4294901760
    %v219 = vsub.f32 %v66, %v218
    %v220 = vand.u32 %v219, 4294901760
    %v221 = vsub.f32 %v219, %v220
    %v222 = vand.u32 %v221, 4294901760
    %223 = vmatmul.mubr.f32.gmra.mrb[0].mxu0 %v222
    %v224 = vpop.f32.mrb[0].mxu0
    %v225 = vadd.f32 0.0, %v224
    %v226 = vpop.f32.mrb[0].mxu0
    %v227 = vadd.f32 0.0, %v226
    %228 = vmatprep.mubr.f32.mxu0 0.0
    %v229 = vand.u32 %v69, 4294901760
    %v230 = vsub.f32 %v69, %v229
    %v231 = vand.u32 %v230, 4294901760
    %v232 = vsub.f32 %v230, %v231
    %v233 = vand.u32 %v232, 4294901760
    %234 = vmatmul.mubr.f32.gmra.mrb[0].mxu0 %v233
    %v235 = vpop.f32.mrb[0].mxu0
    %v236 = vadd.f32 0.0, %v235
    %v237 = vpop.f32.mrb[0].mxu0
    %v238 = vadd.f32 0.0, %v237
    %239 = vmatprep.mubr.f32.mxu0 0.0
    %v240 = vand.u32 %v72, 4294901760
    %v241 = vsub.f32 %v72, %v240
    %v242 = vand.u32 %v241, 4294901760
    %v243 = vsub.f32 %v241, %v242
    %v244 = vand.u32 %v243, 4294901760
    %245 = vmatmul.mubr.f32.gmra.mrb[0].mxu0 %v244
    %v246 = vpop.f32.mrb[0].mxu0
    %v247 = vadd.f32 0.0, %v246
    %v248 = vpop.f32.mrb[0].mxu0
    %v249 = vadd.f32 0.0, %v248
    %250 = vmatprep.mubr.f32.mxu0 0.0
    %v251 = vand.u32 %v75, 4294901760
    %v252 = vsub.f32 %v75, %v251
    %v253 = vand.u32 %v252, 4294901760
    %v254 = vsub.f32 %v252, %v253
    %v255 = vand.u32 %v254, 4294901760
    %256 = vmatmul.mubr.f32.gmra.mrb[0].mxu0 %v255
    %v257 = vpop.f32.mrb[0].mxu0
    %v258 = vadd.f32 0.0, %v257
    %v259 = vpop.f32.mrb[0].mxu0
    %v260 = vadd.f32 0.0, %v259
    %261 = vmatprep.mubr.f32.mxu0 0.0
    %v262 = vand.u32 %v78, 4294901760
    %v263 = vsub.f32 %v78, %v262
    %v264 = vand.u32 %v263, 4294901760
    %v265 = vsub.f32 %v263, %v264
    %v266 = vand.u32 %v265, 4294901760
    %267 = vmatmul.mubr.f32.gmra.mrb[0].mxu0 %v266
    %v268 = vpop.f32.mrb[0].mxu0
    %v269 = vadd.f32 0.0, %v268
    %v270 = vpop.f32.mrb[0].mxu0
    %v271 = vadd.f32 0.0, %v270
    %272 = vmatprep.mubr.f32.mxu0 0.0
    %v273 = vand.u32 %v81, 4294901760
    %v274 = vsub.f32 %v81, %v273
    %v275 = vand.u32 %v274, 4294901760
    %v276 = vsub.f32 %v274, %v275
    %v277 = vand.u32 %v276, 4294901760
    %278 = vmatmul.mubr.f32.gmra.mrb[0].mxu0 %v277
    %v279 = vpop.f32.mrb[0].mxu0
    %v280 = vadd.f32 0.0, %v279
    %v281 = vpop.f32.mrb[0].mxu0
    %v282 = vadd.f32 0.0, %v281
    %283 = vmatprep.mubr.f32.mxu0 0.0
    %v284 = vand.u32 %v84, 4294901760
    %v285 = vsub.f32 %v84, %v284
    %v286 = vand.u32 %v285, 4294901760
    %v287 = vsub.f32 %v285, %v286
    %v288 = vand.u32 %v287, 4294901760
    %289 = vmatmul.mubr.f32.gmra.mrb[0].mxu0 %v288
    %v290 = vpop.f32.mrb[0].mxu0
    %v291 = vadd.f32 0.0, %v290
    %v292 = vpop.f32.mrb[0].mxu0
    %v293 = vadd.f32 0.0, %v292
    %294 = vmatprep.mubr.f32.mxu0 0.0
    %v295 = vand.u32 %v87, 4294901760
    %v296 = vsub.f32 %v87, %v295
    %v297 = vand.u32 %v296, 4294901760
    %v298 = vsub.f32 %v296, %v297
    %v299 = vand.u32 %v298, 4294901760
    %300 = vmatmul.mubr.f32.gmra.mrb[0].mxu0 %v299
    %v301 = vpop.f32.mrb[0].mxu0
    %v302 = vadd.f32 0.0, %v301
    %v303 = vpop.f32.mrb[0].mxu0
    %v304 = vadd.f32 0.0, %v303
    %305 = vmatprep.mubr.f32.mxu0 0.0
    %v306 = vand.u32 %v90, 4294901760
    %v307 = vsub.f32 %v90, %v306
    %v308 = vand.u32 %v307, 4294901760
    %v309 = vsub.f32 %v307, %v308
    %v310 = vand.u32 %v309, 4294901760
    %311 = vmatmul.mubr.f32.gmra.mrb[0].mxu0 %v310
    %v312 = vpop.f32.mrb[0].mxu0
    %v313 = vadd.f32 0.0, %v312
    %v314 = vpop.f32.mrb[0].mxu0
    %v315 = vadd.f32 0.0, %v314
    %316 = vmatprep.mubr.f32.mxu0 0.0
    %v317 = vand.u32 %v93, 4294901760
    %v318 = vsub.f32 %v93, %v317
    %v319 = vand.u32 %v318, 4294901760
    %v320 = vsub.f32 %v318, %v319
    %v321 = vand.u32 %v320, 4294901760
    %322 = vmatmul.mubr.f32.gmra.mrb[0].mxu0 %v321
    %v323 = vpop.f32.mrb[0].mxu0
    %v324 = vadd.f32 0.0, %v323
    %v325 = vpop.f32.mrb[0].mxu0
    %v326 = vadd.f32 0.0, %v325
    %327 = vmatprep.mubr.f32.mxu0 0.0
    %v328 = vand.u32 %v96, 4294901760
    %v329 = vsub.f32 %v96, %v328
    %v330 = vand.u32 %v329, 4294901760
    %v331 = vsub.f32 %v329, %v330
    %v332 = vand.u32 %v331, 4294901760
    %333 = vmatmul.mubr.f32.gmra.mrb[0].mxu0 %v332
    %v334 = vpop.f32.mrb[0].mxu0
    %v335 = vadd.f32 0.0, %v334
    %v336 = vpop.f32.mrb[0].mxu0
    %v337 = vadd.f32 0.0, %v336
    %338 = vmatprep.mubr.f32.mxu0 0.0
    %v339 = vand.u32 %v99, 4294901760
    %v340 = vsub.f32 %v99, %v339
    %v341 = vand.u32 %v340, 4294901760
    %v342 = vsub.f32 %v340, %v341
    %v343 = vand.u32 %v342, 4294901760
    %344 = vmatmul.mubr.f32.gmra.mrb[0].mxu0 %v343
    %v345 = vpop.f32.mrb[0].mxu0
    %v346 = vadd.f32 0.0, %v345
    %v347 = vpop.f32.mrb[0].mxu0
    %v348 = vadd.f32 0.0, %v347
    %349 = vmatprep.mubr.f32.mxu0 0.0
    %v350 = vand.u32 %v102, 4294901760
    %v351 = vsub.f32 %v102, %v350
    %v352 = vand.u32 %v351, 4294901760
    %v353 = vsub.f32 %v351, %v352
    %v354 = vand.u32 %v353, 4294901760
    %355 = vmatmul.mubr.f32.gmra.mrb[0].mxu0 %v354
    %v356 = vpop.f32.mrb[0].mxu0
    %v357 = vadd.f32 0.0, %v356
    %v358 = vpop.f32.mrb[0].mxu0
    %v359 = vadd.f32 0.0, %v358
    %360 = vmatprep.mubr.f32.mxu0 0.0
    %v361 = vand.u32 %v105, 4294901760
    %v362 = vsub.f32 %v105, %v361
    %v363 = vand.u32 %v362, 4294901760
    %v364 = vsub.f32 %v362, %v363
    %v365 = vand.u32 %v364, 4294901760
    %366 = vmatmul.mubr.f32.gmra.mrb[0].mxu0 %v365
    %v367 = vpop.f32.mrb[0].mxu0
    %v368 = vadd.f32 0.0, %v367
    %v369 = vpop.f32.mrb[0].mxu0
    %v370 = vadd.f32 0.0, %v369
    %371 = vmatprep.mubr.f32.mxu0 0.0
    %v372 = vand.u32 %v108, 4294901760
    %v373 = vsub.f32 %v108, %v372
    %v374 = vand.u32 %v373, 4294901760
    %v375 = vsub.f32 %v373, %v374
    %v376 = vand.u32 %v375, 4294901760
    %377 = vmatmul.mubr.f32.gmra.mrb[0].mxu0 %v376
    %v378 = vpop.f32.mrb[0].mxu0
    %v379 = vadd.f32 0.0, %v378
    %v380 = vpop.f32.mrb[0].mxu0
    %v381 = vadd.f32 0.0, %v380
    %382 = vmatprep.mubr.f32.mxu0 0.0
    %v383 = vand.u32 %v111, 4294901760
    %v384 = vsub.f32 %v111, %v383
    %v385 = vand.u32 %v384, 4294901760
    %v386 = vsub.f32 %v384, %v385
    %v387 = vand.u32 %v386, 4294901760
    %388 = vmatmul.mubr.f32.gmra.mrb[0].mxu0 %v387
    %v389 = vpop.f32.mrb[0].mxu0
    %v390 = vadd.f32 0.0, %v389
    %v391 = vpop.f32.mrb[0].mxu0
    %v392 = vadd.f32 0.0, %v391
    %393 = vmatprep.mubr.f32.mxu0 0.0
    %v394 = vand.u32 %v114, 4294901760
    %v395 = vsub.f32 %v114, %v394
    %v396 = vand.u32 %v395, 4294901760
    %v397 = vsub.f32 %v395, %v396
    %v398 = vand.u32 %v397, 4294901760
    %399 = vmatmul.mubr.f32.gmra.mrb[0].mxu0 %v398
    %v400 = vpop.f32.mrb[0].mxu0
    %v401 = vadd.f32 0.0, %v400
    %v402 = vpop.f32.mrb[0].mxu0
    %v403 = vadd.f32 0.0, %v402
    %404 = vmatprep.mubr.f32.mxu0 0.0
    %v405 = vand.u32 %v117, 4294901760
    %v406 = vsub.f32 %v117, %v405
    %v407 = vand.u32 %v406, 4294901760
    %v408 = vsub.f32 %v406, %v407
    %v409 = vand.u32 %v408, 4294901760
    %410 = vmatmul.mubr.f32.gmra.mrb[0].mxu0 %v409
    %v411 = vpop.f32.mrb[0].mxu0
    %v412 = vadd.f32 0.0, %v411
    %v413 = vpop.f32.mrb[0].mxu0
    %v414 = vadd.f32 0.0, %v413
    %415 = vmatprep.mubr.f32.mxu0 0.0
    %v416 = vand.u32 %v120, 4294901760
    %v417 = vsub.f32 %v120, %v416
    %v418 = vand.u32 %v417, 4294901760
    %v419 = vsub.f32 %v417, %v418
    %v420 = vand.u32 %v419, 4294901760
    %421 = vmatmul.mubr.f32.gmra.mrb[0].mxu0 %v420
    %v422 = vpop.f32.mrb[0].mxu0
    %v423 = vadd.f32 0.0, %v422
    %v424 = vpop.f32.mrb[0].mxu0
    %v425 = vadd.f32 0.0, %v424
    %426 = vmatprep.mubr.f32.mxu0 0.0
    %v427 = vand.u32 %v123, 4294901760
    %v428 = vsub.f32 %v123, %v427
    %v429 = vand.u32 %v428, 4294901760
    %v430 = vsub.f32 %v428, %v429
    %v431 = vand.u32 %v430, 4294901760
    %432 = vmatmul.mubr.f32.gmra.mrb[0].mxu0 %v431
    %v433 = vpop.f32.mrb[0].mxu0
    %v434 = vadd.f32 0.0, %v433
    %v435 = vpop.f32.mrb[0].mxu0
    %v436 = vadd.f32 0.0, %v435
    %437 = vmatprep.mubr.f32.mxu0 0.0
    %v438 = vand.u32 %v126, 4294901760
    %v439 = vsub.f32 %v126, %v438
    %v440 = vand.u32 %v439, 4294901760
    %v441 = vsub.f32 %v439, %v440
    %v442 = vand.u32 %v441, 4294901760
    %443 = vmatmul.mubr.f32.gmra.mrb[0].mxu0 %v442
    %v444 = vpop.f32.mrb[0].mxu0
    %v445 = vadd.f32 0.0, %v444
    %v446 = vpop.f32.mrb[0].mxu0
    %v447 = vadd.f32 0.0, %v446
    %448 = vmatprep.mubr.f32.mxu0 0.0
    %v449 = vand.u32 %v129, 4294901760
    %v450 = vsub.f32 %v129, %v449
    %v451 = vand.u32 %v450, 4294901760
    %v452 = vsub.f32 %v450, %v451
    %v453 = vand.u32 %v452, 4294901760
    %454 = vmatmul.mubr.f32.gmra.mrb[0].mxu0 %v453
    %v455 = vpop.f32.mrb[0].mxu0
    %v456 = vadd.f32 0.0, %v455
    %v457 = vpop.f32.mrb[0].mxu0
    %v458 = vadd.f32 0.0, %v457
    %459 = vmatprep.mubr.f32.mxu0 0.0
    %v460 = vand.u32 %v132, 4294901760
    %v461 = vsub.f32 %v132, %v460
    %v462 = vand.u32 %v461, 4294901760
    %v463 = vsub.f32 %v461, %v462
    %v464 = vand.u32 %v463, 4294901760
    %465 = vmatmul.mubr.f32.gmra.mrb[0].mxu0 %v464
    %v466 = vpop.f32.mrb[0].mxu0
    %v467 = vadd.f32 0.0, %v466
    %v468 = vpop.f32.mrb[0].mxu0
    %v469 = vadd.f32 0.0, %v468
    %470 = vdwg.mxu0
    %v471 = vand.u32 %v54, 4294901760
    %v472 = vsub.f32 %v54, %v471
    %v473 = vand.u32 %v472, 4294901760
    %v474 = vsub.f32 %v472, %v473
    %v475 = vand.u32 %v474, 4294901760
    %476 = vmatprep.subr.mxu0 %v475
    %v477 = vand.u32 %v53, 4294901760
    %v478 = vsub.f32 %v53, %v477
    %v479 = vand.u32 %v478, 4294901760
    %v480 = vsub.f32 %v478, %v479
    %v481 = vand.u32 %v480, 4294901760
    %482 = vmatpush1.msra.mxu0 %v481
    %v483 = vand.u32 %v56, 4294901760
    %v484 = vsub.f32 %v56, %v483
    %v485 = vand.u32 %v484, 4294901760
    %v486 = vsub.f32 %v484, %v485
    %v487 = vand.u32 %v486, 4294901760
    %488 = vmatprep.subr.mxu0 %v487
    %v489 = vand.u32 %v55, 4294901760
    %v490 = vsub.f32 %v55, %v489
    %v491 = vand.u32 %v490, 4294901760
    %v492 = vsub.f32 %v490, %v491
    %v493 = vand.u32 %v492, 4294901760
    %494 = vmatpush1.msra.mxu0 %v493
    %v495 = vand.u32 %v58, 4294901760
    %v496 = vsub.f32 %v58, %v495
    %v497 = vand.u32 %v496, 4294901760
    %v498 = vsub.f32 %v496, %v497
    %v499 = vand.u32 %v498, 4294901760
    %500 = vmatprep.subr.mxu0 %v499
    %v501 = vand.u32 %v57, 4294901760
    %v502 = vsub.f32 %v57, %v501
    %v503 = vand.u32 %v502, 4294901760
    %v504 = vsub.f32 %v502, %v503
    %v505 = vand.u32 %v504, 4294901760
    %506 = vmatpush1.msra.mxu0 %v505
    %v507 = vand.u32 %v60, 4294901760
    %v508 = vsub.f32 %v60, %v507
    %v509 = vand.u32 %v508, 4294901760
    %v510 = vsub.f32 %v508, %v509
    %v511 = vand.u32 %v510, 4294901760
    %512 = vmatprep.subr.mxu0 %v511
    %v513 = vand.u32 %v59, 4294901760
    %v514 = vsub.f32 %v59, %v513
    %v515 = vand.u32 %v514, 4294901760
    %v516 = vsub.f32 %v514, %v515
    %v517 = vand.u32 %v516, 4294901760
    %518 = vmatpush1.msra.mxu0 %v517
    %519 = vmatprep.subr.mxu0 0.0
    %520 = vmatpush1.msra.mxu0 0.0
    %521 = vmatprep.subr.mxu0 0.0
    %522 = vmatpush1.msra.mxu0 0.0
    %523 = vmatprep.subr.mxu0 0.0
    %524 = vmatpush1.msra.mxu0 0.0
    %525 = vmatprep.subr.mxu0 0.0
    %526 = vmatpush1.msra.mxu0 0.0
    %527 = vmatprep.subr.mxu0 0.0
    %528 = vmatpush1.msra.mxu0 0.0
    %529 = vmatprep.subr.mxu0 0.0
    %530 = vmatpush1.msra.mxu0 0.0
    %531 = vmatprep.subr.mxu0 0.0
    %532 = vmatpush1.msra.mxu0 0.0
    %533 = vmatprep.subr.mxu0 0.0
    %534 = vmatpush1.msra.mxu0 0.0
    %535 = vmatprep.subr.mxu0 0.0
    %536 = vmatpush1.msra.mxu0 0.0
    %537 = vmatprep.subr.mxu0 0.0
    %538 = vmatpush1.msra.mxu0 0.0
    %539 = vmatprep.subr.mxu0 0.0
    %540 = vmatpush1.msra.mxu0 0.0
    %541 = vmatprep.subr.mxu0 0.0
    %542 = vmatpush1.msra.mxu0 0.0
    %543 = vmatprep.subr.mxu0 0.0
    %544 = vmatpush1.msra.mxu0 0.0
    %545 = vmatprep.subr.mxu0 0.0
    %546 = vmatpush1.msra.mxu0 0.0
    %547 = vmatprep.subr.mxu0 0.0
    %548 = vmatpush1.msra.mxu0 0.0
    %549 = vmatprep.subr.mxu0 0.0
    %550 = vmatpush1.msra.mxu0 0.0
    %551 = vmatprep.subr.mxu0 0.0
    %552 = vmatpush1.msra.mxu0 0.0
    %553 = vmatprep.subr.mxu0 0.0
    %554 = vmatpush1.msra.mxu0 0.0
    %555 = vmatprep.subr.mxu0 0.0
    %556 = vmatpush1.msra.mxu0 0.0
    %557 = vmatprep.subr.mxu0 0.0
    %558 = vmatpush1.msra.mxu0 0.0
    %559 = vmatprep.subr.mxu0 0.0
    %560 = vmatpush1.msra.mxu0 0.0
    %561 = vmatprep.subr.mxu0 0.0
    %562 = vmatpush1.msra.mxu0 0.0
    %563 = vmatprep.subr.mxu0 0.0
    %564 = vmatpush1.msra.mxu0 0.0
    %565 = vmatprep.subr.mxu0 0.0
    %566 = vmatpush1.msra.mxu0 0.0
    %567 = vmatprep.subr.mxu0 0.0
    %568 = vmatpush1.msra.mxu0 0.0
    %569 = vmatprep.subr.mxu0 0.0
    %570 = vmatpush1.msra.mxu0 0.0
    %571 = vmatprep.subr.mxu0 0.0
    %572 = vmatpush1.msra.mxu0 0.0
    %573 = vmatprep.subr.mxu0 0.0
    %574 = vmatpush1.msra.mxu0 0.0
    %575 = vmatprep.mubr.f32.mxu0 0.0
    %v576 = vand.u32 %v63, 4294901760
    %577 = vmatmul.mubr.f32.gmra.mrb[0].mxu0 %v576
    %v578 = vpop.f32.mrb[0].mxu0
    %v579 = vadd.f32 %v214, %v578
    %v580 = vpop.f32.mrb[0].mxu0
    %v581 = vadd.f32 %v216, %v580
    %582 = vmatprep.mubr.f32.mxu0 0.0
    %v583 = vand.u32 %v66, 4294901760
    %584 = vmatmul.mubr.f32.gmra.mrb[0].mxu0 %v583
    %v585 = vpop.f32.mrb[0].mxu0
    %v586 = vadd.f32 %v225, %v585
    %v587 = vpop.f32.mrb[0].mxu0
    %v588 = vadd.f32 %v227, %v587
    %589 = vmatprep.mubr.f32.mxu0 0.0
    %v590 = vand.u32 %v69, 4294901760
    %591 = vmatmul.mubr.f32.gmra.mrb[0].mxu0 %v590
    %v592 = vpop.f32.mrb[0].mxu0
    %v593 = vadd.f32 %v236, %v592
    %v594 = vpop.f32.mrb[0].mxu0
    %v595 = vadd.f32 %v238, %v594
    %596 = vmatprep.mubr.f32.mxu0 0.0
    %v597 = vand.u32 %v72, 4294901760
    %598 = vmatmul.mubr.f32.gmra.mrb[0].mxu0 %v597
    %v599 = vpop.f32.mrb[0].mxu0
    %v600 = vadd.f32 %v247, %v599
    %v601 = vpop.f32.mrb[0].mxu0
    %v602 = vadd.f32 %v249, %v601
    %603 = vmatprep.mubr.f32.mxu0 0.0
    %v604 = vand.u32 %v75, 4294901760
    %605 = vmatmul.mubr.f32.gmra.mrb[0].mxu0 %v604
    %v606 = vpop.f32.mrb[0].mxu0
    %v607 = vadd.f32 %v258, %v606
    %v608 = vpop.f32.mrb[0].mxu0
    %v609 = vadd.f32 %v260, %v608
    %610 = vmatprep.mubr.f32.mxu0 0.0
    %v611 = vand.u32 %v78, 4294901760
    %612 = vmatmul.mubr.f32.gmra.mrb[0].mxu0 %v611
    %v613 = vpop.f32.mrb[0].mxu0
    %v614 = vadd.f32 %v269, %v613
    %v615 = vpop.f32.mrb[0].mxu0
    %v616 = vadd.f32 %v271, %v615
    %617 = vmatprep.mubr.f32.mxu0 0.0
    %v618 = vand.u32 %v81, 4294901760
    %619 = vmatmul.mubr.f32.gmra.mrb[0].mxu0 %v618
    %v620 = vpop.f32.mrb[0].mxu0
    %v621 = vadd.f32 %v280, %v620
    %v622 = vpop.f32.mrb[0].mxu0
    %v623 = vadd.f32 %v282, %v622
    %624 = vmatprep.mubr.f32.mxu0 0.0
    %v625 = vand.u32 %v84, 4294901760
    %626 = vmatmul.mubr.f32.gmra.mrb[0].mxu0 %v625
    %v627 = vpop.f32.mrb[0].mxu0
    %v628 = vadd.f32 %v291, %v627
    %v629 = vpop.f32.mrb[0].mxu0
    %v630 = vadd.f32 %v293, %v629
    %631 = vmatprep.mubr.f32.mxu0 0.0
    %v632 = vand.u32 %v87, 4294901760
    %633 = vmatmul.mubr.f32.gmra.mrb[0].mxu0 %v632
    %v634 = vpop.f32.mrb[0].mxu0
    %v635 = vadd.f32 %v302, %v634
    %v636 = vpop.f32.mrb[0].mxu0
    %v637 = vadd.f32 %v304, %v636
    %638 = vmatprep.mubr.f32.mxu0 0.0
    %v639 = vand.u32 %v90, 4294901760
    %640 = vmatmul.mubr.f32.gmra.mrb[0].mxu0 %v639
    %v641 = vpop.f32.mrb[0].mxu0
    %v642 = vadd.f32 %v313, %v641
    %v643 = vpop.f32.mrb[0].mxu0
    %v644 = vadd.f32 %v315, %v643
    %645 = vmatprep.mubr.f32.mxu0 0.0
    %v646 = vand.u32 %v93, 4294901760
    %647 = vmatmul.mubr.f32.gmra.mrb[0].mxu0 %v646
    %v648 = vpop.f32.mrb[0].mxu0
    %v649 = vadd.f32 %v324, %v648
    %v650 = vpop.f32.mrb[0].mxu0
    %v651 = vadd.f32 %v326, %v650
    %652 = vmatprep.mubr.f32.mxu0 0.0
    %v653 = vand.u32 %v96, 4294901760
    %654 = vmatmul.mubr.f32.gmra.mrb[0].mxu0 %v653
    %v655 = vpop.f32.mrb[0].mxu0
    %v656 = vadd.f32 %v335, %v655
    %v657 = vpop.f32.mrb[0].mxu0
    %v658 = vadd.f32 %v337, %v657
    %659 = vmatprep.mubr.f32.mxu0 0.0
    %v660 = vand.u32 %v99, 4294901760
    %661 = vmatmul.mubr.f32.gmra.mrb[0].mxu0 %v660
    %v662 = vpop.f32.mrb[0].mxu0
    %v663 = vadd.f32 %v346, %v662
    %v664 = vpop.f32.mrb[0].mxu0
    %v665 = vadd.f32 %v348, %v664
    %666 = vmatprep.mubr.f32.mxu0 0.0
    %v667 = vand.u32 %v102, 4294901760
    %668 = vmatmul.mubr.f32.gmra.mrb[0].mxu0 %v667
    %v669 = vpop.f32.mrb[0].mxu0
    %v670 = vadd.f32 %v357, %v669
    %v671 = vpop.f32.mrb[0].mxu0
    %v672 = vadd.f32 %v359, %v671
    %673 = vmatprep.mubr.f32.mxu0 0.0
    %v674 = vand.u32 %v105, 4294901760
    %675 = vmatmul.mubr.f32.gmra.mrb[0].mxu0 %v674
    %v676 = vpop.f32.mrb[0].mxu0
    %v677 = vadd.f32 %v368, %v676
    %v678 = vpop.f32.mrb[0].mxu0
    %v679 = vadd.f32 %v370, %v678
    %680 = vmatprep.mubr.f32.mxu0 0.0
    %v681 = vand.u32 %v108, 4294901760
    %682 = vmatmul.mubr.f32.gmra.mrb[0].mxu0 %v681
    %v683 = vpop.f32.mrb[0].mxu0
    %v684 = vadd.f32 %v379, %v683
    %v685 = vpop.f32.mrb[0].mxu0
    %v686 = vadd.f32 %v381, %v685
    %687 = vmatprep.mubr.f32.mxu0 0.0
    %v688 = vand.u32 %v111, 4294901760
    %689 = vmatmul.mubr.f32.gmra.mrb[0].mxu0 %v688
    %v690 = vpop.f32.mrb[0].mxu0
    %v691 = vadd.f32 %v390, %v690
    %v692 = vpop.f32.mrb[0].mxu0
    %v693 = vadd.f32 %v392, %v692
    %694 = vmatprep.mubr.f32.mxu0 0.0
    %v695 = vand.u32 %v114, 4294901760
    %696 = vmatmul.mubr.f32.gmra.mrb[0].mxu0 %v695
    %v697 = vpop.f32.mrb[0].mxu0
    %v698 = vadd.f32 %v401, %v697
    %v699 = vpop.f32.mrb[0].mxu0
    %v700 = vadd.f32 %v403, %v699
    %701 = vmatprep.mubr.f32.mxu0 0.0
    %v702 = vand.u32 %v117, 4294901760
    %703 = vmatmul.mubr.f32.gmra.mrb[0].mxu0 %v702
    %v704 = vpop.f32.mrb[0].mxu0
    %v705 = vadd.f32 %v412, %v704
    %v706 = vpop.f32.mrb[0].mxu0
    %v707 = vadd.f32 %v414, %v706
    %708 = vmatprep.mubr.f32.mxu0 0.0
    %v709 = vand.u32 %v120, 4294901760
    %710 = vmatmul.mubr.f32.gmra.mrb[0].mxu0 %v709
    %v711 = vpop.f32.mrb[0].mxu0
    %v712 = vadd.f32 %v423, %v711
    %v713 = vpop.f32.mrb[0].mxu0
    %v714 = vadd.f32 %v425, %v713
    %715 = vmatprep.mubr.f32.mxu0 0.0
    %v716 = vand.u32 %v123, 4294901760
    %717 = vmatmul.mubr.f32.gmra.mrb[0].mxu0 %v716
    %v718 = vpop.f32.mrb[0].mxu0
    %v719 = vadd.f32 %v434, %v718
    %v720 = vpop.f32.mrb[0].mxu0
    %v721 = vadd.f32 %v436, %v720
    %722 = vmatprep.mubr.f32.mxu0 0.0
    %v723 = vand.u32 %v126, 4294901760
    %724 = vmatmul.mubr.f32.gmra.mrb[0].mxu0 %v723
    %v725 = vpop.f32.mrb[0].mxu0
    %v726 = vadd.f32 %v445, %v725
    %v727 = vpop.f32.mrb[0].mxu0
    %v728 = vadd.f32 %v447, %v727
    %729 = vmatprep.mubr.f32.mxu0 0.0
    %v730 = vand.u32 %v129, 4294901760
    %731 = vmatmul.mubr.f32.gmra.mrb[0].mxu0 %v730
    %v732 = vpop.f32.mrb[0].mxu0
    %v733 = vadd.f32 %v456, %v732
    %v734 = vpop.f32.mrb[0].mxu0
    %v735 = vadd.f32 %v458, %v734
    %736 = vmatprep.mubr.f32.mxu0 0.0
    %v737 = vand.u32 %v132, 4294901760
    %738 = vmatmul.mubr.f32.gmra.mrb[0].mxu0 %v737
    %v739 = vpop.f32.mrb[0].mxu0
    %v740 = vadd.f32 %v467, %v739
    %v741 = vpop.f32.mrb[0].mxu0
    %v742 = vadd.f32 %v469, %v741
    %743 = vdwg.mxu0
    %v744 = vand.u32 %v54, 4294901760
    %v745 = vsub.f32 %v54, %v744
    %746 = vmatprep.subr.mxu0 %v745
    %v747 = vand.u32 %v53, 4294901760
    %v748 = vsub.f32 %v53, %v747
    %749 = vmatpush1.msra.mxu0 %v748
    %v750 = vand.u32 %v56, 4294901760
    %v751 = vsub.f32 %v56, %v750
    %752 = vmatprep.subr.mxu0 %v751
    %v753 = vand.u32 %v55, 4294901760
    %v754 = vsub.f32 %v55, %v753
    %755 = vmatpush1.msra.mxu0 %v754
    %v756 = vand.u32 %v58, 4294901760
    %v757 = vsub.f32 %v58, %v756
    %758 = vmatprep.subr.mxu0 %v757
    %v759 = vand.u32 %v57, 4294901760
    %v760 = vsub.f32 %v57, %v759
    %761 = vmatpush1.msra.mxu0 %v760
    %v762 = vand.u32 %v60, 4294901760
    %v763 = vsub.f32 %v60, %v762
    %764 = vmatprep.subr.mxu0 %v763
    %v765 = vand.u32 %v59, 4294901760
    %v766 = vsub.f32 %v59, %v765
    %767 = vmatpush1.msra.mxu0 %v766
    %768 = vmatprep.subr.mxu0 0.0
    %769 = vmatpush1.msra.mxu0 0.0
    %770 = vmatprep.subr.mxu0 0.0
    %771 = vmatpush1.msra.mxu0 0.0
    %772 = vmatprep.subr.mxu0 0.0
    %773 = vmatpush1.msra.mxu0 0.0
    %774 = vmatprep.subr.mxu0 0.0
    %775 = vmatpush1.msra.mxu0 0.0
    %776 = vmatprep.subr.mxu0 0.0
    %777 = vmatpush1.msra.mxu0 0.0
    %778 = vmatprep.subr.mxu0 0.0
    %779 = vmatpush1.msra.mxu0 0.0
    %780 = vmatprep.subr.mxu0 0.0
    %781 = vmatpush1.msra.mxu0 0.0
    %782 = vmatprep.subr.mxu0 0.0
    %783 = vmatpush1.msra.mxu0 0.0
    %784 = vmatprep.subr.mxu0 0.0
    %785 = vmatpush1.msra.mxu0 0.0
    %786 = vmatprep.subr.mxu0 0.0
    %787 = vmatpush1.msra.mxu0 0.0
    %788 = vmatprep.subr.mxu0 0.0
    %789 = vmatpush1.msra.mxu0 0.0
    %790 = vmatprep.subr.mxu0 0.0
    %791 = vmatpush1.msra.mxu0 0.0
    %792 = vmatprep.subr.mxu0 0.0
    %793 = vmatpush1.msra.mxu0 0.0
    %794 = vmatprep.subr.mxu0 0.0
    %795 = vmatpush1.msra.mxu0 0.0
    %796 = vmatprep.subr.mxu0 0.0
    %797 = vmatpush1.msra.mxu0 0.0
    %798 = vmatprep.subr.mxu0 0.0
    %799 = vmatpush1.msra.mxu0 0.0
    %800 = vmatprep.subr.mxu0 0.0
    %801 = vmatpush1.msra.mxu0 0.0
    %802 = vmatprep.subr.mxu0 0.0
    %803 = vmatpush1.msra.mxu0 0.0
    %804 = vmatprep.subr.mxu0 0.0
    %805 = vmatpush1.msra.mxu0 0.0
    %806 = vmatprep.subr.mxu0 0.0
    %807 = vmatpush1.msra.mxu0 0.0
    %808 = vmatprep.subr.mxu0 0.0
    %809 = vmatpush1.msra.mxu0 0.0
    %810 = vmatprep.subr.mxu0 0.0
    %811 = vmatpush1.msra.mxu0 0.0
    %812 = vmatprep.subr.mxu0 0.0
    %813 = vmatpush1.msra.mxu0 0.0
    %814 = vmatprep.subr.mxu0 0.0
    %815 = vmatpush1.msra.mxu0 0.0
    %816 = vmatprep.subr.mxu0 0.0
    %817 = vmatpush1.msra.mxu0 0.0
    %818 = vmatprep.subr.mxu0 0.0
    %819 = vmatpush1.msra.mxu0 0.0
    %820 = vmatprep.subr.mxu0 0.0
    %821 = vmatpush1.msra.mxu0 0.0
    %822 = vmatprep.subr.mxu0 0.0
    %823 = vmatpush1.msra.mxu0 0.0
    %824 = vmatprep.mubr.f32.mxu0 0.0
    %v825 = vand.u32 %v63, 4294901760
    %v826 = vsub.f32 %v63, %v825
    %827 = vmatmul.mubr.f32.gmra.mrb[0].mxu0 %v826
    %v828 = vpop.f32.mrb[0].mxu0
    %v829 = vadd.f32 %v579, %v828
    %v830 = vpop.f32.mrb[0].mxu0
    %v831 = vadd.f32 %v581, %v830
    %832 = vmatprep.mubr.f32.mxu0 0.0
    %v833 = vand.u32 %v66, 4294901760
    %v834 = vsub.f32 %v66, %v833
    %835 = vmatmul.mubr.f32.gmra.mrb[0].mxu0 %v834
    %v836 = vpop.f32.mrb[0].mxu0
    %v837 = vadd.f32 %v586, %v836
    %v838 = vpop.f32.mrb[0].mxu0
    %v839 = vadd.f32 %v588, %v838
    %840 = vmatprep.mubr.f32.mxu0 0.0
    %v841 = vand.u32 %v69, 4294901760
    %v842 = vsub.f32 %v69, %v841
    %843 = vmatmul.mubr.f32.gmra.mrb[0].mxu0 %v842
    %v844 = vpop.f32.mrb[0].mxu0
    %v845 = vadd.f32 %v593, %v844
    %v846 = vpop.f32.mrb[0].mxu0
    %v847 = vadd.f32 %v595, %v846
    %848 = vmatprep.mubr.f32.mxu0 0.0
    %v849 = vand.u32 %v72, 4294901760
    %v850 = vsub.f32 %v72, %v849
    %851 = vmatmul.mubr.f32.gmra.mrb[0].mxu0 %v850
    %v852 = vpop.f32.mrb[0].mxu0
    %v853 = vadd.f32 %v600, %v852
    %v854 = vpop.f32.mrb[0].mxu0
    %v855 = vadd.f32 %v602, %v854
    %856 = vmatprep.mubr.f32.mxu0 0.0
    %v857 = vand.u32 %v75, 4294901760
    %v858 = vsub.f32 %v75, %v857
    %859 = vmatmul.mubr.f32.gmra.mrb[0].mxu0 %v858
    %v860 = vpop.f32.mrb[0].mxu0
    %v861 = vadd.f32 %v607, %v860
    %v862 = vpop.f32.mrb[0].mxu0
    %v863 = vadd.f32 %v609, %v862
    %864 = vmatprep.mubr.f32.mxu0 0.0
    %v865 = vand.u32 %v78, 4294901760
    %v866 = vsub.f32 %v78, %v865
    %867 = vmatmul.mubr.f32.gmra.mrb[0].mxu0 %v866
    %v868 = vpop.f32.mrb[0].mxu0
    %v869 = vadd.f32 %v614, %v868
    %v870 = vpop.f32.mrb[0].mxu0
    %v871 = vadd.f32 %v616, %v870
    %872 = vmatprep.mubr.f32.mxu0 0.0
    %v873 = vand.u32 %v81, 4294901760
    %v874 = vsub.f32 %v81, %v873
    %875 = vmatmul.mubr.f32.gmra.mrb[0].mxu0 %v874
    %v876 = vpop.f32.mrb[0].mxu0
    %v877 = vadd.f32 %v621, %v876
    %v878 = vpop.f32.mrb[0].mxu0
    %v879 = vadd.f32 %v623, %v878
    %880 = vmatprep.mubr.f32.mxu0 0.0
    %v881 = vand.u32 %v84, 4294901760
    %v882 = vsub.f32 %v84, %v881
    %883 = vmatmul.mubr.f32.gmra.mrb[0].mxu0 %v882
    %v884 = vpop.f32.mrb[0].mxu0
    %v885 = vadd.f32 %v628, %v884
    %v886 = vpop.f32.mrb[0].mxu0
    %v887 = vadd.f32 %v630, %v886
    %888 = vmatprep.mubr.f32.mxu0 0.0
    %v889 = vand.u32 %v87, 4294901760
    %v890 = vsub.f32 %v87, %v889
    %891 = vmatmul.mubr.f32.gmra.mrb[0].mxu0 %v890
    %v892 = vpop.f32.mrb[0].mxu0
    %v893 = vadd.f32 %v635, %v892
    %v894 = vpop.f32.mrb[0].mxu0
    %v895 = vadd.f32 %v637, %v894
    %896 = vmatprep.mubr.f32.mxu0 0.0
    %v897 = vand.u32 %v90, 4294901760
    %v898 = vsub.f32 %v90, %v897
    %899 = vmatmul.mubr.f32.gmra.mrb[0].mxu0 %v898
    %v900 = vpop.f32.mrb[0].mxu0
    %v901 = vadd.f32 %v642, %v900
    %v902 = vpop.f32.mrb[0].mxu0
    %v903 = vadd.f32 %v644, %v902
    %904 = vmatprep.mubr.f32.mxu0 0.0
    %v905 = vand.u32 %v93, 4294901760
    %v906 = vsub.f32 %v93, %v905
    %907 = vmatmul.mubr.f32.gmra.mrb[0].mxu0 %v906
    %v908 = vpop.f32.mrb[0].mxu0
    %v909 = vadd.f32 %v649, %v908
    %v910 = vpop.f32.mrb[0].mxu0
    %v911 = vadd.f32 %v651, %v910
    %912 = vmatprep.mubr.f32.mxu0 0.0
    %v913 = vand.u32 %v96, 4294901760
    %v914 = vsub.f32 %v96, %v913
    %915 = vmatmul.mubr.f32.gmra.mrb[0].mxu0 %v914
    %v916 = vpop.f32.mrb[0].mxu0
    %v917 = vadd.f32 %v656, %v916
    %v918 = vpop.f32.mrb[0].mxu0
    %v919 = vadd.f32 %v658, %v918
    %920 = vmatprep.mubr.f32.mxu0 0.0
    %v921 = vand.u32 %v99, 4294901760
    %v922 = vsub.f32 %v99, %v921
    %923 = vmatmul.mubr.f32.gmra.mrb[0].mxu0 %v922
    %v924 = vpop.f32.mrb[0].mxu0
    %v925 = vadd.f32 %v663, %v924
    %v926 = vpop.f32.mrb[0].mxu0
    %v927 = vadd.f32 %v665, %v926
    %928 = vmatprep.mubr.f32.mxu0 0.0
    %v929 = vand.u32 %v102, 4294901760
    %v930 = vsub.f32 %v102, %v929
    %931 = vmatmul.mubr.f32.gmra.mrb[0].mxu0 %v930
    %v932 = vpop.f32.mrb[0].mxu0
    %v933 = vadd.f32 %v670, %v932
    %v934 = vpop.f32.mrb[0].mxu0
    %v935 = vadd.f32 %v672, %v934
    %936 = vmatprep.mubr.f32.mxu0 0.0
    %v937 = vand.u32 %v105, 4294901760
    %v938 = vsub.f32 %v105, %v937
    %939 = vmatmul.mubr.f32.gmra.mrb[0].mxu0 %v938
    %v940 = vpop.f32.mrb[0].mxu0
    %v941 = vadd.f32 %v677, %v940
    %v942 = vpop.f32.mrb[0].mxu0
    %v943 = vadd.f32 %v679, %v942
    %944 = vmatprep.mubr.f32.mxu0 0.0
    %v945 = vand.u32 %v108, 4294901760
    %v946 = vsub.f32 %v108, %v945
    %947 = vmatmul.mubr.f32.gmra.mrb[0].mxu0 %v946
    %v948 = vpop.f32.mrb[0].mxu0
    %v949 = vadd.f32 %v684, %v948
    %v950 = vpop.f32.mrb[0].mxu0
    %v951 = vadd.f32 %v686, %v950
    %952 = vmatprep.mubr.f32.mxu0 0.0
    %v953 = vand.u32 %v111, 4294901760
    %v954 = vsub.f32 %v111, %v953
    %955 = vmatmul.mubr.f32.gmra.mrb[0].mxu0 %v954
    %v956 = vpop.f32.mrb[0].mxu0
    %v957 = vadd.f32 %v691, %v956
    %v958 = vpop.f32.mrb[0].mxu0
    %v959 = vadd.f32 %v693, %v958
    %960 = vmatprep.mubr.f32.mxu0 0.0
    %v961 = vand.u32 %v114, 4294901760
    %v962 = vsub.f32 %v114, %v961
    %963 = vmatmul.mubr.f32.gmra.mrb[0].mxu0 %v962
    %v964 = vpop.f32.mrb[0].mxu0
    %v965 = vadd.f32 %v698, %v964
    %v966 = vpop.f32.mrb[0].mxu0
    %v967 = vadd.f32 %v700, %v966
    %968 = vmatprep.mubr.f32.mxu0 0.0
    %v969 = vand.u32 %v117, 4294901760
    %v970 = vsub.f32 %v117, %v969
    %971 = vmatmul.mubr.f32.gmra.mrb[0].mxu0 %v970
    %v972 = vpop.f32.mrb[0].mxu0
    %v973 = vadd.f32 %v705, %v972
    %v974 = vpop.f32.mrb[0].mxu0
    %v975 = vadd.f32 %v707, %v974
    %976 = vmatprep.mubr.f32.mxu0 0.0
    %v977 = vand.u32 %v120, 4294901760
    %v978 = vsub.f32 %v120, %v977
    %979 = vmatmul.mubr.f32.gmra.mrb[0].mxu0 %v978
    %v980 = vpop.f32.mrb[0].mxu0
    %v981 = vadd.f32 %v712, %v980
    %v982 = vpop.f32.mrb[0].mxu0
    %v983 = vadd.f32 %v714, %v982
    %984 = vmatprep.mubr.f32.mxu0 0.0
    %v985 = vand.u32 %v123, 4294901760
    %v986 = vsub.f32 %v123, %v985
    %987 = vmatmul.mubr.f32.gmra.mrb[0].mxu0 %v986
    %v988 = vpop.f32.mrb[0].mxu0
    %v989 = vadd.f32 %v719, %v988
    %v990 = vpop.f32.mrb[0].mxu0
    %v991 = vadd.f32 %v721, %v990
    %992 = vmatprep.mubr.f32.mxu0 0.0
    %v993 = vand.u32 %v126, 4294901760
    %v994 = vsub.f32 %v126, %v993
    %995 = vmatmul.mubr.f32.gmra.mrb[0].mxu0 %v994
    %v996 = vpop.f32.mrb[0].mxu0
    %v997 = vadd.f32 %v726, %v996
    %v998 = vpop.f32.mrb[0].mxu0
    %v999 = vadd.f32 %v728, %v998
    %1000 = vmatprep.mubr.f32.mxu0 0.0
    %v1001 = vand.u32 %v129, 4294901760
    %v1002 = vsub.f32 %v129, %v1001
    %1003 = vmatmul.mubr.f32.gmra.mrb[0].mxu0 %v1002
    %v1004 = vpop.f32.mrb[0].mxu0
    %v1005 = vadd.f32 %v733, %v1004
    %v1006 = vpop.f32.mrb[0].mxu0
    %v1007 = vadd.f32 %v735, %v1006
    %1008 = vmatprep.mubr.f32.mxu0 0.0
    %v1009 = vand.u32 %v132, 4294901760
    %v1010 = vsub.f32 %v132, %v1009
    %1011 = vmatmul.mubr.f32.gmra.mrb[0].mxu0 %v1010
    %v1012 = vpop.f32.mrb[0].mxu0
    %v1013 = vadd.f32 %v740, %v1012
    %v1014 = vpop.f32.mrb[0].mxu0
    %v1015 = vadd.f32 %v742, %v1014
    %1016 = vdwg.mxu0
    %v1017 = vand.u32 %v54, 4294901760
    %1018 = vmatprep.subr.mxu0 %v1017
    %v1019 = vand.u32 %v53, 4294901760
    %1020 = vmatpush1.msra.mxu0 %v1019
    %v1021 = vand.u32 %v56, 4294901760
    %1022 = vmatprep.subr.mxu0 %v1021
    %v1023 = vand.u32 %v55, 4294901760
    %1024 = vmatpush1.msra.mxu0 %v1023
    %v1025 = vand.u32 %v58, 4294901760
    %1026 = vmatprep.subr.mxu0 %v1025
    %v1027 = vand.u32 %v57, 4294901760
    %1028 = vmatpush1.msra.mxu0 %v1027
    %v1029 = vand.u32 %v60, 4294901760
    %1030 = vmatprep.subr.mxu0 %v1029
    %v1031 = vand.u32 %v59, 4294901760
    %1032 = vmatpush1.msra.mxu0 %v1031
    %1033 = vmatprep.subr.mxu0 0.0
    %1034 = vmatpush1.msra.mxu0 0.0
    %1035 = vmatprep.subr.mxu0 0.0
    %1036 = vmatpush1.msra.mxu0 0.0
    %1037 = vmatprep.subr.mxu0 0.0
    %1038 = vmatpush1.msra.mxu0 0.0
    %1039 = vmatprep.subr.mxu0 0.0
    %1040 = vmatpush1.msra.mxu0 0.0
    %1041 = vmatprep.subr.mxu0 0.0
    %1042 = vmatpush1.msra.mxu0 0.0
    %1043 = vmatprep.subr.mxu0 0.0
    %1044 = vmatpush1.msra.mxu0 0.0
    %1045 = vmatprep.subr.mxu0 0.0
    %1046 = vmatpush1.msra.mxu0 0.0
    %1047 = vmatprep.subr.mxu0 0.0
    %1048 = vmatpush1.msra.mxu0 0.0
    %1049 = vmatprep.subr.mxu0 0.0
    %1050 = vmatpush1.msra.mxu0 0.0
    %1051 = vmatprep.subr.mxu0 0.0
    %1052 = vmatpush1.msra.mxu0 0.0
    %1053 = vmatprep.subr.mxu0 0.0
    %1054 = vmatpush1.msra.mxu0 0.0
    %1055 = vmatprep.subr.mxu0 0.0
    %1056 = vmatpush1.msra.mxu0 0.0
    %1057 = vmatprep.subr.mxu0 0.0
    %1058 = vmatpush1.msra.mxu0 0.0
    %1059 = vmatprep.subr.mxu0 0.0
    %1060 = vmatpush1.msra.mxu0 0.0
    %1061 = vmatprep.subr.mxu0 0.0
    %1062 = vmatpush1.msra.mxu0 0.0
    %1063 = vmatprep.subr.mxu0 0.0
    %1064 = vmatpush1.msra.mxu0 0.0
    %1065 = vmatprep.subr.mxu0 0.0
    %1066 = vmatpush1.msra.mxu0 0.0
    %1067 = vmatprep.subr.mxu0 0.0
    %1068 = vmatpush1.msra.mxu0 0.0
    %1069 = vmatprep.subr.mxu0 0.0
    %1070 = vmatpush1.msra.mxu0 0.0
    %1071 = vmatprep.subr.mxu0 0.0
    %1072 = vmatpush1.msra.mxu0 0.0
    %1073 = vmatprep.subr.mxu0 0.0
    %1074 = vmatpush1.msra.mxu0 0.0
    %1075 = vmatprep.subr.mxu0 0.0
    %1076 = vmatpush1.msra.mxu0 0.0
    %1077 = vmatprep.subr.mxu0 0.0
    %1078 = vmatpush1.msra.mxu0 0.0
    %1079 = vmatprep.subr.mxu0 0.0
    %1080 = vmatpush1.msra.mxu0 0.0
    %1081 = vmatprep.subr.mxu0 0.0
    %1082 = vmatpush1.msra.mxu0 0.0
    %1083 = vmatprep.subr.mxu0 0.0
    %1084 = vmatpush1.msra.mxu0 0.0
    %1085 = vmatprep.subr.mxu0 0.0
    %1086 = vmatpush1.msra.mxu0 0.0
    %1087 = vmatprep.subr.mxu0 0.0
    %1088 = vmatpush1.msra.mxu0 0.0
    %1089 = vmatprep.mubr.f32.mxu0 0.0
    %v1090 = vand.u32 %v63, 4294901760
    %v1091 = vsub.f32 %v63, %v1090
    %v1092 = vand.u32 %v1091, 4294901760
    %1093 = vmatmul.mubr.f32.gmra.mrb[0].mxu0 %v1092
    %v1094 = vpop.f32.mrb[0].mxu0
    %v1095 = vadd.f32 %v829, %v1094
    %v1096 = vpop.f32.mrb[0].mxu0
    %v1097 = vadd.f32 %v831, %v1096
    %1098 = vmatprep.mubr.f32.mxu0 0.0
    %v1099 = vand.u32 %v66, 4294901760
    %v1100 = vsub.f32 %v66, %v1099
    %v1101 = vand.u32 %v1100, 4294901760
    %1102 = vmatmul.mubr.f32.gmra.mrb[0].mxu0 %v1101
    %v1103 = vpop.f32.mrb[0].mxu0
    %v1104 = vadd.f32 %v837, %v1103
    %v1105 = vpop.f32.mrb[0].mxu0
    %v1106 = vadd.f32 %v839, %v1105
    %1107 = vmatprep.mubr.f32.mxu0 0.0
    %v1108 = vand.u32 %v69, 4294901760
    %v1109 = vsub.f32 %v69, %v1108
    %v1110 = vand.u32 %v1109, 4294901760
    %1111 = vmatmul.mubr.f32.gmra.mrb[0].mxu0 %v1110
    %v1112 = vpop.f32.mrb[0].mxu0
    %v1113 = vadd.f32 %v845, %v1112
    %v1114 = vpop.f32.mrb[0].mxu0
    %v1115 = vadd.f32 %v847, %v1114
    %1116 = vmatprep.mubr.f32.mxu0 0.0
    %v1117 = vand.u32 %v72, 4294901760
    %v1118 = vsub.f32 %v72, %v1117
    %v1119 = vand.u32 %v1118, 4294901760
    %1120 = vmatmul.mubr.f32.gmra.mrb[0].mxu0 %v1119
    %v1121 = vpop.f32.mrb[0].mxu0
    %v1122 = vadd.f32 %v853, %v1121
    %v1123 = vpop.f32.mrb[0].mxu0
    %v1124 = vadd.f32 %v855, %v1123
    %1125 = vmatprep.mubr.f32.mxu0 0.0
    %v1126 = vand.u32 %v75, 4294901760
    %v1127 = vsub.f32 %v75, %v1126
    %v1128 = vand.u32 %v1127, 4294901760
    %1129 = vmatmul.mubr.f32.gmra.mrb[0].mxu0 %v1128
    %v1130 = vpop.f32.mrb[0].mxu0
    %v1131 = vadd.f32 %v861, %v1130
    %v1132 = vpop.f32.mrb[0].mxu0
    %v1133 = vadd.f32 %v863, %v1132
    %1134 = vmatprep.mubr.f32.mxu0 0.0
    %v1135 = vand.u32 %v78, 4294901760
    %v1136 = vsub.f32 %v78, %v1135
    %v1137 = vand.u32 %v1136, 4294901760
    %1138 = vmatmul.mubr.f32.gmra.mrb[0].mxu0 %v1137
    %v1139 = vpop.f32.mrb[0].mxu0
    %v1140 = vadd.f32 %v869, %v1139
    %v1141 = vpop.f32.mrb[0].mxu0
    %v1142 = vadd.f32 %v871, %v1141
    %1143 = vmatprep.mubr.f32.mxu0 0.0
    %v1144 = vand.u32 %v81, 4294901760
    %v1145 = vsub.f32 %v81, %v1144
    %v1146 = vand.u32 %v1145, 4294901760
    %1147 = vmatmul.mubr.f32.gmra.mrb[0].mxu0 %v1146
    %v1148 = vpop.f32.mrb[0].mxu0
    %v1149 = vadd.f32 %v877, %v1148
    %v1150 = vpop.f32.mrb[0].mxu0
    %v1151 = vadd.f32 %v879, %v1150
    %1152 = vmatprep.mubr.f32.mxu0 0.0
    %v1153 = vand.u32 %v84, 4294901760
    %v1154 = vsub.f32 %v84, %v1153
    %v1155 = vand.u32 %v1154, 4294901760
    %1156 = vmatmul.mubr.f32.gmra.mrb[0].mxu0 %v1155
    %v1157 = vpop.f32.mrb[0].mxu0
    %v1158 = vadd.f32 %v885, %v1157
    %v1159 = vpop.f32.mrb[0].mxu0
    %v1160 = vadd.f32 %v887, %v1159
    %1161 = vmatprep.mubr.f32.mxu0 0.0
    %v1162 = vand.u32 %v87, 4294901760
    %v1163 = vsub.f32 %v87, %v1162
    %v1164 = vand.u32 %v1163, 4294901760
    %1165 = vmatmul.mubr.f32.gmra.mrb[0].mxu0 %v1164
    %v1166 = vpop.f32.mrb[0].mxu0
    %v1167 = vadd.f32 %v893, %v1166
    %v1168 = vpop.f32.mrb[0].mxu0
    %v1169 = vadd.f32 %v895, %v1168
    %1170 = vmatprep.mubr.f32.mxu0 0.0
    %v1171 = vand.u32 %v90, 4294901760
    %v1172 = vsub.f32 %v90, %v1171
    %v1173 = vand.u32 %v1172, 4294901760
    %1174 = vmatmul.mubr.f32.gmra.mrb[0].mxu0 %v1173
    %v1175 = vpop.f32.mrb[0].mxu0
    %v1176 = vadd.f32 %v901, %v1175
    %v1177 = vpop.f32.mrb[0].mxu0
    %v1178 = vadd.f32 %v903, %v1177
    %1179 = vmatprep.mubr.f32.mxu0 0.0
    %v1180 = vand.u32 %v93, 4294901760
    %v1181 = vsub.f32 %v93, %v1180
    %v1182 = vand.u32 %v1181, 4294901760
    %1183 = vmatmul.mubr.f32.gmra.mrb[0].mxu0 %v1182
    %v1184 = vpop.f32.mrb[0].mxu0
    %v1185 = vadd.f32 %v909, %v1184
    %v1186 = vpop.f32.mrb[0].mxu0
    %v1187 = vadd.f32 %v911, %v1186
    %1188 = vmatprep.mubr.f32.mxu0 0.0
    %v1189 = vand.u32 %v96, 4294901760
    %v1190 = vsub.f32 %v96, %v1189
    %v1191 = vand.u32 %v1190, 4294901760
    %1192 = vmatmul.mubr.f32.gmra.mrb[0].mxu0 %v1191
    %v1193 = vpop.f32.mrb[0].mxu0
    %v1194 = vadd.f32 %v917, %v1193
    %v1195 = vpop.f32.mrb[0].mxu0
    %v1196 = vadd.f32 %v919, %v1195
    %1197 = vmatprep.mubr.f32.mxu0 0.0
    %v1198 = vand.u32 %v99, 4294901760
    %v1199 = vsub.f32 %v99, %v1198
    %v1200 = vand.u32 %v1199, 4294901760
    %1201 = vmatmul.mubr.f32.gmra.mrb[0].mxu0 %v1200
    %v1202 = vpop.f32.mrb[0].mxu0
    %v1203 = vadd.f32 %v925, %v1202
    %v1204 = vpop.f32.mrb[0].mxu0
    %v1205 = vadd.f32 %v927, %v1204
    %1206 = vmatprep.mubr.f32.mxu0 0.0
    %v1207 = vand.u32 %v102, 4294901760
    %v1208 = vsub.f32 %v102, %v1207
    %v1209 = vand.u32 %v1208, 4294901760
    %1210 = vmatmul.mubr.f32.gmra.mrb[0].mxu0 %v1209
    %v1211 = vpop.f32.mrb[0].mxu0
    %v1212 = vadd.f32 %v933, %v1211
    %v1213 = vpop.f32.mrb[0].mxu0
    %v1214 = vadd.f32 %v935, %v1213
    %1215 = vmatprep.mubr.f32.mxu0 0.0
    %v1216 = vand.u32 %v105, 4294901760
    %v1217 = vsub.f32 %v105, %v1216
    %v1218 = vand.u32 %v1217, 4294901760
    %1219 = vmatmul.mubr.f32.gmra.mrb[0].mxu0 %v1218
    %v1220 = vpop.f32.mrb[0].mxu0
    %v1221 = vadd.f32 %v941, %v1220
    %v1222 = vpop.f32.mrb[0].mxu0
    %v1223 = vadd.f32 %v943, %v1222
    %1224 = vmatprep.mubr.f32.mxu0 0.0
    %v1225 = vand.u32 %v108, 4294901760
    %v1226 = vsub.f32 %v108, %v1225
    %v1227 = vand.u32 %v1226, 4294901760
    %1228 = vmatmul.mubr.f32.gmra.mrb[0].mxu0 %v1227
    %v1229 = vpop.f32.mrb[0].mxu0
    %v1230 = vadd.f32 %v949, %v1229
    %v1231 = vpop.f32.mrb[0].mxu0
    %v1232 = vadd.f32 %v951, %v1231
    %1233 = vmatprep.mubr.f32.mxu0 0.0
    %v1234 = vand.u32 %v111, 4294901760
    %v1235 = vsub.f32 %v111, %v1234
    %v1236 = vand.u32 %v1235, 4294901760
    %1237 = vmatmul.mubr.f32.gmra.mrb[0].mxu0 %v1236
    %v1238 = vpop.f32.mrb[0].mxu0
    %v1239 = vadd.f32 %v957, %v1238
    %v1240 = vpop.f32.mrb[0].mxu0
    %v1241 = vadd.f32 %v959, %v1240
    %1242 = vmatprep.mubr.f32.mxu0 0.0
    %v1243 = vand.u32 %v114, 4294901760
    %v1244 = vsub.f32 %v114, %v1243
    %v1245 = vand.u32 %v1244, 4294901760
    %1246 = vmatmul.mubr.f32.gmra.mrb[0].mxu0 %v1245
    %v1247 = vpop.f32.mrb[0].mxu0
    %v1248 = vadd.f32 %v965, %v1247
    %v1249 = vpop.f32.mrb[0].mxu0
    %v1250 = vadd.f32 %v967, %v1249
    %1251 = vmatprep.mubr.f32.mxu0 0.0
    %v1252 = vand.u32 %v117, 4294901760
    %v1253 = vsub.f32 %v117, %v1252
    %v1254 = vand.u32 %v1253, 4294901760
    %1255 = vmatmul.mubr.f32.gmra.mrb[0].mxu0 %v1254
    %v1256 = vpop.f32.mrb[0].mxu0
    %v1257 = vadd.f32 %v973, %v1256
    %v1258 = vpop.f32.mrb[0].mxu0
    %v1259 = vadd.f32 %v975, %v1258
    %1260 = vmatprep.mubr.f32.mxu0 0.0
    %v1261 = vand.u32 %v120, 4294901760
    %v1262 = vsub.f32 %v120, %v1261
    %v1263 = vand.u32 %v1262, 4294901760
    %1264 = vmatmul.mubr.f32.gmra.mrb[0].mxu0 %v1263
    %v1265 = vpop.f32.mrb[0].mxu0
    %v1266 = vadd.f32 %v981, %v1265
    %v1267 = vpop.f32.mrb[0].mxu0
    %v1268 = vadd.f32 %v983, %v1267
    %1269 = vmatprep.mubr.f32.mxu0 0.0
    %v1270 = vand.u32 %v123, 4294901760
    %v1271 = vsub.f32 %v123, %v1270
    %v1272 = vand.u32 %v1271, 4294901760
    %1273 = vmatmul.mubr.f32.gmra.mrb[0].mxu0 %v1272
    %v1274 = vpop.f32.mrb[0].mxu0
    %v1275 = vadd.f32 %v989, %v1274
    %v1276 = vpop.f32.mrb[0].mxu0
    %v1277 = vadd.f32 %v991, %v1276
    %1278 = vmatprep.mubr.f32.mxu0 0.0
    %v1279 = vand.u32 %v126, 4294901760
    %v1280 = vsub.f32 %v126, %v1279
    %v1281 = vand.u32 %v1280, 4294901760
    %1282 = vmatmul.mubr.f32.gmra.mrb[0].mxu0 %v1281
    %v1283 = vpop.f32.mrb[0].mxu0
    %v1284 = vadd.f32 %v997, %v1283
    %v1285 = vpop.f32.mrb[0].mxu0
    %v1286 = vadd.f32 %v999, %v1285
    %1287 = vmatprep.mubr.f32.mxu0 0.0
    %v1288 = vand.u32 %v129, 4294901760
    %v1289 = vsub.f32 %v129, %v1288
    %v1290 = vand.u32 %v1289, 4294901760
    %1291 = vmatmul.mubr.f32.gmra.mrb[0].mxu0 %v1290
    %v1292 = vpop.f32.mrb[0].mxu0
    %v1293 = vadd.f32 %v1005, %v1292
    %v1294 = vpop.f32.mrb[0].mxu0
    %v1295 = vadd.f32 %v1007, %v1294
    %1296 = vmatprep.mubr.f32.mxu0 0.0
    %v1297 = vand.u32 %v132, 4294901760
    %v1298 = vsub.f32 %v132, %v1297
    %v1299 = vand.u32 %v1298, 4294901760
    %1300 = vmatmul.mubr.f32.gmra.mrb[0].mxu0 %v1299
    %v1301 = vpop.f32.mrb[0].mxu0
    %v1302 = vadd.f32 %v1013, %v1301
    %v1303 = vpop.f32.mrb[0].mxu0
    %v1304 = vadd.f32 %v1015, %v1303
    %1305 = vdwg.mxu0
    %v1306 = vand.u32 %v54, 4294901760
    %v1307 = vsub.f32 %v54, %v1306
    %v1308 = vand.u32 %v1307, 4294901760
    %1309 = vmatprep.subr.mxu0 %v1308
    %v1310 = vand.u32 %v53, 4294901760
    %v1311 = vsub.f32 %v53, %v1310
    %v1312 = vand.u32 %v1311, 4294901760
    %1313 = vmatpush1.msra.mxu0 %v1312
    %v1314 = vand.u32 %v56, 4294901760
    %v1315 = vsub.f32 %v56, %v1314
    %v1316 = vand.u32 %v1315, 4294901760
    %1317 = vmatprep.subr.mxu0 %v1316
    %v1318 = vand.u32 %v55, 4294901760
    %v1319 = vsub.f32 %v55, %v1318
    %v1320 = vand.u32 %v1319, 4294901760
    %1321 = vmatpush1.msra.mxu0 %v1320
    %v1322 = vand.u32 %v58, 4294901760
    %v1323 = vsub.f32 %v58, %v1322
    %v1324 = vand.u32 %v1323, 4294901760
    %1325 = vmatprep.subr.mxu0 %v1324
    %v1326 = vand.u32 %v57, 4294901760
    %v1327 = vsub.f32 %v57, %v1326
    %v1328 = vand.u32 %v1327, 4294901760
    %1329 = vmatpush1.msra.mxu0 %v1328
    %v1330 = vand.u32 %v60, 4294901760
    %v1331 = vsub.f32 %v60, %v1330
    %v1332 = vand.u32 %v1331, 4294901760
    %1333 = vmatprep.subr.mxu0 %v1332
    %v1334 = vand.u32 %v59, 4294901760
    %v1335 = vsub.f32 %v59, %v1334
    %v1336 = vand.u32 %v1335, 4294901760
    %1337 = vmatpush1.msra.mxu0 %v1336
    %1338 = vmatprep.subr.mxu0 0.0
    %1339 = vmatpush1.msra.mxu0 0.0
    %1340 = vmatprep.subr.mxu0 0.0
    %1341 = vmatpush1.msra.mxu0 0.0
    %1342 = vmatprep.subr.mxu0 0.0
    %1343 = vmatpush1.msra.mxu0 0.0
    %1344 = vmatprep.subr.mxu0 0.0
    %1345 = vmatpush1.msra.mxu0 0.0
    %1346 = vmatprep.subr.mxu0 0.0
    %1347 = vmatpush1.msra.mxu0 0.0
    %1348 = vmatprep.subr.mxu0 0.0
    %1349 = vmatpush1.msra.mxu0 0.0
    %1350 = vmatprep.subr.mxu0 0.0
    %1351 = vmatpush1.msra.mxu0 0.0
    %1352 = vmatprep.subr.mxu0 0.0
    %1353 = vmatpush1.msra.mxu0 0.0
    %1354 = vmatprep.subr.mxu0 0.0
    %1355 = vmatpush1.msra.mxu0 0.0
    %1356 = vmatprep.subr.mxu0 0.0
    %1357 = vmatpush1.msra.mxu0 0.0
    %1358 = vmatprep.subr.mxu0 0.0
    %1359 = vmatpush1.msra.mxu0 0.0
    %1360 = vmatprep.subr.mxu0 0.0
    %1361 = vmatpush1.msra.mxu0 0.0
    %1362 = vmatprep.subr.mxu0 0.0
    %1363 = vmatpush1.msra.mxu0 0.0
    %1364 = vmatprep.subr.mxu0 0.0
    %1365 = vmatpush1.msra.mxu0 0.0
    %1366 = vmatprep.subr.mxu0 0.0
    %1367 = vmatpush1.msra.mxu0 0.0
    %1368 = vmatprep.subr.mxu0 0.0
    %1369 = vmatpush1.msra.mxu0 0.0
    %1370 = vmatprep.subr.mxu0 0.0
    %1371 = vmatpush1.msra.mxu0 0.0
    %1372 = vmatprep.subr.mxu0 0.0
    %1373 = vmatpush1.msra.mxu0 0.0
    %1374 = vmatprep.subr.mxu0 0.0
    %1375 = vmatpush1.msra.mxu0 0.0
    %1376 = vmatprep.subr.mxu0 0.0
    %1377 = vmatpush1.msra.mxu0 0.0
    %1378 = vmatprep.subr.mxu0 0.0
    %1379 = vmatpush1.msra.mxu0 0.0
    %1380 = vmatprep.subr.mxu0 0.0
    %1381 = vmatpush1.msra.mxu0 0.0
    %1382 = vmatprep.subr.mxu0 0.0
    %1383 = vmatpush1.msra.mxu0 0.0
    %1384 = vmatprep.subr.mxu0 0.0
    %1385 = vmatpush1.msra.mxu0 0.0
    %1386 = vmatprep.subr.mxu0 0.0
    %1387 = vmatpush1.msra.mxu0 0.0
    %1388 = vmatprep.subr.mxu0 0.0
    %1389 = vmatpush1.msra.mxu0 0.0
    %1390 = vmatprep.subr.mxu0 0.0
    %1391 = vmatpush1.msra.mxu0 0.0
    %1392 = vmatprep.subr.mxu0 0.0
    %1393 = vmatpush1.msra.mxu0 0.0
    %1394 = vmatprep.mubr.f32.mxu0 0.0
    %v1395 = vand.u32 %v63, 4294901760
    %1396 = vmatmul.mubr.f32.gmra.mrb[0].mxu0 %v1395
    %v1397 = vpop.f32.mrb[0].mxu0
    %v1398 = vadd.f32 %v1095, %v1397
    %v1399 = vpop.f32.mrb[0].mxu0
    %v1400 = vadd.f32 %v1097, %v1399
    %1401 = vmatprep.mubr.f32.mxu0 0.0
    %v1402 = vand.u32 %v66, 4294901760
    %1403 = vmatmul.mubr.f32.gmra.mrb[0].mxu0 %v1402
    %v1404 = vpop.f32.mrb[0].mxu0
    %v1405 = vadd.f32 %v1104, %v1404
    %v1406 = vpop.f32.mrb[0].mxu0
    %v1407 = vadd.f32 %v1106, %v1406
    %1408 = vmatprep.mubr.f32.mxu0 0.0
    %v1409 = vand.u32 %v69, 4294901760
    %1410 = vmatmul.mubr.f32.gmra.mrb[0].mxu0 %v1409
    %v1411 = vpop.f32.mrb[0].mxu0
    %v1412 = vadd.f32 %v1113, %v1411
    %v1413 = vpop.f32.mrb[0].mxu0
    %v1414 = vadd.f32 %v1115, %v1413
    %1415 = vmatprep.mubr.f32.mxu0 0.0
    %v1416 = vand.u32 %v72, 4294901760
    %1417 = vmatmul.mubr.f32.gmra.mrb[0].mxu0 %v1416
    %v1418 = vpop.f32.mrb[0].mxu0
    %v1419 = vadd.f32 %v1122, %v1418
    %v1420 = vpop.f32.mrb[0].mxu0
    %v1421 = vadd.f32 %v1124, %v1420
    %1422 = vmatprep.mubr.f32.mxu0 0.0
    %v1423 = vand.u32 %v75, 4294901760
    %1424 = vmatmul.mubr.f32.gmra.mrb[0].mxu0 %v1423
    %v1425 = vpop.f32.mrb[0].mxu0
    %v1426 = vadd.f32 %v1131, %v1425
    %v1427 = vpop.f32.mrb[0].mxu0
    %v1428 = vadd.f32 %v1133, %v1427
    %1429 = vmatprep.mubr.f32.mxu0 0.0
    %v1430 = vand.u32 %v78, 4294901760
    %1431 = vmatmul.mubr.f32.gmra.mrb[0].mxu0 %v1430
    %v1432 = vpop.f32.mrb[0].mxu0
    %v1433 = vadd.f32 %v1140, %v1432
    %v1434 = vpop.f32.mrb[0].mxu0
    %v1435 = vadd.f32 %v1142, %v1434
    %1436 = vmatprep.mubr.f32.mxu0 0.0
    %v1437 = vand.u32 %v81, 4294901760
    %1438 = vmatmul.mubr.f32.gmra.mrb[0].mxu0 %v1437
    %v1439 = vpop.f32.mrb[0].mxu0
    %v1440 = vadd.f32 %v1149, %v1439
    %v1441 = vpop.f32.mrb[0].mxu0
    %v1442 = vadd.f32 %v1151, %v1441
    %1443 = vmatprep.mubr.f32.mxu0 0.0
    %v1444 = vand.u32 %v84, 4294901760
    %1445 = vmatmul.mubr.f32.gmra.mrb[0].mxu0 %v1444
    %v1446 = vpop.f32.mrb[0].mxu0
    %v1447 = vadd.f32 %v1158, %v1446
    %v1448 = vpop.f32.mrb[0].mxu0
    %v1449 = vadd.f32 %v1160, %v1448
    %1450 = vmatprep.mubr.f32.mxu0 0.0
    %v1451 = vand.u32 %v87, 4294901760
    %1452 = vmatmul.mubr.f32.gmra.mrb[0].mxu0 %v1451
    %v1453 = vpop.f32.mrb[0].mxu0
    %v1454 = vadd.f32 %v1167, %v1453
    %v1455 = vpop.f32.mrb[0].mxu0
    %v1456 = vadd.f32 %v1169, %v1455
    %1457 = vmatprep.mubr.f32.mxu0 0.0
    %v1458 = vand.u32 %v90, 4294901760
    %1459 = vmatmul.mubr.f32.gmra.mrb[0].mxu0 %v1458
    %v1460 = vpop.f32.mrb[0].mxu0
    %v1461 = vadd.f32 %v1176, %v1460
    %v1462 = vpop.f32.mrb[0].mxu0
    %v1463 = vadd.f32 %v1178, %v1462
    %1464 = vmatprep.mubr.f32.mxu0 0.0
    %v1465 = vand.u32 %v93, 4294901760
    %1466 = vmatmul.mubr.f32.gmra.mrb[0].mxu0 %v1465
    %v1467 = vpop.f32.mrb[0].mxu0
    %v1468 = vadd.f32 %v1185, %v1467
    %v1469 = vpop.f32.mrb[0].mxu0
    %v1470 = vadd.f32 %v1187, %v1469
    %1471 = vmatprep.mubr.f32.mxu0 0.0
    %v1472 = vand.u32 %v96, 4294901760
    %1473 = vmatmul.mubr.f32.gmra.mrb[0].mxu0 %v1472
    %v1474 = vpop.f32.mrb[0].mxu0
    %v1475 = vadd.f32 %v1194, %v1474
    %v1476 = vpop.f32.mrb[0].mxu0
    %v1477 = vadd.f32 %v1196, %v1476
    %1478 = vmatprep.mubr.f32.mxu0 0.0
    %v1479 = vand.u32 %v99, 4294901760
    %1480 = vmatmul.mubr.f32.gmra.mrb[0].mxu0 %v1479
    %v1481 = vpop.f32.mrb[0].mxu0
    %v1482 = vadd.f32 %v1203, %v1481
    %v1483 = vpop.f32.mrb[0].mxu0
    %v1484 = vadd.f32 %v1205, %v1483
    %1485 = vmatprep.mubr.f32.mxu0 0.0
    %v1486 = vand.u32 %v102, 4294901760
    %1487 = vmatmul.mubr.f32.gmra.mrb[0].mxu0 %v1486
    %v1488 = vpop.f32.mrb[0].mxu0
    %v1489 = vadd.f32 %v1212, %v1488
    %v1490 = vpop.f32.mrb[0].mxu0
    %v1491 = vadd.f32 %v1214, %v1490
    %1492 = vmatprep.mubr.f32.mxu0 0.0
    %v1493 = vand.u32 %v105, 4294901760
    %1494 = vmatmul.mubr.f32.gmra.mrb[0].mxu0 %v1493
    %v1495 = vpop.f32.mrb[0].mxu0
    %v1496 = vadd.f32 %v1221, %v1495
    %v1497 = vpop.f32.mrb[0].mxu0
    %v1498 = vadd.f32 %v1223, %v1497
    %1499 = vmatprep.mubr.f32.mxu0 0.0
    %v1500 = vand.u32 %v108, 4294901760
    %1501 = vmatmul.mubr.f32.gmra.mrb[0].mxu0 %v1500
    %v1502 = vpop.f32.mrb[0].mxu0
    %v1503 = vadd.f32 %v1230, %v1502
    %v1504 = vpop.f32.mrb[0].mxu0
    %v1505 = vadd.f32 %v1232, %v1504
    %1506 = vmatprep.mubr.f32.mxu0 0.0
    %v1507 = vand.u32 %v111, 4294901760
    %1508 = vmatmul.mubr.f32.gmra.mrb[0].mxu0 %v1507
    %v1509 = vpop.f32.mrb[0].mxu0
    %v1510 = vadd.f32 %v1239, %v1509
    %v1511 = vpop.f32.mrb[0].mxu0
    %v1512 = vadd.f32 %v1241, %v1511
    %1513 = vmatprep.mubr.f32.mxu0 0.0
    %v1514 = vand.u32 %v114, 4294901760
    %1515 = vmatmul.mubr.f32.gmra.mrb[0].mxu0 %v1514
    %v1516 = vpop.f32.mrb[0].mxu0
    %v1517 = vadd.f32 %v1248, %v1516
    %v1518 = vpop.f32.mrb[0].mxu0
    %v1519 = vadd.f32 %v1250, %v1518
    %1520 = vmatprep.mubr.f32.mxu0 0.0
    %v1521 = vand.u32 %v117, 4294901760
    %1522 = vmatmul.mubr.f32.gmra.mrb[0].mxu0 %v1521
    %v1523 = vpop.f32.mrb[0].mxu0
    %v1524 = vadd.f32 %v1257, %v1523
    %v1525 = vpop.f32.mrb[0].mxu0
    %v1526 = vadd.f32 %v1259, %v1525
    %1527 = vmatprep.mubr.f32.mxu0 0.0
    %v1528 = vand.u32 %v120, 4294901760
    %1529 = vmatmul.mubr.f32.gmra.mrb[0].mxu0 %v1528
    %v1530 = vpop.f32.mrb[0].mxu0
    %v1531 = vadd.f32 %v1266, %v1530
    %v1532 = vpop.f32.mrb[0].mxu0
    %v1533 = vadd.f32 %v1268, %v1532
    %1534 = vmatprep.mubr.f32.mxu0 0.0
    %v1535 = vand.u32 %v123, 4294901760
    %1536 = vmatmul.mubr.f32.gmra.mrb[0].mxu0 %v1535
    %v1537 = vpop.f32.mrb[0].mxu0
    %v1538 = vadd.f32 %v1275, %v1537
    %v1539 = vpop.f32.mrb[0].mxu0
    %v1540 = vadd.f32 %v1277, %v1539
    %1541 = vmatprep.mubr.f32.mxu0 0.0
    %v1542 = vand.u32 %v126, 4294901760
    %1543 = vmatmul.mubr.f32.gmra.mrb[0].mxu0 %v1542
    %v1544 = vpop.f32.mrb[0].mxu0
    %v1545 = vadd.f32 %v1284, %v1544
    %v1546 = vpop.f32.mrb[0].mxu0
    %v1547 = vadd.f32 %v1286, %v1546
    %1548 = vmatprep.mubr.f32.mxu0 0.0
    %v1549 = vand.u32 %v129, 4294901760
    %1550 = vmatmul.mubr.f32.gmra.mrb[0].mxu0 %v1549
    %v1551 = vpop.f32.mrb[0].mxu0
    %v1552 = vadd.f32 %v1293, %v1551
    %v1553 = vpop.f32.mrb[0].mxu0
    %v1554 = vadd.f32 %v1295, %v1553
    %1555 = vmatprep.mubr.f32.mxu0 0.0
    %v1556 = vand.u32 %v132, 4294901760
    %1557 = vmatmul.mubr.f32.gmra.mrb[0].mxu0 %v1556
    %v1558 = vpop.f32.mrb[0].mxu0
    %v1559 = vadd.f32 %v1302, %v1558
    %v1560 = vpop.f32.mrb[0].mxu0
    %v1561 = vadd.f32 %v1304, %v1560
    %1562 = vdwg.mxu0
    %v1563 = vand.u32 %v54, 4294901760
    %1564 = vmatprep.subr.mxu0 %v1563
    %v1565 = vand.u32 %v53, 4294901760
    %1566 = vmatpush1.msra.mxu0 %v1565
    %v1567 = vand.u32 %v56, 4294901760
    %1568 = vmatprep.subr.mxu0 %v1567
    %v1569 = vand.u32 %v55, 4294901760
    %1570 = vmatpush1.msra.mxu0 %v1569
    %v1571 = vand.u32 %v58, 4294901760
    %1572 = vmatprep.subr.mxu0 %v1571
    %v1573 = vand.u32 %v57, 4294901760
    %1574 = vmatpush1.msra.mxu0 %v1573
    %v1575 = vand.u32 %v60, 4294901760
    %1576 = vmatprep.subr.mxu0 %v1575
    %v1577 = vand.u32 %v59, 4294901760
    %1578 = vmatpush1.msra.mxu0 %v1577
    %1579 = vmatprep.subr.mxu0 0.0
    %1580 = vmatpush1.msra.mxu0 0.0
    %1581 = vmatprep.subr.mxu0 0.0
    %1582 = vmatpush1.msra.mxu0 0.0
    %1583 = vmatprep.subr.mxu0 0.0
    %1584 = vmatpush1.msra.mxu0 0.0
    %1585 = vmatprep.subr.mxu0 0.0
    %1586 = vmatpush1.msra.mxu0 0.0
    %1587 = vmatprep.subr.mxu0 0.0
    %1588 = vmatpush1.msra.mxu0 0.0
    %1589 = vmatprep.subr.mxu0 0.0
    %1590 = vmatpush1.msra.mxu0 0.0
    %1591 = vmatprep.subr.mxu0 0.0
    %1592 = vmatpush1.msra.mxu0 0.0
    %1593 = vmatprep.subr.mxu0 0.0
    %1594 = vmatpush1.msra.mxu0 0.0
    %1595 = vmatprep.subr.mxu0 0.0
    %1596 = vmatpush1.msra.mxu0 0.0
    %1597 = vmatprep.subr.mxu0 0.0
    %1598 = vmatpush1.msra.mxu0 0.0
    %1599 = vmatprep.subr.mxu0 0.0
    %1600 = vmatpush1.msra.mxu0 0.0
    %1601 = vmatprep.subr.mxu0 0.0
    %1602 = vmatpush1.msra.mxu0 0.0
    %1603 = vmatprep.subr.mxu0 0.0
    %1604 = vmatpush1.msra.mxu0 0.0
    %1605 = vmatprep.subr.mxu0 0.0
    %1606 = vmatpush1.msra.mxu0 0.0
    %1607 = vmatprep.subr.mxu0 0.0
    %1608 = vmatpush1.msra.mxu0 0.0
    %1609 = vmatprep.subr.mxu0 0.0
    %1610 = vmatpush1.msra.mxu0 0.0
    %1611 = vmatprep.subr.mxu0 0.0
    %1612 = vmatpush1.msra.mxu0 0.0
    %1613 = vmatprep.subr.mxu0 0.0
    %1614 = vmatpush1.msra.mxu0 0.0
    %1615 = vmatprep.subr.mxu0 0.0
    %1616 = vmatpush1.msra.mxu0 0.0
    %1617 = vmatprep.subr.mxu0 0.0
    %1618 = vmatpush1.msra.mxu0 0.0
    %1619 = vmatprep.subr.mxu0 0.0
    %1620 = vmatpush1.msra.mxu0 0.0
    %1621 = vmatprep.subr.mxu0 0.0
    %1622 = vmatpush1.msra.mxu0 0.0
    %1623 = vmatprep.subr.mxu0 0.0
    %1624 = vmatpush1.msra.mxu0 0.0
    %1625 = vmatprep.subr.mxu0 0.0
    %1626 = vmatpush1.msra.mxu0 0.0
    %1627 = vmatprep.subr.mxu0 0.0
    %1628 = vmatpush1.msra.mxu0 0.0
    %1629 = vmatprep.subr.mxu0 0.0
    %1630 = vmatpush1.msra.mxu0 0.0
    %1631 = vmatprep.subr.mxu0 0.0
    %1632 = vmatpush1.msra.mxu0 0.0
    %1633 = vmatprep.subr.mxu0 0.0
    %1634 = vmatpush1.msra.mxu0 0.0
    %1635 = vmatprep.mubr.f32.mxu0 0.0
    %v1636 = vand.u32 %v63, 4294901760
    %1637 = vmatmul.mubr.f32.gmra.mrb[0].mxu0 %v1636
    %v1638 = vpop.f32.mrb[0].mxu0
    %v1639 = vadd.f32 %v1398, %v1638
    %v1640 = vpop.f32.mrb[0].mxu0
    %v1641 = vadd.f32 %v1400, %v1640
    %1642 = vmatprep.mubr.f32.mxu0 0.0
    %v1643 = vand.u32 %v66, 4294901760
    %1644 = vmatmul.mubr.f32.gmra.mrb[0].mxu0 %v1643
    %v1645 = vpop.f32.mrb[0].mxu0
    %v1646 = vadd.f32 %v1405, %v1645
    %v1647 = vpop.f32.mrb[0].mxu0
    %v1648 = vadd.f32 %v1407, %v1647
    %1649 = vmatprep.mubr.f32.mxu0 0.0
    %v1650 = vand.u32 %v69, 4294901760
    %1651 = vmatmul.mubr.f32.gmra.mrb[0].mxu0 %v1650
    %v1652 = vpop.f32.mrb[0].mxu0
    %v1653 = vadd.f32 %v1412, %v1652
    %v1654 = vpop.f32.mrb[0].mxu0
    %v1655 = vadd.f32 %v1414, %v1654
    %1656 = vmatprep.mubr.f32.mxu0 0.0
    %v1657 = vand.u32 %v72, 4294901760
    %1658 = vmatmul.mubr.f32.gmra.mrb[0].mxu0 %v1657
    %v1659 = vpop.f32.mrb[0].mxu0
    %v1660 = vadd.f32 %v1419, %v1659
    %v1661 = vpop.f32.mrb[0].mxu0
    %v1662 = vadd.f32 %v1421, %v1661
    %1663 = vmatprep.mubr.f32.mxu0 0.0
    %v1664 = vand.u32 %v75, 4294901760
    %1665 = vmatmul.mubr.f32.gmra.mrb[0].mxu0 %v1664
    %v1666 = vpop.f32.mrb[0].mxu0
    %v1667 = vadd.f32 %v1426, %v1666
    %v1668 = vpop.f32.mrb[0].mxu0
    %v1669 = vadd.f32 %v1428, %v1668
    %1670 = vmatprep.mubr.f32.mxu0 0.0
    %v1671 = vand.u32 %v78, 4294901760
    %1672 = vmatmul.mubr.f32.gmra.mrb[0].mxu0 %v1671
    %v1673 = vpop.f32.mrb[0].mxu0
    %v1674 = vadd.f32 %v1433, %v1673
    %v1675 = vpop.f32.mrb[0].mxu0
    %v1676 = vadd.f32 %v1435, %v1675
    %1677 = vmatprep.mubr.f32.mxu0 0.0
    %v1678 = vand.u32 %v81, 4294901760
    %1679 = vmatmul.mubr.f32.gmra.mrb[0].mxu0 %v1678
    %v1680 = vpop.f32.mrb[0].mxu0
    %v1681 = vadd.f32 %v1440, %v1680
    %v1682 = vpop.f32.mrb[0].mxu0
    %v1683 = vadd.f32 %v1442, %v1682
    %1684 = vmatprep.mubr.f32.mxu0 0.0
    %v1685 = vand.u32 %v84, 4294901760
    %1686 = vmatmul.mubr.f32.gmra.mrb[0].mxu0 %v1685
    %v1687 = vpop.f32.mrb[0].mxu0
    %v1688 = vadd.f32 %v1447, %v1687
    %v1689 = vpop.f32.mrb[0].mxu0
    %v1690 = vadd.f32 %v1449, %v1689
    %1691 = vmatprep.mubr.f32.mxu0 0.0
    %v1692 = vand.u32 %v87, 4294901760
    %1693 = vmatmul.mubr.f32.gmra.mrb[0].mxu0 %v1692
    %v1694 = vpop.f32.mrb[0].mxu0
    %v1695 = vadd.f32 %v1454, %v1694
    %v1696 = vpop.f32.mrb[0].mxu0
    %v1697 = vadd.f32 %v1456, %v1696
    %1698 = vmatprep.mubr.f32.mxu0 0.0
    %v1699 = vand.u32 %v90, 4294901760
    %1700 = vmatmul.mubr.f32.gmra.mrb[0].mxu0 %v1699
    %v1701 = vpop.f32.mrb[0].mxu0
    %v1702 = vadd.f32 %v1461, %v1701
    %v1703 = vpop.f32.mrb[0].mxu0
    %v1704 = vadd.f32 %v1463, %v1703
    %1705 = vmatprep.mubr.f32.mxu0 0.0
    %v1706 = vand.u32 %v93, 4294901760
    %1707 = vmatmul.mubr.f32.gmra.mrb[0].mxu0 %v1706
    %v1708 = vpop.f32.mrb[0].mxu0
    %v1709 = vadd.f32 %v1468, %v1708
    %v1710 = vpop.f32.mrb[0].mxu0
    %v1711 = vadd.f32 %v1470, %v1710
    %1712 = vmatprep.mubr.f32.mxu0 0.0
    %v1713 = vand.u32 %v96, 4294901760
    %1714 = vmatmul.mubr.f32.gmra.mrb[0].mxu0 %v1713
    %v1715 = vpop.f32.mrb[0].mxu0
    %v1716 = vadd.f32 %v1475, %v1715
    %v1717 = vpop.f32.mrb[0].mxu0
    %v1718 = vadd.f32 %v1477, %v1717
    %1719 = vmatprep.mubr.f32.mxu0 0.0
    %v1720 = vand.u32 %v99, 4294901760
    %1721 = vmatmul.mubr.f32.gmra.mrb[0].mxu0 %v1720
    %v1722 = vpop.f32.mrb[0].mxu0
    %v1723 = vadd.f32 %v1482, %v1722
    %v1724 = vpop.f32.mrb[0].mxu0
    %v1725 = vadd.f32 %v1484, %v1724
    %1726 = vmatprep.mubr.f32.mxu0 0.0
    %v1727 = vand.u32 %v102, 4294901760
    %1728 = vmatmul.mubr.f32.gmra.mrb[0].mxu0 %v1727
    %v1729 = vpop.f32.mrb[0].mxu0
    %v1730 = vadd.f32 %v1489, %v1729
    %v1731 = vpop.f32.mrb[0].mxu0
    %v1732 = vadd.f32 %v1491, %v1731
    %1733 = vmatprep.mubr.f32.mxu0 0.0
    %v1734 = vand.u32 %v105, 4294901760
    %1735 = vmatmul.mubr.f32.gmra.mrb[0].mxu0 %v1734
    %v1736 = vpop.f32.mrb[0].mxu0
    %v1737 = vadd.f32 %v1496, %v1736
    %v1738 = vpop.f32.mrb[0].mxu0
    %v1739 = vadd.f32 %v1498, %v1738
    %1740 = vmatprep.mubr.f32.mxu0 0.0
    %v1741 = vand.u32 %v108, 4294901760
    %1742 = vmatmul.mubr.f32.gmra.mrb[0].mxu0 %v1741
    %v1743 = vpop.f32.mrb[0].mxu0
    %v1744 = vadd.f32 %v1503, %v1743
    %v1745 = vpop.f32.mrb[0].mxu0
    %v1746 = vadd.f32 %v1505, %v1745
    %1747 = vmatprep.mubr.f32.mxu0 0.0
    %v1748 = vand.u32 %v111, 4294901760
    %1749 = vmatmul.mubr.f32.gmra.mrb[0].mxu0 %v1748
    %v1750 = vpop.f32.mrb[0].mxu0
    %v1751 = vadd.f32 %v1510, %v1750
    %v1752 = vpop.f32.mrb[0].mxu0
    %v1753 = vadd.f32 %v1512, %v1752
    %1754 = vmatprep.mubr.f32.mxu0 0.0
    %v1755 = vand.u32 %v114, 4294901760
    %1756 = vmatmul.mubr.f32.gmra.mrb[0].mxu0 %v1755
    %v1757 = vpop.f32.mrb[0].mxu0
    %v1758 = vadd.f32 %v1517, %v1757
    %v1759 = vpop.f32.mrb[0].mxu0
    %v1760 = vadd.f32 %v1519, %v1759
    %1761 = vmatprep.mubr.f32.mxu0 0.0
    %v1762 = vand.u32 %v117, 4294901760
    %1763 = vmatmul.mubr.f32.gmra.mrb[0].mxu0 %v1762
    %v1764 = vpop.f32.mrb[0].mxu0
    %v1765 = vadd.f32 %v1524, %v1764
    %v1766 = vpop.f32.mrb[0].mxu0
    %v1767 = vadd.f32 %v1526, %v1766
    %1768 = vmatprep.mubr.f32.mxu0 0.0
    %v1769 = vand.u32 %v120, 4294901760
    %1770 = vmatmul.mubr.f32.gmra.mrb[0].mxu0 %v1769
    %v1771 = vpop.f32.mrb[0].mxu0
    %v1772 = vadd.f32 %v1531, %v1771
    %v1773 = vpop.f32.mrb[0].mxu0
    %v1774 = vadd.f32 %v1533, %v1773
    %1775 = vmatprep.mubr.f32.mxu0 0.0
    %v1776 = vand.u32 %v123, 4294901760
    %1777 = vmatmul.mubr.f32.gmra.mrb[0].mxu0 %v1776
    %v1778 = vpop.f32.mrb[0].mxu0
    %v1779 = vadd.f32 %v1538, %v1778
    %v1780 = vpop.f32.mrb[0].mxu0
    %v1781 = vadd.f32 %v1540, %v1780
    %1782 = vmatprep.mubr.f32.mxu0 0.0
    %v1783 = vand.u32 %v126, 4294901760
    %1784 = vmatmul.mubr.f32.gmra.mrb[0].mxu0 %v1783
    %v1785 = vpop.f32.mrb[0].mxu0
    %v1786 = vadd.f32 %v1545, %v1785
    %v1787 = vpop.f32.mrb[0].mxu0
    %v1788 = vadd.f32 %v1547, %v1787
    %1789 = vmatprep.mubr.f32.mxu0 0.0
    %v1790 = vand.u32 %v129, 4294901760
    %1791 = vmatmul.mubr.f32.gmra.mrb[0].mxu0 %v1790
    %v1792 = vpop.f32.mrb[0].mxu0
    %v1793 = vadd.f32 %v1552, %v1792
    %v1794 = vpop.f32.mrb[0].mxu0
    %v1795 = vadd.f32 %v1554, %v1794
    %1796 = vmatprep.mubr.f32.mxu0 0.0
    %v1797 = vand.u32 %v132, 4294901760
    %1798 = vmatmul.mubr.f32.gmra.mrb[0].mxu0 %v1797
    %v1799 = vpop.f32.mrb[0].mxu0
    %v1800 = vadd.f32 %v1559, %v1799
    %v1801 = vpop.f32.mrb[0].mxu0
    %v1802 = vadd.f32 %v1561, %v1801
    %1803 = vdwg.mxu0
    %v1804 = vld [vmem:[#allocation2] sm:$0xff]
    %v1805 = vld [vmem:[#allocation2 + $0x8] sm:$0xff]
    %v1806 = vld [vmem:[#allocation2 + $0x10] sm:$0xff]
    %v1807 = vld [vmem:[#allocation2 + $0x18] sm:$0xff]
    %v1808 = vld [vmem:[#allocation2 + $0x20] sm:$0xff]
    %v1809 = vld [vmem:[#allocation2 + $0x28] sm:$0xff]
    %v1810 = vld [vmem:[#allocation2 + $0x30] sm:$0xff]
    %v1811 = vld [vmem:[#allocation2 + $0x38] sm:$0xff]
    %v1812 = vld [vmem:[#allocation2 + $0x40] sm:$0xff]
    %v1813 = vld [vmem:[#allocation2 + $0x48] sm:$0xff]
    %v1814 = vld [vmem:[#allocation2 + $0x50] sm:$0xff]
    %v1815 = vld [vmem:[#allocation2 + $0x58] sm:$0xff]
    %v1816 = vld [vmem:[#allocation2 + $0x60] sm:$0xff]
    %v1817 = vld [vmem:[#allocation2 + $0x68] sm:$0xff]
    %v1818 = vld [vmem:[#allocation2 + $0x70] sm:$0xff]
    %v1819 = vld [vmem:[#allocation2 + $0x78] sm:$0xff]
    %v1820 = vld [vmem:[#allocation2 + $0x80] sm:$0xff]
    %v1821 = vld [vmem:[#allocation2 + $0x88] sm:$0xff]
    %v1822 = vld [vmem:[#allocation2 + $0x90] sm:$0xff]
    %v1823 = vld [vmem:[#allocation2 + $0x98] sm:$0xff]
    %v1824 = vld [vmem:[#allocation2 + $0xa0] sm:$0xff]
    %v1825 = vld [vmem:[#allocation2 + $0xa8] sm:$0xff]
    %v1826 = vld [vmem:[#allocation2 + $0xb0] sm:$0xff]
    %v1827 = vld [vmem:[#allocation2 + $0xb8] sm:$0xff]
    %v1828 = vld [vmem:[#allocation2 + $0xc0] sm:$0xff]
    %v1829 = vld [vmem:[#allocation2 + $0xc8] sm:$0xff]
    %v1830 = vld [vmem:[#allocation2 + $0xd0] sm:$0xff]
    %v1831 = vld [vmem:[#allocation2 + $0xd8] sm:$0xff]
    %v1832 = vld [vmem:[#allocation2 + $0xe0] sm:$0xff]
    %v1833 = vld [vmem:[#allocation2 + $0xe8] sm:$0xff]
    %v1834 = vld [vmem:[#allocation2 + $0xf0] sm:$0xff]
    %v1835 = vld [vmem:[#allocation2 + $0xf8] sm:$0xff]
    %v1836 = vld [vmem:[#allocation2 + $0x100] sm:$0xff]
    %v1837 = vld [vmem:[#allocation2 + $0x108] sm:$0xff]
    %v1838 = vld [vmem:[#allocation2 + $0x110] sm:$0xff]
    %v1839 = vld [vmem:[#allocation2 + $0x118] sm:$0xff]
    %v1840 = vld [vmem:[#allocation2 + $0x120] sm:$0xff]
    %v1841 = vld [vmem:[#allocation2 + $0x128] sm:$0xff]
    %v1842 = vld [vmem:[#allocation2 + $0x130] sm:$0xff]
    %v1843 = vld [vmem:[#allocation2 + $0x138] sm:$0xff]
    %v1844 = vld [vmem:[#allocation2 + $0x140] sm:$0xff]
    %v1845 = vld [vmem:[#allocation2 + $0x148] sm:$0xff]
    %v1846 = vld [vmem:[#allocation2 + $0x150] sm:$0xff]
    %v1847 = vld [vmem:[#allocation2 + $0x158] sm:$0xff]
    %v1848 = vld [vmem:[#allocation2 + $0x160] sm:$0xff]
    %v1849 = vld [vmem:[#allocation2 + $0x168] sm:$0xff]
    %v1850 = vld [vmem:[#allocation2 + $0x170] sm:$0xff]
    %v1851 = vld [vmem:[#allocation2 + $0x178] sm:$0xff]
    %v1852 = vld [vmem:[#allocation2 + $0x180] sm:$0xff]
    %v1853 = vld [vmem:[#allocation2 + $0x188] sm:$0xff]
    %v1854 = vld [vmem:[#allocation2 + $0x190] sm:$0xff]
    %v1855 = vld [vmem:[#allocation2 + $0x198] sm:$0xff]
    %v1856 = vld [vmem:[#allocation2 + $0x1a0] sm:$0xff]
    %v1857 = vld [vmem:[#allocation2 + $0x1a8] sm:$0xff]
    %v1858 = vld [vmem:[#allocation2 + $0x1b0] sm:$0xff]
    %v1859 = vld [vmem:[#allocation2 + $0x1b8] sm:$0xff]
    %v1860 = vld [vmem:[#allocation2 + $0x1c0] sm:$0xff]
    %v1861 = vld [vmem:[#allocation2 + $0x1c8] sm:$0xff]
    %v1862 = vld [vmem:[#allocation2 + $0x1d0] sm:$0xff]
    %v1863 = vld [vmem:[#allocation2 + $0x1d8] sm:$0xff]
    %v1864 = vld [vmem:[#allocation2 + $0x1e0] sm:$0xff]
    %v1865 = vld [vmem:[#allocation2 + $0x1e8] sm:$0xff]
    %v1866 = vld [vmem:[#allocation2 + $0x1f0] sm:$0xff]
    %v1867 = vld [vmem:[#allocation2 + $0x1f8] sm:$0xff]
    %v1868 = vmul.f32 %v1639, %v1804
    %v1869 = vmul.f32 %v1641, %v1805
    %v1870 = vmul.f32 %v1646, %v1806
    %v1871 = vmul.f32 %v1648, %v1807
    %v1872 = vmul.f32 %v1653, %v1808
    %v1873 = vmul.f32 %v1655, %v1809
    %v1874 = vmul.f32 %v1660, %v1810
    %v1875 = vmul.f32 %v1662, %v1811
    %v1876 = vmul.f32 %v1639, %v1812
    %v1877 = vmul.f32 %v1641, %v1813
    %v1878 = vmul.f32 %v1646, %v1814
    %v1879 = vmul.f32 %v1648, %v1815
    %v1880 = vmul.f32 %v1653, %v1816
    %v1881 = vmul.f32 %v1655, %v1817
    %v1882 = vmul.f32 %v1660, %v1818
    %v1883 = vmul.f32 %v1662, %v1819
    %v1884 = vmul.f32 %v1639, %v1820
    %v1885 = vmul.f32 %v1641, %v1821
    %v1886 = vmul.f32 %v1646, %v1822
    %v1887 = vmul.f32 %v1648, %v1823
    %v1888 = vmul.f32 %v1653, %v1824
    %v1889 = vmul.f32 %v1655, %v1825
    %v1890 = vmul.f32 %v1660, %v1826
    %v1891 = vmul.f32 %v1662, %v1827
    %v1892 = vmul.f32 %v1639, %v1828
    %v1893 = vmul.f32 %v1641, %v1829
    %v1894 = vmul.f32 %v1646, %v1830
    %v1895 = vmul.f32 %v1648, %v1831
    %v1896 = vmul.f32 %v1653, %v1832
    %v1897 = vmul.f32 %v1655, %v1833
    %v1898 = vmul.f32 %v1660, %v1834
    %v1899 = vmul.f32 %v1662, %v1835
    %v1900 = vmul.f32 %v1639, %v1836
    %v1901 = vmul.f32 %v1641, %v1837
    %v1902 = vmul.f32 %v1646, %v1838
    %v1903 = vmul.f32 %v1648, %v1839
    %v1904 = vmul.f32 %v1653, %v1840
    %v1905 = vmul.f32 %v1655, %v1841
    %v1906 = vmul.f32 %v1660, %v1842
    %v1907 = vmul.f32 %v1662, %v1843
    %v1908 = vmul.f32 %v1639, %v1844
    %v1909 = vmul.f32 %v1641, %v1845
    %v1910 = vmul.f32 %v1646, %v1846
    %v1911 = vmul.f32 %v1648, %v1847
    %v1912 = vmul.f32 %v1653, %v1848
    %v1913 = vmul.f32 %v1655, %v1849
    %v1914 = vmul.f32 %v1660, %v1850
    %v1915 = vmul.f32 %v1662, %v1851
    %v1916 = vmul.f32 %v1639, %v1852
    %v1917 = vmul.f32 %v1641, %v1853
    %v1918 = vmul.f32 %v1646, %v1854
    %v1919 = vmul.f32 %v1648, %v1855
    %v1920 = vmul.f32 %v1653, %v1856
    %v1921 = vmul.f32 %v1655, %v1857
    %v1922 = vmul.f32 %v1660, %v1858
    %v1923 = vmul.f32 %v1662, %v1859
    %v1924 = vmul.f32 %v1639, %v1860
    %v1925 = vmul.f32 %v1641, %v1861
    %v1926 = vmul.f32 %v1646, %v1862
    %v1927 = vmul.f32 %v1648, %v1863
    %v1928 = vmul.f32 %v1653, %v1864
    %v1929 = vmul.f32 %v1655, %v1865
    %v1930 = vmul.f32 %v1660, %v1866
    %v1931 = vmul.f32 %v1662, %v1867
    %v1932 = vmul.f32 %v1667, %v1804
    %v1933 = vmul.f32 %v1669, %v1805
    %v1934 = vmul.f32 %v1674, %v1806
    %v1935 = vmul.f32 %v1676, %v1807
    %v1936 = vmul.f32 %v1681, %v1808
    %v1937 = vmul.f32 %v1683, %v1809
    %v1938 = vmul.f32 %v1688, %v1810
    %v1939 = vmul.f32 %v1690, %v1811
    %v1940 = vmul.f32 %v1667, %v1812
    %v1941 = vmul.f32 %v1669, %v1813
    %v1942 = vmul.f32 %v1674, %v1814
    %v1943 = vmul.f32 %v1676, %v1815
    %v1944 = vmul.f32 %v1681, %v1816
    %v1945 = vmul.f32 %v1683, %v1817
    %v1946 = vmul.f32 %v1688, %v1818
    %v1947 = vmul.f32 %v1690, %v1819
    %v1948 = vmul.f32 %v1667, %v1820
    %v1949 = vmul.f32 %v1669, %v1821
    %v1950 = vmul.f32 %v1674, %v1822
    %v1951 = vmul.f32 %v1676, %v1823
    %v1952 = vmul.f32 %v1681, %v1824
    %v1953 = vmul.f32 %v1683, %v1825
    %v1954 = vmul.f32 %v1688, %v1826
    %v1955 = vmul.f32 %v1690, %v1827
    %v1956 = vmul.f32 %v1667, %v1828
    %v1957 = vmul.f32 %v1669, %v1829
    %v1958 = vmul.f32 %v1674, %v1830
    %v1959 = vmul.f32 %v1676, %v1831
    %v1960 = vmul.f32 %v1681, %v1832
    %v1961 = vmul.f32 %v1683, %v1833
    %v1962 = vmul.f32 %v1688, %v1834
    %v1963 = vmul.f32 %v1690, %v1835
    %v1964 = vmul.f32 %v1667, %v1836
    %v1965 = vmul.f32 %v1669, %v1837
    %v1966 = vmul.f32 %v1674, %v1838
    %v1967 = vmul.f32 %v1676, %v1839
    %v1968 = vmul.f32 %v1681, %v1840
    %v1969 = vmul.f32 %v1683, %v1841
    %v1970 = vmul.f32 %v1688, %v1842
    %v1971 = vmul.f32 %v1690, %v1843
    %v1972 = vmul.f32 %v1667, %v1844
    %v1973 = vmul.f32 %v1669, %v1845
    %v1974 = vmul.f32 %v1674, %v1846
    %v1975 = vmul.f32 %v1676, %v1847
    %v1976 = vmul.f32 %v1681, %v1848
    %v1977 = vmul.f32 %v1683, %v1849
    %v1978 = vmul.f32 %v1688, %v1850
    %v1979 = vmul.f32 %v1690, %v1851
    %v1980 = vmul.f32 %v1667, %v1852
    %v1981 = vmul.f32 %v1669, %v1853
    %v1982 = vmul.f32 %v1674, %v1854
    %v1983 = vmul.f32 %v1676, %v1855
    %v1984 = vmul.f32 %v1681, %v1856
    %v1985 = vmul.f32 %v1683, %v1857
    %v1986 = vmul.f32 %v1688, %v1858
    %v1987 = vmul.f32 %v1690, %v1859
    %v1988 = vmul.f32 %v1667, %v1860
    %v1989 = vmul.f32 %v1669, %v1861
    %v1990 = vmul.f32 %v1674, %v1862
    %v1991 = vmul.f32 %v1676, %v1863
    %v1992 = vmul.f32 %v1681, %v1864
    %v1993 = vmul.f32 %v1683, %v1865
    %v1994 = vmul.f32 %v1688, %v1866
    %v1995 = vmul.f32 %v1690, %v1867
    %v1996 = vmul.f32 %v1695, %v1804
    %v1997 = vmul.f32 %v1697, %v1805
    %v1998 = vmul.f32 %v1702, %v1806
    %v1999 = vmul.f32 %v1704, %v1807
    %v2000 = vmul.f32 %v1709, %v1808
    %v2001 = vmul.f32 %v1711, %v1809
    %v2002 = vmul.f32 %v1716, %v1810
    %v2003 = vmul.f32 %v1718, %v1811
    %v2004 = vmul.f32 %v1695, %v1812
    %v2005 = vmul.f32 %v1697, %v1813
    %v2006 = vmul.f32 %v1702, %v1814
    %v2007 = vmul.f32 %v1704, %v1815
    %v2008 = vmul.f32 %v1709, %v1816
    %v2009 = vmul.f32 %v1711, %v1817
    %v2010 = vmul.f32 %v1716, %v1818
    %v2011 = vmul.f32 %v1718, %v1819
    %v2012 = vmul.f32 %v1695, %v1820
    %v2013 = vmul.f32 %v1697, %v1821
    %v2014 = vmul.f32 %v1702, %v1822
    %v2015 = vmul.f32 %v1704, %v1823
    %v2016 = vmul.f32 %v1709, %v1824
    %v2017 = vmul.f32 %v1711, %v1825
    %v2018 = vmul.f32 %v1716, %v1826
    %v2019 = vmul.f32 %v1718, %v1827
    %v2020 = vmul.f32 %v1695, %v1828
    %v2021 = vmul.f32 %v1697, %v1829
    %v2022 = vmul.f32 %v1702, %v1830
    %v2023 = vmul.f32 %v1704, %v1831
    %v2024 = vmul.f32 %v1709, %v1832
    %v2025 = vmul.f32 %v1711, %v1833
    %v2026 = vmul.f32 %v1716, %v1834
    %v2027 = vmul.f32 %v1718, %v1835
    %v2028 = vmul.f32 %v1695, %v1836
    %v2029 = vmul.f32 %v1697, %v1837
    %v2030 = vmul.f32 %v1702, %v1838
    %v2031 = vmul.f32 %v1704, %v1839
    %v2032 = vmul.f32 %v1709, %v1840
    %v2033 = vmul.f32 %v1711, %v1841
    %v2034 = vmul.f32 %v1716, %v1842
    %v2035 = vmul.f32 %v1718, %v1843
    %v2036 = vmul.f32 %v1695, %v1844
    %v2037 = vmul.f32 %v1697, %v1845
    %v2038 = vmul.f32 %v1702, %v1846
    %v2039 = vmul.f32 %v1704, %v1847
    %v2040 = vmul.f32 %v1709, %v1848
    %v2041 = vmul.f32 %v1711, %v1849
    %v2042 = vmul.f32 %v1716, %v1850
    %v2043 = vmul.f32 %v1718, %v1851
    %v2044 = vmul.f32 %v1695, %v1852
    %v2045 = vmul.f32 %v1697, %v1853
    %v2046 = vmul.f32 %v1702, %v1854
    %v2047 = vmul.f32 %v1704, %v1855
    %v2048 = vmul.f32 %v1709, %v1856
    %v2049 = vmul.f32 %v1711, %v1857
    %v2050 = vmul.f32 %v1716, %v1858
    %v2051 = vmul.f32 %v1718, %v1859
    %v2052 = vmul.f32 %v1695, %v1860
    %v2053 = vmul.f32 %v1697, %v1861
    %v2054 = vmul.f32 %v1702, %v1862
    %v2055 = vmul.f32 %v1704, %v1863
    %v2056 = vmul.f32 %v1709, %v1864
    %v2057 = vmul.f32 %v1711, %v1865
    %v2058 = vmul.f32 %v1716, %v1866
    %v2059 = vmul.f32 %v1718, %v1867
    %v2060 = vmul.f32 %v1723, %v1804
    %v2061 = vmul.f32 %v1725, %v1805
    %v2062 = vmul.f32 %v1730, %v1806
    %v2063 = vmul.f32 %v1732, %v1807
    %v2064 = vmul.f32 %v1737, %v1808
    %v2065 = vmul.f32 %v1739, %v1809
    %v2066 = vmul.f32 %v1744, %v1810
    %v2067 = vmul.f32 %v1746, %v1811
    %v2068 = vmul.f32 %v1723, %v1812
    %v2069 = vmul.f32 %v1725, %v1813
    %v2070 = vmul.f32 %v1730, %v1814
    %v2071 = vmul.f32 %v1732, %v1815
    %v2072 = vmul.f32 %v1737, %v1816
    %v2073 = vmul.f32 %v1739, %v1817
    %v2074 = vmul.f32 %v1744, %v1818
    %v2075 = vmul.f32 %v1746, %v1819
    %v2076 = vmul.f32 %v1723, %v1820
    %v2077 = vmul.f32 %v1725, %v1821
    %v2078 = vmul.f32 %v1730, %v1822
    %v2079 = vmul.f32 %v1732, %v1823
    %v2080 = vmul.f32 %v1737, %v1824
    %v2081 = vmul.f32 %v1739, %v1825
    %v2082 = vmul.f32 %v1744, %v1826
    %v2083 = vmul.f32 %v1746, %v1827
    %v2084 = vmul.f32 %v1723, %v1828
    %v2085 = vmul.f32 %v1725, %v1829
    %v2086 = vmul.f32 %v1730, %v1830
    %v2087 = vmul.f32 %v1732, %v1831
    %v2088 = vmul.f32 %v1737, %v1832
    %v2089 = vmul.f32 %v1739, %v1833
    %v2090 = vmul.f32 %v1744, %v1834
    %v2091 = vmul.f32 %v1746, %v1835
    %v2092 = vmul.f32 %v1723, %v1836
    %v2093 = vmul.f32 %v1725, %v1837
    %v2094 = vmul.f32 %v1730, %v1838
    %v2095 = vmul.f32 %v1732, %v1839
    %v2096 = vmul.f32 %v1737, %v1840
    %v2097 = vmul.f32 %v1739, %v1841
    %v2098 = vmul.f32 %v1744, %v1842
    %v2099 = vmul.f32 %v1746, %v1843
    %v2100 = vmul.f32 %v1723, %v1844
    %v2101 = vmul.f32 %v1725, %v1845
    %v2102 = vmul.f32 %v1730, %v1846
    %v2103 = vmul.f32 %v1732, %v1847
    %v2104 = vmul.f32 %v1737, %v1848
    %v2105 = vmul.f32 %v1739, %v1849
    %v2106 = vmul.f32 %v1744, %v1850
    %v2107 = vmul.f32 %v1746, %v1851
    %v2108 = vmul.f32 %v1723, %v1852
    %v2109 = vmul.f32 %v1725, %v1853
    %v2110 = vmul.f32 %v1730, %v1854
    %v2111 = vmul.f32 %v1732, %v1855
    %v2112 = vmul.f32 %v1737, %v1856
    %v2113 = vmul.f32 %v1739, %v1857
    %v2114 = vmul.f32 %v1744, %v1858
    %v2115 = vmul.f32 %v1746, %v1859
    %v2116 = vmul.f32 %v1723, %v1860
    %v2117 = vmul.f32 %v1725, %v1861
    %v2118 = vmul.f32 %v1730, %v1862
    %v2119 = vmul.f32 %v1732, %v1863
    %v2120 = vmul.f32 %v1737, %v1864
    %v2121 = vmul.f32 %v1739, %v1865
    %v2122 = vmul.f32 %v1744, %v1866
    %v2123 = vmul.f32 %v1746, %v1867
    %v2124 = vmul.f32 %v1751, %v1804
    %v2125 = vmul.f32 %v1753, %v1805
    %v2126 = vmul.f32 %v1758, %v1806
    %v2127 = vmul.f32 %v1760, %v1807
    %v2128 = vmul.f32 %v1765, %v1808
    %v2129 = vmul.f32 %v1767, %v1809
    %v2130 = vmul.f32 %v1772, %v1810
    %v2131 = vmul.f32 %v1774, %v1811
    %v2132 = vmul.f32 %v1751, %v1812
    %v2133 = vmul.f32 %v1753, %v1813
    %v2134 = vmul.f32 %v1758, %v1814
    %v2135 = vmul.f32 %v1760, %v1815
    %v2136 = vmul.f32 %v1765, %v1816
    %v2137 = vmul.f32 %v1767, %v1817
    %v2138 = vmul.f32 %v1772, %v1818
    %v2139 = vmul.f32 %v1774, %v1819
    %v2140 = vmul.f32 %v1751, %v1820
    %v2141 = vmul.f32 %v1753, %v1821
    %v2142 = vmul.f32 %v1758, %v1822
    %v2143 = vmul.f32 %v1760, %v1823
    %v2144 = vmul.f32 %v1765, %v1824
    %v2145 = vmul.f32 %v1767, %v1825
    %v2146 = vmul.f32 %v1772, %v1826
    %v2147 = vmul.f32 %v1774, %v1827
    %v2148 = vmul.f32 %v1751, %v1828
    %v2149 = vmul.f32 %v1753, %v1829
    %v2150 = vmul.f32 %v1758, %v1830
    %v2151 = vmul.f32 %v1760, %v1831
    %v2152 = vmul.f32 %v1765, %v1832
    %v2153 = vmul.f32 %v1767, %v1833
    %v2154 = vmul.f32 %v1772, %v1834
    %v2155 = vmul.f32 %v1774, %v1835
    %v2156 = vmul.f32 %v1751, %v1836
    %v2157 = vmul.f32 %v1753, %v1837
    %v2158 = vmul.f32 %v1758, %v1838
    %v2159 = vmul.f32 %v1760, %v1839
    %v2160 = vmul.f32 %v1765, %v1840
    %v2161 = vmul.f32 %v1767, %v1841
    %v2162 = vmul.f32 %v1772, %v1842
    %v2163 = vmul.f32 %v1774, %v1843
    %v2164 = vmul.f32 %v1751, %v1844
    %v2165 = vmul.f32 %v1753, %v1845
    %v2166 = vmul.f32 %v1758, %v1846
    %v2167 = vmul.f32 %v1760, %v1847
    %v2168 = vmul.f32 %v1765, %v1848
    %v2169 = vmul.f32 %v1767, %v1849
    %v2170 = vmul.f32 %v1772, %v1850
    %v2171 = vmul.f32 %v1774, %v1851
    %v2172 = vmul.f32 %v1751, %v1852
    %v2173 = vmul.f32 %v1753, %v1853
    %v2174 = vmul.f32 %v1758, %v1854
    %v2175 = vmul.f32 %v1760, %v1855
    %v2176 = vmul.f32 %v1765, %v1856
    %v2177 = vmul.f32 %v1767, %v1857
    %v2178 = vmul.f32 %v1772, %v1858
    %v2179 = vmul.f32 %v1774, %v1859
    %v2180 = vmul.f32 %v1751, %v1860
    %v2181 = vmul.f32 %v1753, %v1861
    %v2182 = vmul.f32 %v1758, %v1862
    %v2183 = vmul.f32 %v1760, %v1863
    %v2184 = vmul.f32 %v1765, %v1864
    %v2185 = vmul.f32 %v1767, %v1865
    %v2186 = vmul.f32 %v1772, %v1866
    %v2187 = vmul.f32 %v1774, %v1867
    %v2188 = vmul.f32 %v1779, %v1804
    %v2189 = vmul.f32 %v1781, %v1805
    %v2190 = vmul.f32 %v1786, %v1806
    %v2191 = vmul.f32 %v1788, %v1807
    %v2192 = vmul.f32 %v1793, %v1808
    %v2193 = vmul.f32 %v1795, %v1809
    %v2194 = vmul.f32 %v1800, %v1810
    %v2195 = vmul.f32 %v1802, %v1811
    %v2196 = vmul.f32 %v1779, %v1812
    %v2197 = vmul.f32 %v1781, %v1813
    %v2198 = vmul.f32 %v1786, %v1814
    %v2199 = vmul.f32 %v1788, %v1815
    %v2200 = vmul.f32 %v1793, %v1816
    %v2201 = vmul.f32 %v1795, %v1817
    %v2202 = vmul.f32 %v1800, %v1818
    %v2203 = vmul.f32 %v1802, %v1819
    %v2204 = vmul.f32 %v1779, %v1820
    %v2205 = vmul.f32 %v1781, %v1821
    %v2206 = vmul.f32 %v1786, %v1822
    %v2207 = vmul.f32 %v1788, %v1823
    %v2208 = vmul.f32 %v1793, %v1824
    %v2209 = vmul.f32 %v1795, %v1825
    %v2210 = vmul.f32 %v1800, %v1826
    %v2211 = vmul.f32 %v1802, %v1827
    %v2212 = vmul.f32 %v1779, %v1828
    %v2213 = vmul.f32 %v1781, %v1829
    %v2214 = vmul.f32 %v1786, %v1830
    %v2215 = vmul.f32 %v1788, %v1831
    %v2216 = vmul.f32 %v1793, %v1832
    %v2217 = vmul.f32 %v1795, %v1833
    %v2218 = vmul.f32 %v1800, %v1834
    %v2219 = vmul.f32 %v1802, %v1835
    %v2220 = vmul.f32 %v1779, %v1836
    %v2221 = vmul.f32 %v1781, %v1837
    %v2222 = vmul.f32 %v1786, %v1838
    %v2223 = vmul.f32 %v1788, %v1839
    %v2224 = vmul.f32 %v1793, %v1840
    %v2225 = vmul.f32 %v1795, %v1841
    %v2226 = vmul.f32 %v1800, %v1842
    %v2227 = vmul.f32 %v1802, %v1843
    %v2228 = vmul.f32 %v1779, %v1844
    %v2229 = vmul.f32 %v1781, %v1845
    %v2230 = vmul.f32 %v1786, %v1846
    %v2231 = vmul.f32 %v1788, %v1847
    %v2232 = vmul.f32 %v1793, %v1848
    %v2233 = vmul.f32 %v1795, %v1849
    %v2234 = vmul.f32 %v1800, %v1850
    %v2235 = vmul.f32 %v1802, %v1851
    %v2236 = vmul.f32 %v1779, %v1852
    %v2237 = vmul.f32 %v1781, %v1853
    %v2238 = vmul.f32 %v1786, %v1854
    %v2239 = vmul.f32 %v1788, %v1855
    %v2240 = vmul.f32 %v1793, %v1856
    %v2241 = vmul.f32 %v1795, %v1857
    %v2242 = vmul.f32 %v1800, %v1858
    %v2243 = vmul.f32 %v1802, %v1859
    %v2244 = vmul.f32 %v1779, %v1860
    %v2245 = vmul.f32 %v1781, %v1861
    %v2246 = vmul.f32 %v1786, %v1862
    %v2247 = vmul.f32 %v1788, %v1863
    %v2248 = vmul.f32 %v1793, %v1864
    %v2249 = vmul.f32 %v1795, %v1865
    %v2250 = vmul.f32 %v1800, %v1866
    %v2251 = vmul.f32 %v1802, %v1867
    %v2252 = vadd.f32 %v1868, %v1870
    %v2253 = vadd.f32 %v2252, %v1872
    %v2254 = vadd.f32 %v2253, %v1874
    %v2255 = vrot.slane %v2254, 4
    %v2256 = vadd.f32 %v2254, %v2255
    %v2257 = vrot.slane %v2256, 2
    %v2258 = vadd.f32 %v2256, %v2257
    %v2259 = vrot.slane %v2258, 1
    %v2260 = vadd.f32 %v2258, %v2259
    %v2261 = vadd.f32 %v1869, %v1871
    %v2262 = vadd.f32 %v2261, %v1873
    %v2263 = vadd.f32 %v2262, %v1875
    %v2264 = vrot.slane %v2263, 4
    %v2265 = vadd.f32 %v2263, %v2264
    %v2266 = vrot.slane %v2265, 2
    %v2267 = vadd.f32 %v2265, %v2266
    %v2268 = vrot.slane %v2267, 1
    %v2269 = vadd.f32 %v2267, %v2268
    %v2270 = vadd.f32 %v1876, %v1878
    %v2271 = vadd.f32 %v2270, %v1880
    %v2272 = vadd.f32 %v2271, %v1882
    %v2273 = vrot.slane %v2272, 4
    %v2274 = vadd.f32 %v2272, %v2273
    %v2275 = vrot.slane %v2274, 2
    %v2276 = vadd.f32 %v2274, %v2275
    %v2277 = vrot.slane %v2276, 1
    %v2278 = vadd.f32 %v2276, %v2277
    %v2279 = vadd.f32 %v1877, %v1879
    %v2280 = vadd.f32 %v2279, %v1881
    %v2281 = vadd.f32 %v2280, %v1883
    %v2282 = vrot.slane %v2281, 4
    %v2283 = vadd.f32 %v2281, %v2282
    %v2284 = vrot.slane %v2283, 2
    %v2285 = vadd.f32 %v2283, %v2284
    %v2286 = vrot.slane %v2285, 1
    %v2287 = vadd.f32 %v2285, %v2286
    %v2288 = vadd.f32 %v1884, %v1886
    %v2289 = vadd.f32 %v2288, %v1888
    %v2290 = vadd.f32 %v2289, %v1890
    %v2291 = vrot.slane %v2290, 4
    %v2292 = vadd.f32 %v2290, %v2291
    %v2293 = vrot.slane %v2292, 2
    %v2294 = vadd.f32 %v2292, %v2293
    %v2295 = vrot.slane %v2294, 1
    %v2296 = vadd.f32 %v2294, %v2295
    %v2297 = vadd.f32 %v1885, %v1887
    %v2298 = vadd.f32 %v2297, %v1889
    %v2299 = vadd.f32 %v2298, %v1891
    %v2300 = vrot.slane %v2299, 4
    %v2301 = vadd.f32 %v2299, %v2300
    %v2302 = vrot.slane %v2301, 2
    %v2303 = vadd.f32 %v2301, %v2302
    %v2304 = vrot.slane %v2303, 1
    %v2305 = vadd.f32 %v2303, %v2304
    %v2306 = vadd.f32 %v1892, %v1894
    %v2307 = vadd.f32 %v2306, %v1896
    %v2308 = vadd.f32 %v2307, %v1898
    %v2309 = vrot.slane %v2308, 4
    %v2310 = vadd.f32 %v2308, %v2309
    %v2311 = vrot.slane %v2310, 2
    %v2312 = vadd.f32 %v2310, %v2311
    %v2313 = vrot.slane %v2312, 1
    %v2314 = vadd.f32 %v2312, %v2313
    %v2315 = vadd.f32 %v1893, %v1895
    %v2316 = vadd.f32 %v2315, %v1897
    %v2317 = vadd.f32 %v2316, %v1899
    %v2318 = vrot.slane %v2317, 4
    %v2319 = vadd.f32 %v2317, %v2318
    %v2320 = vrot.slane %v2319, 2
    %v2321 = vadd.f32 %v2319, %v2320
    %v2322 = vrot.slane %v2321, 1
    %v2323 = vadd.f32 %v2321, %v2322
    %v2324 = vadd.f32 %v1900, %v1902
    %v2325 = vadd.f32 %v2324, %v1904
    %v2326 = vadd.f32 %v2325, %v1906
    %v2327 = vrot.slane %v2326, 4
    %v2328 = vadd.f32 %v2326, %v2327
    %v2329 = vrot.slane %v2328, 2
    %v2330 = vadd.f32 %v2328, %v2329
    %v2331 = vrot.slane %v2330, 1
    %v2332 = vadd.f32 %v2330, %v2331
    %v2333 = vadd.f32 %v1901, %v1903
    %v2334 = vadd.f32 %v2333, %v1905
    %v2335 = vadd.f32 %v2334, %v1907
    %v2336 = vrot.slane %v2335, 4
    %v2337 = vadd.f32 %v2335, %v2336
    %v2338 = vrot.slane %v2337, 2
    %v2339 = vadd.f32 %v2337, %v2338
    %v2340 = vrot.slane %v2339, 1
    %v2341 = vadd.f32 %v2339, %v2340
    %v2342 = vadd.f32 %v1908, %v1910
    %v2343 = vadd.f32 %v2342, %v1912
    %v2344 = vadd.f32 %v2343, %v1914
    %v2345 = vrot.slane %v2344, 4
    %v2346 = vadd.f32 %v2344, %v2345
    %v2347 = vrot.slane %v2346, 2
    %v2348 = vadd.f32 %v2346, %v2347
    %v2349 = vrot.slane %v2348, 1
    %v2350 = vadd.f32 %v2348, %v2349
    %v2351 = vadd.f32 %v1909, %v1911
    %v2352 = vadd.f32 %v2351, %v1913
    %v2353 = vadd.f32 %v2352, %v1915
    %v2354 = vrot.slane %v2353, 4
    %v2355 = vadd.f32 %v2353, %v2354
    %v2356 = vrot.slane %v2355, 2
    %v2357 = vadd.f32 %v2355, %v2356
    %v2358 = vrot.slane %v2357, 1
    %v2359 = vadd.f32 %v2357, %v2358
    %v2360 = vadd.f32 %v1916, %v1918
    %v2361 = vadd.f32 %v2360, %v1920
    %v2362 = vadd.f32 %v2361, %v1922
    %v2363 = vrot.slane %v2362, 4
    %v2364 = vadd.f32 %v2362, %v2363
    %v2365 = vrot.slane %v2364, 2
    %v2366 = vadd.f32 %v2364, %v2365
    %v2367 = vrot.slane %v2366, 1
    %v2368 = vadd.f32 %v2366, %v2367
    %v2369 = vadd.f32 %v1917, %v1919
    %v2370 = vadd.f32 %v2369, %v1921
    %v2371 = vadd.f32 %v2370, %v1923
    %v2372 = vrot.slane %v2371, 4
    %v2373 = vadd.f32 %v2371, %v2372
    %v2374 = vrot.slane %v2373, 2
    %v2375 = vadd.f32 %v2373, %v2374
    %v2376 = vrot.slane %v2375, 1
    %v2377 = vadd.f32 %v2375, %v2376
    %v2378 = vadd.f32 %v1924, %v1926
    %v2379 = vadd.f32 %v2378, %v1928
    %v2380 = vadd.f32 %v2379, %v1930
    %v2381 = vrot.slane %v2380, 4
    %v2382 = vadd.f32 %v2380, %v2381
    %v2383 = vrot.slane %v2382, 2
    %v2384 = vadd.f32 %v2382, %v2383
    %v2385 = vrot.slane %v2384, 1
    %v2386 = vadd.f32 %v2384, %v2385
    %v2387 = vadd.f32 %v1925, %v1927
    %v2388 = vadd.f32 %v2387, %v1929
    %v2389 = vadd.f32 %v2388, %v1931
    %v2390 = vrot.slane %v2389, 4
    %v2391 = vadd.f32 %v2389, %v2390
    %v2392 = vrot.slane %v2391, 2
    %v2393 = vadd.f32 %v2391, %v2392
    %v2394 = vrot.slane %v2393, 1
    %v2395 = vadd.f32 %v2393, %v2394
    %v2396 = vadd.f32 %v1932, %v1934
    %v2397 = vadd.f32 %v2396, %v1936
    %v2398 = vadd.f32 %v2397, %v1938
    %v2399 = vrot.slane %v2398, 4
    %v2400 = vadd.f32 %v2398, %v2399
    %v2401 = vrot.slane %v2400, 2
    %v2402 = vadd.f32 %v2400, %v2401
    %v2403 = vrot.slane %v2402, 1
    %v2404 = vadd.f32 %v2402, %v2403
    %v2405 = vadd.f32 %v1933, %v1935
    %v2406 = vadd.f32 %v2405, %v1937
    %v2407 = vadd.f32 %v2406, %v1939
    %v2408 = vrot.slane %v2407, 4
    %v2409 = vadd.f32 %v2407, %v2408
    %v2410 = vrot.slane %v2409, 2
    %v2411 = vadd.f32 %v2409, %v2410
    %v2412 = vrot.slane %v2411, 1
    %v2413 = vadd.f32 %v2411, %v2412
    %v2414 = vadd.f32 %v1940, %v1942
    %v2415 = vadd.f32 %v2414, %v1944
    %v2416 = vadd.f32 %v2415, %v1946
    %v2417 = vrot.slane %v2416, 4
    %v2418 = vadd.f32 %v2416, %v2417
    %v2419 = vrot.slane %v2418, 2
    %v2420 = vadd.f32 %v2418, %v2419
    %v2421 = vrot.slane %v2420, 1
    %v2422 = vadd.f32 %v2420, %v2421
    %v2423 = vadd.f32 %v1941, %v1943
    %v2424 = vadd.f32 %v2423, %v1945
    %v2425 = vadd.f32 %v2424, %v1947
    %v2426 = vrot.slane %v2425, 4
    %v2427 = vadd.f32 %v2425, %v2426
    %v2428 = vrot.slane %v2427, 2
    %v2429 = vadd.f32 %v2427, %v2428
    %v2430 = vrot.slane %v2429, 1
    %v2431 = vadd.f32 %v2429, %v2430
    %v2432 = vadd.f32 %v1948, %v1950
    %v2433 = vadd.f32 %v2432, %v1952
    %v2434 = vadd.f32 %v2433, %v1954
    %v2435 = vrot.slane %v2434, 4
    %v2436 = vadd.f32 %v2434, %v2435
    %v2437 = vrot.slane %v2436, 2
    %v2438 = vadd.f32 %v2436, %v2437
    %v2439 = vrot.slane %v2438, 1
    %v2440 = vadd.f32 %v2438, %v2439
    %v2441 = vadd.f32 %v1949, %v1951
    %v2442 = vadd.f32 %v2441, %v1953
    %v2443 = vadd.f32 %v2442, %v1955
    %v2444 = vrot.slane %v2443, 4
    %v2445 = vadd.f32 %v2443, %v2444
    %v2446 = vrot.slane %v2445, 2
    %v2447 = vadd.f32 %v2445, %v2446
    %v2448 = vrot.slane %v2447, 1
    %v2449 = vadd.f32 %v2447, %v2448
    %v2450 = vadd.f32 %v1956, %v1958
    %v2451 = vadd.f32 %v2450, %v1960
    %v2452 = vadd.f32 %v2451, %v1962
    %v2453 = vrot.slane %v2452, 4
    %v2454 = vadd.f32 %v2452, %v2453
    %v2455 = vrot.slane %v2454, 2
    %v2456 = vadd.f32 %v2454, %v2455
    %v2457 = vrot.slane %v2456, 1
    %v2458 = vadd.f32 %v2456, %v2457
    %v2459 = vadd.f32 %v1957, %v1959
    %v2460 = vadd.f32 %v2459, %v1961
    %v2461 = vadd.f32 %v2460, %v1963
    %v2462 = vrot.slane %v2461, 4
    %v2463 = vadd.f32 %v2461, %v2462
    %v2464 = vrot.slane %v2463, 2
    %v2465 = vadd.f32 %v2463, %v2464
    %v2466 = vrot.slane %v2465, 1
    %v2467 = vadd.f32 %v2465, %v2466
    %v2468 = vadd.f32 %v1964, %v1966
    %v2469 = vadd.f32 %v2468, %v1968
    %v2470 = vadd.f32 %v2469, %v1970
    %v2471 = vrot.slane %v2470, 4
    %v2472 = vadd.f32 %v2470, %v2471
    %v2473 = vrot.slane %v2472, 2
    %v2474 = vadd.f32 %v2472, %v2473
    %v2475 = vrot.slane %v2474, 1
    %v2476 = vadd.f32 %v2474, %v2475
    %v2477 = vadd.f32 %v1965, %v1967
    %v2478 = vadd.f32 %v2477, %v1969
    %v2479 = vadd.f32 %v2478, %v1971
    %v2480 = vrot.slane %v2479, 4
    %v2481 = vadd.f32 %v2479, %v2480
    %v2482 = vrot.slane %v2481, 2
    %v2483 = vadd.f32 %v2481, %v2482
    %v2484 = vrot.slane %v2483, 1
    %v2485 = vadd.f32 %v2483, %v2484
    %v2486 = vadd.f32 %v1972, %v1974
    %v2487 = vadd.f32 %v2486, %v1976
    %v2488 = vadd.f32 %v2487, %v1978
    %v2489 = vrot.slane %v2488, 4
    %v2490 = vadd.f32 %v2488, %v2489
    %v2491 = vrot.slane %v2490, 2
    %v2492 = vadd.f32 %v2490, %v2491
    %v2493 = vrot.slane %v2492, 1
    %v2494 = vadd.f32 %v2492, %v2493
    %v2495 = vadd.f32 %v1973, %v1975
    %v2496 = vadd.f32 %v2495, %v1977
    %v2497 = vadd.f32 %v2496, %v1979
    %v2498 = vrot.slane %v2497, 4
    %v2499 = vadd.f32 %v2497, %v2498
    %v2500 = vrot.slane %v2499, 2
    %v2501 = vadd.f32 %v2499, %v2500
    %v2502 = vrot.slane %v2501, 1
    %v2503 = vadd.f32 %v2501, %v2502
    %v2504 = vadd.f32 %v1980, %v1982
    %v2505 = vadd.f32 %v2504, %v1984
    %v2506 = vadd.f32 %v2505, %v1986
    %v2507 = vrot.slane %v2506, 4
    %v2508 = vadd.f32 %v2506, %v2507
    %v2509 = vrot.slane %v2508, 2
    %v2510 = vadd.f32 %v2508, %v2509
    %v2511 = vrot.slane %v2510, 1
    %v2512 = vadd.f32 %v2510, %v2511
    %v2513 = vadd.f32 %v1981, %v1983
    %v2514 = vadd.f32 %v2513, %v1985
    %v2515 = vadd.f32 %v2514, %v1987
    %v2516 = vrot.slane %v2515, 4
    %v2517 = vadd.f32 %v2515, %v2516
    %v2518 = vrot.slane %v2517, 2
    %v2519 = vadd.f32 %v2517, %v2518
    %v2520 = vrot.slane %v2519, 1
    %v2521 = vadd.f32 %v2519, %v2520
    %v2522 = vadd.f32 %v1988, %v1990
    %v2523 = vadd.f32 %v2522, %v1992
    %v2524 = vadd.f32 %v2523, %v1994
    %v2525 = vrot.slane %v2524, 4
    %v2526 = vadd.f32 %v2524, %v2525
    %v2527 = vrot.slane %v2526, 2
    %v2528 = vadd.f32 %v2526, %v2527
    %v2529 = vrot.slane %v2528, 1
    %v2530 = vadd.f32 %v2528, %v2529
    %v2531 = vadd.f32 %v1989, %v1991
    %v2532 = vadd.f32 %v2531, %v1993
    %v2533 = vadd.f32 %v2532, %v1995
    %v2534 = vrot.slane %v2533, 4
    %v2535 = vadd.f32 %v2533, %v2534
    %v2536 = vrot.slane %v2535, 2
    %v2537 = vadd.f32 %v2535, %v2536
    %v2538 = vrot.slane %v2537, 1
    %v2539 = vadd.f32 %v2537, %v2538
    %v2540 = vadd.f32 %v1996, %v1998
    %v2541 = vadd.f32 %v2540, %v2000
    %v2542 = vadd.f32 %v2541, %v2002
    %v2543 = vrot.slane %v2542, 4
    %v2544 = vadd.f32 %v2542, %v2543
    %v2545 = vrot.slane %v2544, 2
    %v2546 = vadd.f32 %v2544, %v2545
    %v2547 = vrot.slane %v2546, 1
    %v2548 = vadd.f32 %v2546, %v2547
    %v2549 = vadd.f32 %v1997, %v1999
    %v2550 = vadd.f32 %v2549, %v2001
    %v2551 = vadd.f32 %v2550, %v2003
    %v2552 = vrot.slane %v2551, 4
    %v2553 = vadd.f32 %v2551, %v2552
    %v2554 = vrot.slane %v2553, 2
    %v2555 = vadd.f32 %v2553, %v2554
    %v2556 = vrot.slane %v2555, 1
    %v2557 = vadd.f32 %v2555, %v2556
    %v2558 = vadd.f32 %v2004, %v2006
    %v2559 = vadd.f32 %v2558, %v2008
    %v2560 = vadd.f32 %v2559, %v2010
    %v2561 = vrot.slane %v2560, 4
    %v2562 = vadd.f32 %v2560, %v2561
    %v2563 = vrot.slane %v2562, 2
    %v2564 = vadd.f32 %v2562, %v2563
    %v2565 = vrot.slane %v2564, 1
    %v2566 = vadd.f32 %v2564, %v2565
    %v2567 = vadd.f32 %v2005, %v2007
    %v2568 = vadd.f32 %v2567, %v2009
    %v2569 = vadd.f32 %v2568, %v2011
    %v2570 = vrot.slane %v2569, 4
    %v2571 = vadd.f32 %v2569, %v2570
    %v2572 = vrot.slane %v2571, 2
    %v2573 = vadd.f32 %v2571, %v2572
    %v2574 = vrot.slane %v2573, 1
    %v2575 = vadd.f32 %v2573, %v2574
    %v2576 = vadd.f32 %v2012, %v2014
    %v2577 = vadd.f32 %v2576, %v2016
    %v2578 = vadd.f32 %v2577, %v2018
    %v2579 = vrot.slane %v2578, 4
    %v2580 = vadd.f32 %v2578, %v2579
    %v2581 = vrot.slane %v2580, 2
    %v2582 = vadd.f32 %v2580, %v2581
    %v2583 = vrot.slane %v2582, 1
    %v2584 = vadd.f32 %v2582, %v2583
    %v2585 = vadd.f32 %v2013, %v2015
    %v2586 = vadd.f32 %v2585, %v2017
    %v2587 = vadd.f32 %v2586, %v2019
    %v2588 = vrot.slane %v2587, 4
    %v2589 = vadd.f32 %v2587, %v2588
    %v2590 = vrot.slane %v2589, 2
    %v2591 = vadd.f32 %v2589, %v2590
    %v2592 = vrot.slane %v2591, 1
    %v2593 = vadd.f32 %v2591, %v2592
    %v2594 = vadd.f32 %v2020, %v2022
    %v2595 = vadd.f32 %v2594, %v2024
    %v2596 = vadd.f32 %v2595, %v2026
    %v2597 = vrot.slane %v2596, 4
    %v2598 = vadd.f32 %v2596, %v2597
    %v2599 = vrot.slane %v2598, 2
    %v2600 = vadd.f32 %v2598, %v2599
    %v2601 = vrot.slane %v2600, 1
    %v2602 = vadd.f32 %v2600, %v2601
    %v2603 = vadd.f32 %v2021, %v2023
    %v2604 = vadd.f32 %v2603, %v2025
    %v2605 = vadd.f32 %v2604, %v2027
    %v2606 = vrot.slane %v2605, 4
    %v2607 = vadd.f32 %v2605, %v2606
    %v2608 = vrot.slane %v2607, 2
    %v2609 = vadd.f32 %v2607, %v2608
    %v2610 = vrot.slane %v2609, 1
    %v2611 = vadd.f32 %v2609, %v2610
    %v2612 = vadd.f32 %v2028, %v2030
    %v2613 = vadd.f32 %v2612, %v2032
    %v2614 = vadd.f32 %v2613, %v2034
    %v2615 = vrot.slane %v2614, 4
    %v2616 = vadd.f32 %v2614, %v2615
    %v2617 = vrot.slane %v2616, 2
    %v2618 = vadd.f32 %v2616, %v2617
    %v2619 = vrot.slane %v2618, 1
    %v2620 = vadd.f32 %v2618, %v2619
    %v2621 = vadd.f32 %v2029, %v2031
    %v2622 = vadd.f32 %v2621, %v2033
    %v2623 = vadd.f32 %v2622, %v2035
    %v2624 = vrot.slane %v2623, 4
    %v2625 = vadd.f32 %v2623, %v2624
    %v2626 = vrot.slane %v2625, 2
    %v2627 = vadd.f32 %v2625, %v2626
    %v2628 = vrot.slane %v2627, 1
    %v2629 = vadd.f32 %v2627, %v2628
    %v2630 = vadd.f32 %v2036, %v2038
    %v2631 = vadd.f32 %v2630, %v2040
    %v2632 = vadd.f32 %v2631, %v2042
    %v2633 = vrot.slane %v2632, 4
    %v2634 = vadd.f32 %v2632, %v2633
    %v2635 = vrot.slane %v2634, 2
    %v2636 = vadd.f32 %v2634, %v2635
    %v2637 = vrot.slane %v2636, 1
    %v2638 = vadd.f32 %v2636, %v2637
    %v2639 = vadd.f32 %v2037, %v2039
    %v2640 = vadd.f32 %v2639, %v2041
    %v2641 = vadd.f32 %v2640, %v2043
    %v2642 = vrot.slane %v2641, 4
    %v2643 = vadd.f32 %v2641, %v2642
    %v2644 = vrot.slane %v2643, 2
    %v2645 = vadd.f32 %v2643, %v2644
    %v2646 = vrot.slane %v2645, 1
    %v2647 = vadd.f32 %v2645, %v2646
    %v2648 = vadd.f32 %v2044, %v2046
    %v2649 = vadd.f32 %v2648, %v2048
    %v2650 = vadd.f32 %v2649, %v2050
    %v2651 = vrot.slane %v2650, 4
    %v2652 = vadd.f32 %v2650, %v2651
    %v2653 = vrot.slane %v2652, 2
    %v2654 = vadd.f32 %v2652, %v2653
    %v2655 = vrot.slane %v2654, 1
    %v2656 = vadd.f32 %v2654, %v2655
    %v2657 = vadd.f32 %v2045, %v2047
    %v2658 = vadd.f32 %v2657, %v2049
    %v2659 = vadd.f32 %v2658, %v2051
    %v2660 = vrot.slane %v2659, 4
    %v2661 = vadd.f32 %v2659, %v2660
    %v2662 = vrot.slane %v2661, 2
    %v2663 = vadd.f32 %v2661, %v2662
    %v2664 = vrot.slane %v2663, 1
    %v2665 = vadd.f32 %v2663, %v2664
    %v2666 = vadd.f32 %v2052, %v2054
    %v2667 = vadd.f32 %v2666, %v2056
    %v2668 = vadd.f32 %v2667, %v2058
    %v2669 = vrot.slane %v2668, 4
    %v2670 = vadd.f32 %v2668, %v2669
    %v2671 = vrot.slane %v2670, 2
    %v2672 = vadd.f32 %v2670, %v2671
    %v2673 = vrot.slane %v2672, 1
    %v2674 = vadd.f32 %v2672, %v2673
    %v2675 = vadd.f32 %v2053, %v2055
    %v2676 = vadd.f32 %v2675, %v2057
    %v2677 = vadd.f32 %v2676, %v2059
    %v2678 = vrot.slane %v2677, 4
    %v2679 = vadd.f32 %v2677, %v2678
    %v2680 = vrot.slane %v2679, 2
    %v2681 = vadd.f32 %v2679, %v2680
    %v2682 = vrot.slane %v2681, 1
    %v2683 = vadd.f32 %v2681, %v2682
    %v2684 = vadd.f32 %v2060, %v2062
    %v2685 = vadd.f32 %v2684, %v2064
    %v2686 = vadd.f32 %v2685, %v2066
    %v2687 = vrot.slane %v2686, 4
    %v2688 = vadd.f32 %v2686, %v2687
    %v2689 = vrot.slane %v2688, 2
    %v2690 = vadd.f32 %v2688, %v2689
    %v2691 = vrot.slane %v2690, 1
    %v2692 = vadd.f32 %v2690, %v2691
    %v2693 = vadd.f32 %v2061, %v2063
    %v2694 = vadd.f32 %v2693, %v2065
    %v2695 = vadd.f32 %v2694, %v2067
    %v2696 = vrot.slane %v2695, 4
    %v2697 = vadd.f32 %v2695, %v2696
    %v2698 = vrot.slane %v2697, 2
    %v2699 = vadd.f32 %v2697, %v2698
    %v2700 = vrot.slane %v2699, 1
    %v2701 = vadd.f32 %v2699, %v2700
    %v2702 = vadd.f32 %v2068, %v2070
    %v2703 = vadd.f32 %v2702, %v2072
    %v2704 = vadd.f32 %v2703, %v2074
    %v2705 = vrot.slane %v2704, 4
    %v2706 = vadd.f32 %v2704, %v2705
    %v2707 = vrot.slane %v2706, 2
    %v2708 = vadd.f32 %v2706, %v2707
    %v2709 = vrot.slane %v2708, 1
    %v2710 = vadd.f32 %v2708, %v2709
    %v2711 = vadd.f32 %v2069, %v2071
    %v2712 = vadd.f32 %v2711, %v2073
    %v2713 = vadd.f32 %v2712, %v2075
    %v2714 = vrot.slane %v2713, 4
    %v2715 = vadd.f32 %v2713, %v2714
    %v2716 = vrot.slane %v2715, 2
    %v2717 = vadd.f32 %v2715, %v2716
    %v2718 = vrot.slane %v2717, 1
    %v2719 = vadd.f32 %v2717, %v2718
    %v2720 = vadd.f32 %v2076, %v2078
    %v2721 = vadd.f32 %v2720, %v2080
    %v2722 = vadd.f32 %v2721, %v2082
    %v2723 = vrot.slane %v2722, 4
    %v2724 = vadd.f32 %v2722, %v2723
    %v2725 = vrot.slane %v2724, 2
    %v2726 = vadd.f32 %v2724, %v2725
    %v2727 = vrot.slane %v2726, 1
    %v2728 = vadd.f32 %v2726, %v2727
    %v2729 = vadd.f32 %v2077, %v2079
    %v2730 = vadd.f32 %v2729, %v2081
    %v2731 = vadd.f32 %v2730, %v2083
    %v2732 = vrot.slane %v2731, 4
    %v2733 = vadd.f32 %v2731, %v2732
    %v2734 = vrot.slane %v2733, 2
    %v2735 = vadd.f32 %v2733, %v2734
    %v2736 = vrot.slane %v2735, 1
    %v2737 = vadd.f32 %v2735, %v2736
    %v2738 = vadd.f32 %v2084, %v2086
    %v2739 = vadd.f32 %v2738, %v2088
    %v2740 = vadd.f32 %v2739, %v2090
    %v2741 = vrot.slane %v2740, 4
    %v2742 = vadd.f32 %v2740, %v2741
    %v2743 = vrot.slane %v2742, 2
    %v2744 = vadd.f32 %v2742, %v2743
    %v2745 = vrot.slane %v2744, 1
    %v2746 = vadd.f32 %v2744, %v2745
    %v2747 = vadd.f32 %v2085, %v2087
    %v2748 = vadd.f32 %v2747, %v2089
    %v2749 = vadd.f32 %v2748, %v2091
    %v2750 = vrot.slane %v2749, 4
    %v2751 = vadd.f32 %v2749, %v2750
    %v2752 = vrot.slane %v2751, 2
    %v2753 = vadd.f32 %v2751, %v2752
    %v2754 = vrot.slane %v2753, 1
    %v2755 = vadd.f32 %v2753, %v2754
    %v2756 = vadd.f32 %v2092, %v2094
    %v2757 = vadd.f32 %v2756, %v2096
    %v2758 = vadd.f32 %v2757, %v2098
    %v2759 = vrot.slane %v2758, 4
    %v2760 = vadd.f32 %v2758, %v2759
    %v2761 = vrot.slane %v2760, 2
    %v2762 = vadd.f32 %v2760, %v2761
    %v2763 = vrot.slane %v2762, 1
    %v2764 = vadd.f32 %v2762, %v2763
    %v2765 = vadd.f32 %v2093, %v2095
    %v2766 = vadd.f32 %v2765, %v2097
    %v2767 = vadd.f32 %v2766, %v2099
    %v2768 = vrot.slane %v2767, 4
    %v2769 = vadd.f32 %v2767, %v2768
    %v2770 = vrot.slane %v2769, 2
    %v2771 = vadd.f32 %v2769, %v2770
    %v2772 = vrot.slane %v2771, 1
    %v2773 = vadd.f32 %v2771, %v2772
    %v2774 = vadd.f32 %v2100, %v2102
    %v2775 = vadd.f32 %v2774, %v2104
    %v2776 = vadd.f32 %v2775, %v2106
    %v2777 = vrot.slane %v2776, 4
    %v2778 = vadd.f32 %v2776, %v2777
    %v2779 = vrot.slane %v2778, 2
    %v2780 = vadd.f32 %v2778, %v2779
    %v2781 = vrot.slane %v2780, 1
    %v2782 = vadd.f32 %v2780, %v2781
    %v2783 = vadd.f32 %v2101, %v2103
    %v2784 = vadd.f32 %v2783, %v2105
    %v2785 = vadd.f32 %v2784, %v2107
    %v2786 = vrot.slane %v2785, 4
    %v2787 = vadd.f32 %v2785, %v2786
    %v2788 = vrot.slane %v2787, 2
    %v2789 = vadd.f32 %v2787, %v2788
    %v2790 = vrot.slane %v2789, 1
    %v2791 = vadd.f32 %v2789, %v2790
    %v2792 = vadd.f32 %v2108, %v2110
    %v2793 = vadd.f32 %v2792, %v2112
    %v2794 = vadd.f32 %v2793, %v2114
    %v2795 = vrot.slane %v2794, 4
    %v2796 = vadd.f32 %v2794, %v2795
    %v2797 = vrot.slane %v2796, 2
    %v2798 = vadd.f32 %v2796, %v2797
    %v2799 = vrot.slane %v2798, 1
    %v2800 = vadd.f32 %v2798, %v2799
    %v2801 = vadd.f32 %v2109, %v2111
    %v2802 = vadd.f32 %v2801, %v2113
    %v2803 = vadd.f32 %v2802, %v2115
    %v2804 = vrot.slane %v2803, 4
    %v2805 = vadd.f32 %v2803, %v2804
    %v2806 = vrot.slane %v2805, 2
    %v2807 = vadd.f32 %v2805, %v2806
    %v2808 = vrot.slane %v2807, 1
    %v2809 = vadd.f32 %v2807, %v2808
    %v2810 = vadd.f32 %v2116, %v2118
    %v2811 = vadd.f32 %v2810, %v2120
    %v2812 = vadd.f32 %v2811, %v2122
    %v2813 = vrot.slane %v2812, 4
    %v2814 = vadd.f32 %v2812, %v2813
    %v2815 = vrot.slane %v2814, 2
    %v2816 = vadd.f32 %v2814, %v2815
    %v2817 = vrot.slane %v2816, 1
    %v2818 = vadd.f32 %v2816, %v2817
    %v2819 = vadd.f32 %v2117, %v2119
    %v2820 = vadd.f32 %v2819, %v2121
    %v2821 = vadd.f32 %v2820, %v2123
    %v2822 = vrot.slane %v2821, 4
    %v2823 = vadd.f32 %v2821, %v2822
    %v2824 = vrot.slane %v2823, 2
    %v2825 = vadd.f32 %v2823, %v2824
    %v2826 = vrot.slane %v2825, 1
    %v2827 = vadd.f32 %v2825, %v2826
    %v2828 = vadd.f32 %v2124, %v2126
    %v2829 = vadd.f32 %v2828, %v2128
    %v2830 = vadd.f32 %v2829, %v2130
    %v2831 = vrot.slane %v2830, 4
    %v2832 = vadd.f32 %v2830, %v2831
    %v2833 = vrot.slane %v2832, 2
    %v2834 = vadd.f32 %v2832, %v2833
    %v2835 = vrot.slane %v2834, 1
    %v2836 = vadd.f32 %v2834, %v2835
    %v2837 = vadd.f32 %v2125, %v2127
    %v2838 = vadd.f32 %v2837, %v2129
    %v2839 = vadd.f32 %v2838, %v2131
    %v2840 = vrot.slane %v2839, 4
    %v2841 = vadd.f32 %v2839, %v2840
    %v2842 = vrot.slane %v2841, 2
    %v2843 = vadd.f32 %v2841, %v2842
    %v2844 = vrot.slane %v2843, 1
    %v2845 = vadd.f32 %v2843, %v2844
    %v2846 = vadd.f32 %v2132, %v2134
    %v2847 = vadd.f32 %v2846, %v2136
    %v2848 = vadd.f32 %v2847, %v2138
    %v2849 = vrot.slane %v2848, 4
    %v2850 = vadd.f32 %v2848, %v2849
    %v2851 = vrot.slane %v2850, 2
    %v2852 = vadd.f32 %v2850, %v2851
    %v2853 = vrot.slane %v2852, 1
    %v2854 = vadd.f32 %v2852, %v2853
    %v2855 = vadd.f32 %v2133, %v2135
    %v2856 = vadd.f32 %v2855, %v2137
    %v2857 = vadd.f32 %v2856, %v2139
    %v2858 = vrot.slane %v2857, 4
    %v2859 = vadd.f32 %v2857, %v2858
    %v2860 = vrot.slane %v2859, 2
    %v2861 = vadd.f32 %v2859, %v2860
    %v2862 = vrot.slane %v2861, 1
    %v2863 = vadd.f32 %v2861, %v2862
    %v2864 = vadd.f32 %v2140, %v2142
    %v2865 = vadd.f32 %v2864, %v2144
    %v2866 = vadd.f32 %v2865, %v2146
    %v2867 = vrot.slane %v2866, 4
    %v2868 = vadd.f32 %v2866, %v2867
    %v2869 = vrot.slane %v2868, 2
    %v2870 = vadd.f32 %v2868, %v2869
    %v2871 = vrot.slane %v2870, 1
    %v2872 = vadd.f32 %v2870, %v2871
    %v2873 = vadd.f32 %v2141, %v2143
    %v2874 = vadd.f32 %v2873, %v2145
    %v2875 = vadd.f32 %v2874, %v2147
    %v2876 = vrot.slane %v2875, 4
    %v2877 = vadd.f32 %v2875, %v2876
    %v2878 = vrot.slane %v2877, 2
    %v2879 = vadd.f32 %v2877, %v2878
    %v2880 = vrot.slane %v2879, 1
    %v2881 = vadd.f32 %v2879, %v2880
    %v2882 = vadd.f32 %v2148, %v2150
    %v2883 = vadd.f32 %v2882, %v2152
    %v2884 = vadd.f32 %v2883, %v2154
    %v2885 = vrot.slane %v2884, 4
    %v2886 = vadd.f32 %v2884, %v2885
    %v2887 = vrot.slane %v2886, 2
    %v2888 = vadd.f32 %v2886, %v2887
    %v2889 = vrot.slane %v2888, 1
    %v2890 = vadd.f32 %v2888, %v2889
    %v2891 = vadd.f32 %v2149, %v2151
    %v2892 = vadd.f32 %v2891, %v2153
    %v2893 = vadd.f32 %v2892, %v2155
    %v2894 = vrot.slane %v2893, 4
    %v2895 = vadd.f32 %v2893, %v2894
    %v2896 = vrot.slane %v2895, 2
    %v2897 = vadd.f32 %v2895, %v2896
    %v2898 = vrot.slane %v2897, 1
    %v2899 = vadd.f32 %v2897, %v2898
    %v2900 = vadd.f32 %v2156, %v2158
    %v2901 = vadd.f32 %v2900, %v2160
    %v2902 = vadd.f32 %v2901, %v2162
    %v2903 = vrot.slane %v2902, 4
    %v2904 = vadd.f32 %v2902, %v2903
    %v2905 = vrot.slane %v2904, 2
    %v2906 = vadd.f32 %v2904, %v2905
    %v2907 = vrot.slane %v2906, 1
    %v2908 = vadd.f32 %v2906, %v2907
    %v2909 = vadd.f32 %v2157, %v2159
    %v2910 = vadd.f32 %v2909, %v2161
    %v2911 = vadd.f32 %v2910, %v2163
    %v2912 = vrot.slane %v2911, 4
    %v2913 = vadd.f32 %v2911, %v2912
    %v2914 = vrot.slane %v2913, 2
    %v2915 = vadd.f32 %v2913, %v2914
    %v2916 = vrot.slane %v2915, 1
    %v2917 = vadd.f32 %v2915, %v2916
    %v2918 = vadd.f32 %v2164, %v2166
    %v2919 = vadd.f32 %v2918, %v2168
    %v2920 = vadd.f32 %v2919, %v2170
    %v2921 = vrot.slane %v2920, 4
    %v2922 = vadd.f32 %v2920, %v2921
    %v2923 = vrot.slane %v2922, 2
    %v2924 = vadd.f32 %v2922, %v2923
    %v2925 = vrot.slane %v2924, 1
    %v2926 = vadd.f32 %v2924, %v2925
    %v2927 = vadd.f32 %v2165, %v2167
    %v2928 = vadd.f32 %v2927, %v2169
    %v2929 = vadd.f32 %v2928, %v2171
    %v2930 = vrot.slane %v2929, 4
    %v2931 = vadd.f32 %v2929, %v2930
    %v2932 = vrot.slane %v2931, 2
    %v2933 = vadd.f32 %v2931, %v2932
    %v2934 = vrot.slane %v2933, 1
    %v2935 = vadd.f32 %v2933, %v2934
    %v2936 = vadd.f32 %v2172, %v2174
    %v2937 = vadd.f32 %v2936, %v2176
    %v2938 = vadd.f32 %v2937, %v2178
    %v2939 = vrot.slane %v2938, 4
    %v2940 = vadd.f32 %v2938, %v2939
    %v2941 = vrot.slane %v2940, 2
    %v2942 = vadd.f32 %v2940, %v2941
    %v2943 = vrot.slane %v2942, 1
    %v2944 = vadd.f32 %v2942, %v2943
    %v2945 = vadd.f32 %v2173, %v2175
    %v2946 = vadd.f32 %v2945, %v2177
    %v2947 = vadd.f32 %v2946, %v2179
    %v2948 = vrot.slane %v2947, 4
    %v2949 = vadd.f32 %v2947, %v2948
    %v2950 = vrot.slane %v2949, 2
    %v2951 = vadd.f32 %v2949, %v2950
    %v2952 = vrot.slane %v2951, 1
    %v2953 = vadd.f32 %v2951, %v2952
    %v2954 = vadd.f32 %v2180, %v2182
    %v2955 = vadd.f32 %v2954, %v2184
    %v2956 = vadd.f32 %v2955, %v2186
    %v2957 = vrot.slane %v2956, 4
    %v2958 = vadd.f32 %v2956, %v2957
    %v2959 = vrot.slane %v2958, 2
    %v2960 = vadd.f32 %v2958, %v2959
    %v2961 = vrot.slane %v2960, 1
    %v2962 = vadd.f32 %v2960, %v2961
    %v2963 = vadd.f32 %v2181, %v2183
    %v2964 = vadd.f32 %v2963, %v2185
    %v2965 = vadd.f32 %v2964, %v2187
    %v2966 = vrot.slane %v2965, 4
    %v2967 = vadd.f32 %v2965, %v2966
    %v2968 = vrot.slane %v2967, 2
    %v2969 = vadd.f32 %v2967, %v2968
    %v2970 = vrot.slane %v2969, 1
    %v2971 = vadd.f32 %v2969, %v2970
    %v2972 = vadd.f32 %v2188, %v2190
    %v2973 = vadd.f32 %v2972, %v2192
    %v2974 = vadd.f32 %v2973, %v2194
    %v2975 = vrot.slane %v2974, 4
    %v2976 = vadd.f32 %v2974, %v2975
    %v2977 = vrot.slane %v2976, 2
    %v2978 = vadd.f32 %v2976, %v2977
    %v2979 = vrot.slane %v2978, 1
    %v2980 = vadd.f32 %v2978, %v2979
    %v2981 = vadd.f32 %v2189, %v2191
    %v2982 = vadd.f32 %v2981, %v2193
    %v2983 = vadd.f32 %v2982, %v2195
    %v2984 = vrot.slane %v2983, 4
    %v2985 = vadd.f32 %v2983, %v2984
    %v2986 = vrot.slane %v2985, 2
    %v2987 = vadd.f32 %v2985, %v2986
    %v2988 = vrot.slane %v2987, 1
    %v2989 = vadd.f32 %v2987, %v2988
    %v2990 = vadd.f32 %v2196, %v2198
    %v2991 = vadd.f32 %v2990, %v2200
    %v2992 = vadd.f32 %v2991, %v2202
    %v2993 = vrot.slane %v2992, 4
    %v2994 = vadd.f32 %v2992, %v2993
    %v2995 = vrot.slane %v2994, 2
    %v2996 = vadd.f32 %v2994, %v2995
    %v2997 = vrot.slane %v2996, 1
    %v2998 = vadd.f32 %v2996, %v2997
    %v2999 = vadd.f32 %v2197, %v2199
    %v3000 = vadd.f32 %v2999, %v2201
    %v3001 = vadd.f32 %v3000, %v2203
    %v3002 = vrot.slane %v3001, 4
    %v3003 = vadd.f32 %v3001, %v3002
    %v3004 = vrot.slane %v3003, 2
    %v3005 = vadd.f32 %v3003, %v3004
    %v3006 = vrot.slane %v3005, 1
    %v3007 = vadd.f32 %v3005, %v3006
    %v3008 = vadd.f32 %v2204, %v2206
    %v3009 = vadd.f32 %v3008, %v2208
    %v3010 = vadd.f32 %v3009, %v2210
    %v3011 = vrot.slane %v3010, 4
    %v3012 = vadd.f32 %v3010, %v3011
    %v3013 = vrot.slane %v3012, 2
    %v3014 = vadd.f32 %v3012, %v3013
    %v3015 = vrot.slane %v3014, 1
    %v3016 = vadd.f32 %v3014, %v3015
    %v3017 = vadd.f32 %v2205, %v2207
    %v3018 = vadd.f32 %v3017, %v2209
    %v3019 = vadd.f32 %v3018, %v2211
    %v3020 = vrot.slane %v3019, 4
    %v3021 = vadd.f32 %v3019, %v3020
    %v3022 = vrot.slane %v3021, 2
    %v3023 = vadd.f32 %v3021, %v3022
    %v3024 = vrot.slane %v3023, 1
    %v3025 = vadd.f32 %v3023, %v3024
    %v3026 = vadd.f32 %v2212, %v2214
    %v3027 = vadd.f32 %v3026, %v2216
    %v3028 = vadd.f32 %v3027, %v2218
    %v3029 = vrot.slane %v3028, 4
    %v3030 = vadd.f32 %v3028, %v3029
    %v3031 = vrot.slane %v3030, 2
    %v3032 = vadd.f32 %v3030, %v3031
    %v3033 = vrot.slane %v3032, 1
    %v3034 = vadd.f32 %v3032, %v3033
    %v3035 = vadd.f32 %v2213, %v2215
    %v3036 = vadd.f32 %v3035, %v2217
    %v3037 = vadd.f32 %v3036, %v2219
    %v3038 = vrot.slane %v3037, 4
    %v3039 = vadd.f32 %v3037, %v3038
    %v3040 = vrot.slane %v3039, 2
    %v3041 = vadd.f32 %v3039, %v3040
    %v3042 = vrot.slane %v3041, 1
    %v3043 = vadd.f32 %v3041, %v3042
    %v3044 = vadd.f32 %v2220, %v2222
    %v3045 = vadd.f32 %v3044, %v2224
    %v3046 = vadd.f32 %v3045, %v2226
    %v3047 = vrot.slane %v3046, 4
    %v3048 = vadd.f32 %v3046, %v3047
    %v3049 = vrot.slane %v3048, 2
    %v3050 = vadd.f32 %v3048, %v3049
    %v3051 = vrot.slane %v3050, 1
    %v3052 = vadd.f32 %v3050, %v3051
    %v3053 = vadd.f32 %v2221, %v2223
    %v3054 = vadd.f32 %v3053, %v2225
    %v3055 = vadd.f32 %v3054, %v2227
    %v3056 = vrot.slane %v3055, 4
    %v3057 = vadd.f32 %v3055, %v3056
    %v3058 = vrot.slane %v3057, 2
    %v3059 = vadd.f32 %v3057, %v3058
    %v3060 = vrot.slane %v3059, 1
    %v3061 = vadd.f32 %v3059, %v3060
    %v3062 = vadd.f32 %v2228, %v2230
    %v3063 = vadd.f32 %v3062, %v2232
    %v3064 = vadd.f32 %v3063, %v2234
    %v3065 = vrot.slane %v3064, 4
    %v3066 = vadd.f32 %v3064, %v3065
    %v3067 = vrot.slane %v3066, 2
    %v3068 = vadd.f32 %v3066, %v3067
    %v3069 = vrot.slane %v3068, 1
    %v3070 = vadd.f32 %v3068, %v3069
    %v3071 = vadd.f32 %v2229, %v2231
    %v3072 = vadd.f32 %v3071, %v2233
    %v3073 = vadd.f32 %v3072, %v2235
    %v3074 = vrot.slane %v3073, 4
    %v3075 = vadd.f32 %v3073, %v3074
    %v3076 = vrot.slane %v3075, 2
    %v3077 = vadd.f32 %v3075, %v3076
    %v3078 = vrot.slane %v3077, 1
    %v3079 = vadd.f32 %v3077, %v3078
    %v3080 = vadd.f32 %v2236, %v2238
    %v3081 = vadd.f32 %v3080, %v2240
    %v3082 = vadd.f32 %v3081, %v2242
    %v3083 = vrot.slane %v3082, 4
    %v3084 = vadd.f32 %v3082, %v3083
    %v3085 = vrot.slane %v3084, 2
    %v3086 = vadd.f32 %v3084, %v3085
    %v3087 = vrot.slane %v3086, 1
    %v3088 = vadd.f32 %v3086, %v3087
    %v3089 = vadd.f32 %v2237, %v2239
    %v3090 = vadd.f32 %v3089, %v2241
    %v3091 = vadd.f32 %v3090, %v2243
    %v3092 = vrot.slane %v3091, 4
    %v3093 = vadd.f32 %v3091, %v3092
    %v3094 = vrot.slane %v3093, 2
    %v3095 = vadd.f32 %v3093, %v3094
    %v3096 = vrot.slane %v3095, 1
    %v3097 = vadd.f32 %v3095, %v3096
    %v3098 = vadd.f32 %v2244, %v2246
    %v3099 = vadd.f32 %v3098, %v2248
    %v3100 = vadd.f32 %v3099, %v2250
    %v3101 = vrot.slane %v3100, 4
    %v3102 = vadd.f32 %v3100, %v3101
    %v3103 = vrot.slane %v3102, 2
    %v3104 = vadd.f32 %v3102, %v3103
    %v3105 = vrot.slane %v3104, 1
    %v3106 = vadd.f32 %v3104, %v3105
    %v3107 = vadd.f32 %v2245, %v2247
    %v3108 = vadd.f32 %v3107, %v2249
    %v3109 = vadd.f32 %v3108, %v2251
    %v3110 = vrot.slane %v3109, 4
    %v3111 = vadd.f32 %v3109, %v3110
    %v3112 = vrot.slane %v3111, 2
    %v3113 = vadd.f32 %v3111, %v3112
    %v3114 = vrot.slane %v3113, 1
    %v3115 = vadd.f32 %v3113, %v3114
    %vm3212 = vcmask 1041409
    %v3213 = vsel %vm3212, %v2278, %v2260
    %vm3214 = vcmask 1042434
    %v3215 = vsel %vm3214, %v2296, %v3213
    %vm3216 = vcmask 1043459
    %v3217 = vsel %vm3216, %v2314, %v3215
    %vm3218 = vcmask 1044484
    %v3219 = vsel %vm3218, %v2332, %v3217
    %vm3220 = vcmask 1045509
    %v3221 = vsel %vm3220, %v2350, %v3219
    %vm3222 = vcmask 1046534
    %v3223 = vsel %vm3222, %v2368, %v3221
    %vm3224 = vcmask 1047559
    %v3225 = vsel %vm3224, %v2386, %v3223
    %v3226 = vsel %vm3212, %v2287, %v2269
    %v3227 = vsel %vm3214, %v2305, %v3226
    %v3228 = vsel %vm3216, %v2323, %v3227
    %v3229 = vsel %vm3218, %v2341, %v3228
    %v3230 = vsel %vm3220, %v2359, %v3229
    %v3231 = vsel %vm3222, %v2377, %v3230
    %v3232 = vsel %vm3224, %v2395, %v3231
    %v3233 = vsel %vm3212, %v2422, %v2404
    %v3234 = vsel %vm3214, %v2440, %v3233
    %v3235 = vsel %vm3216, %v2458, %v3234
    %v3236 = vsel %vm3218, %v2476, %v3235
    %v3237 = vsel %vm3220, %v2494, %v3236
    %v3238 = vsel %vm3222, %v2512, %v3237
    %v3239 = vsel %vm3224, %v2530, %v3238
    %v3240 = vsel %vm3212, %v2431, %v2413
    %v3241 = vsel %vm3214, %v2449, %v3240
    %v3242 = vsel %vm3216, %v2467, %v3241
    %v3243 = vsel %vm3218, %v2485, %v3242
    %v3244 = vsel %vm3220, %v2503, %v3243
    %v3245 = vsel %vm3222, %v2521, %v3244
    %v3246 = vsel %vm3224, %v2539, %v3245
    %v3247 = vsel %vm3212, %v2566, %v2548
    %v3248 = vsel %vm3214, %v2584, %v3247
    %v3249 = vsel %vm3216, %v2602, %v3248
    %v3250 = vsel %vm3218, %v2620, %v3249
    %v3251 = vsel %vm3220, %v2638, %v3250
    %v3252 = vsel %vm3222, %v2656, %v3251
    %v3253 = vsel %vm3224, %v2674, %v3252
    %v3254 = vsel %vm3212, %v2575, %v2557
    %v3255 = vsel %vm3214, %v2593, %v3254
    %v3256 = vsel %vm3216, %v2611, %v3255
    %v3257 = vsel %vm3218, %v2629, %v3256
    %v3258 = vsel %vm3220, %v2647, %v3257
    %v3259 = vsel %vm3222, %v2665, %v3258
    %v3260 = vsel %vm3224, %v2683, %v3259
    %v3261 = vsel %vm3212, %v2710, %v2692
    %v3262 = vsel %vm3214, %v2728, %v3261
    %v3263 = vsel %vm3216, %v2746, %v3262
    %v3264 = vsel %vm3218, %v2764, %v3263
    %v3265 = vsel %vm3220, %v2782, %v3264
    %v3266 = vsel %vm3222, %v2800, %v3265
    %v3267 = vsel %vm3224, %v2818, %v3266
    %v3268 = vsel %vm3212, %v2719, %v2701
    %v3269 = vsel %vm3214, %v2737, %v3268
    %v3270 = vsel %vm3216, %v2755, %v3269
    %v3271 = vsel %vm3218, %v2773, %v3270
    %v3272 = vsel %vm3220, %v2791, %v3271
    %v3273 = vsel %vm3222, %v2809, %v3272
    %v3274 = vsel %vm3224, %v2827, %v3273
    %v3275 = vsel %vm3212, %v2854, %v2836
    %v3276 = vsel %vm3214, %v2872, %v3275
    %v3277 = vsel %vm3216, %v2890, %v3276
    %v3278 = vsel %vm3218, %v2908, %v3277
    %v3279 = vsel %vm3220, %v2926, %v3278
    %v3280 = vsel %vm3222, %v2944, %v3279
    %v3281 = vsel %vm3224, %v2962, %v3280
    %v3282 = vsel %vm3212, %v2863, %v2845
    %v3283 = vsel %vm3214, %v2881, %v3282
    %v3284 = vsel %vm3216, %v2899, %v3283
    %v3285 = vsel %vm3218, %v2917, %v3284
    %v3286 = vsel %vm3220, %v2935, %v3285
    %v3287 = vsel %vm3222, %v2953, %v3286
    %v3288 = vsel %vm3224, %v2971, %v3287
    %v3289 = vsel %vm3212, %v2998, %v2980
    %v3290 = vsel %vm3214, %v3016, %v3289
    %v3291 = vsel %vm3216, %v3034, %v3290
    %v3292 = vsel %vm3218, %v3052, %v3291
    %v3293 = vsel %vm3220, %v3070, %v3292
    %v3294 = vsel %vm3222, %v3088, %v3293
    %v3295 = vsel %vm3224, %v3106, %v3294
    %v3296 = vsel %vm3212, %v3007, %v2989
    %v3297 = vsel %vm3214, %v3025, %v3296
    %v3298 = vsel %vm3216, %v3043, %v3297
    %v3299 = vsel %vm3218, %v3061, %v3298
    %v3300 = vsel %vm3220, %v3079, %v3299
    %v3301 = vsel %vm3222, %v3097, %v3300
    %v3302 = vsel %vm3224, %v3115, %v3301
    %3315 = vst [vmem:[#allocation5] sm:$0xff] %v3225
    %3316 = vst [vmem:[#allocation5 + $0x8] sm:$0xff] %v3232
    %3317 = vst [vmem:[#allocation5 + $0x10] sm:$0xff] %v3239
    %3318 = vst [vmem:[#allocation5 + $0x18] sm:$0xff] %v3246
    %3319 = vst [vmem:[#allocation5 + $0x20] sm:$0xff] %v3253
    %3320 = vst [vmem:[#allocation5 + $0x28] sm:$0xff] %v3260
    %3321 = vst [vmem:[#allocation5 + $0x30] sm:$0xff] %v3267
    %3322 = vst [vmem:[#allocation5 + $0x38] sm:$0xff] %v3274
    %3323 = vst [vmem:[#allocation5 + $0x40] sm:$0xff] %v3281
    %3324 = vst [vmem:[#allocation5 + $0x48] sm:$0xff] %v3288
    %3325 = vst [vmem:[#allocation5 + $0x50] sm:$0xff] %v3295
    %3326 = vst [vmem:[#allocation5 + $0x58] sm:$0xff] %v3302
    // Predicated region
    $region18: #{tpu_custom_call.1} parent=1 // pred_check
      _
    $region19: #{tpu_custom_call.1} parent=1 // pred_check_branch
      %3328 = sbr.rel (0) target = $region21
    $region20: #{tpu_custom_call.1} parent=1 // pred_region
      %s3330 = ssub.s32 1536, 1536
      %3331 = vsyncadd [#allocation4], %s3330
      %s3332 = sshll.u32 [#allocation5], 4
      %s3333 = int_to_ptr.vmem [resolvable:$true] %s3332
      %3338 = dma.vmem_to_hbm [thread:$0]  %s3333, 1536, %s3, [#allocation4], 256, 256, 16
    $region21: #{tpu_custom_call.1} parent=1 // pred_fallthru
      _
    // Predicated region
    $region22: #{tpu_custom_call.1} parent=1 // pred_check
      _
    $region23: #{tpu_custom_call.1} parent=1 // pred_check_branch
      %3340 = sbr.rel (0) target = $region25
    $region24: #{tpu_custom_call.1} parent=1 // pred_region
      %3341 = dma.done [#allocation4], 1536
    $region25: #{tpu_custom_call.1} parent=1 // pred_fallthru
      _
    %3342 = vsyncpa [#allocation3], 1
    %3343 = vsyncpa [#allocation4], 1

</llo_original>
